<compile_context>
chip_gen: v7x
topology: tpu7x:2x2x1
jax: 0.10.0
libtpu: 0.0.40
codegen_flags: <defaults>
</compile_context>

<pallas_src>
import numpy as np
import jax
import jax.numpy as jnp
from jax import lax
from jax.experimental import pallas as pl
from jax.experimental.pallas import tpu as pltpu

NEG_SLOPE = 0.01  # matches nn.LeakyReLU(0.01) in the reference module


# ----------------------------------------------------------------------------- small selectors
def _col_selector(wp, w_out):
    """(wp, w_out) 0/1 matrix picking even columns 0, 2, ..., 2*(w_out-1).  O(W) memory."""
    s = np.zeros((wp, w_out), np.float32)
    for b in range(w_out):
        s[2 * b, b] = 1.0
    return s


# ----------------------------------------------------------------------------- fused kernel
def _make_kernel(cfgs, n_inputs, neg_slope):
    """cfgs: per-conv static config dicts (head included)."""

    def kernel(*refs):
        o_ref = refs[n_inputs]
        scratch = refs[n_inputs + 1:]

        cur_ref = refs[0]          # (1, Cin0p, L0) image block (already in VMEM via BlockSpec)
        first = True

        for cfg in cfgs:
            k, wp = cfg["k"], cfg["wp"]
            cin, cout, n_acc = cfg["cin"], cfg["cout"], cfg["n_acc"]
            col_ref = scratch[cfg["col"]]
            acc_ref = scratch[cfg["acc"]]

            # ---- im2col along sublanes: one contiguous shifted copy per tap ----
            for ky in range(k):
                for kx in range(k):
                    t = ky * k + kx
                    d = ky * wp + kx
                    if first:
                        src = cur_ref[0, :, pl.ds(d, n_acc)]
                    else:
                        src = cur_ref[:, pl.ds(d, n_acc)]
                    col_ref[pl.ds(t * cin, cin), :] = src

            # ---- whole conv as ONE matmul: (Cout, k*k*Cin) @ (k*k*Cin, n_acc) ----
            acc = jnp.dot(refs[cfg["w"]][...], col_ref[...],
                          preferred_element_type=jnp.float32)
            if cfg["b"] is not None:
                acc = acc + refs[cfg["b"]][...]           # (Cout, 1) f32, lane-broadcast
            if not cfg["head"]:
                acc = jnp.where(acc >= 0, acc, neg_slope * acc)
            acc_ref[...] = acc

            h_out, w_out = cfg["h_out"], cfg["w_out"]
            if cfg["head"]:
                # valid-position selection straight into the f32 output: contiguous copies,
                # no selection matmul, no bf16 round-trip for the final logits.
                for a in range(h_out):
                    o_ref[0, :, pl.ds(a * w_out, w_out)] = acc_ref[:, pl.ds(a * wp, w_out)]
            else:
                rows_ref = scratch[cfg["rows"]]
                nxt_ref = scratch[cfg["nxt"]]
                wp_n = cfg["wp_n"]

                # stride-2 ROW selection: contiguous slices of the conv output (even anchor rows)
                for a in range(h_out):
                    rows_ref[pl.ds(a * cout, cout), :] = (
                        acc_ref[:, pl.ds(2 * a * wp, wp)].astype(jnp.bfloat16))

                # stride-2 COLUMN selection for all rows with one tiny (wp, w_out) 0/1 matmul
                down = jnp.dot(rows_ref[...], refs[cfg["sel"]][...],
                               preferred_element_type=jnp.float32).astype(jnp.bfloat16)

                # scatter into the next layer's zero-padded, flattened input scratch
                nxt_ref[...] = jnp.zeros(nxt_ref.shape, nxt_ref.dtype)
                for a in range(h_out):
                    nxt_ref[:, pl.ds((a + 1) * wp_n + 1, w_out)] = (
                        down[a * cout:(a + 1) * cout, :])

                cur_ref = nxt_ref
                first = False

    return kernel


# ----------------------------------------------------------------------------- forward wrapper
def feature_discriminator_forward(img_nchw, params, w_top):
    """img_nchw: (B, C, H, W).  params: [(w, b_or_None), ...] torch layout (Cout, Cin, kh, kw).
    w_top: (1, C_last, 3, 3).  Returns squeeze(pred_map), same semantics as the torch module."""
    B, C, H, W = img_nchw.shape
    n_body = len(params)
    assert H % (2 ** n_body) == 0 and W % (2 ** n_body) == 0

    inputs = [None]
    in_specs = [None]

    def add_resident(a):
        idx = len(inputs)
        inputs.append(a)
        nd = a.ndim
        in_specs.append(pl.BlockSpec(a.shape, lambda b, _n=nd: (0,) * _n))
        return idx

    scratch_shapes = []

    def add_scratch(shape, dtype):
        scratch_shapes.append(pltpu.VMEM(shape, dtype))
        return len(scratch_shapes) - 1

    cin0p = -(-C // 8) * 8                      # pad image channels up to a sublane multiple
    all_convs = [(wl, bl, 2) for (wl, bl) in params] + [(w_top, None, 1)]

    cfgs = []
    h, w = H, W
    cin = cin0p
    cur_lx = (H + 2) * (W + 2) + 8              # over-allocated flattened length of current input
    for (wl, bl, stride) in all_convs:
        cout, cin_w, k, k2 = wl.shape
        assert k == k2 and cin >= cin_w
        is_head = (stride == 1)
        hp, wp = h + 2, w + 2                   # pad = 1 each side
        n_acc = (hp - k + 1) * wp               # stride-1 anchor columns computed (full rows)
        # every shifted im2col read stays inside the (zero-tail) input buffer
        assert (k - 1) * wp + (k - 1) + n_acc <= cur_lx, (k, wp, n_acc, cur_lx)

        # packed weights (Cout, k*k*Cin): tap-major, channel-minor, matching the im2col layout
        wl_p = wl
        if cin > cin_w:
            wl_p = jnp.pad(wl, ((0, 0), (0, cin - cin_w), (0, 0), (0, 0)))
        w2 = jnp.transpose(wl_p, (0, 2, 3, 1)).reshape(cout, k * k * cin).astype(jnp.bfloat16)

        cfg = dict(k=k, wp=wp, cin=cin, cout=cout, n_acc=n_acc, head=is_head,
                   w=add_resident(w2),
                   b=(add_resident(bl.reshape(cout, 1).astype(jnp.float32))
                      if bl is not None else None),
                   col=add_scratch((k * k * cin, n_acc), jnp.bfloat16),
                   acc=add_scratch((cout, n_acc), jnp.float32))

        if is_head:
            h_out, w_out = hp - k + 1, wp - k + 1
            assert (h_out - 1) * wp + w_out <= n_acc          # selected cols stay in range
            cfg.update(h_out=h_out, w_out=w_out)
        else:
            h_out, w_out = h // 2, w // 2
            hp_n, wp_n = h_out + 2, w_out + 2
            lx_n = hp_n * wp_n + 8
            # explicit invariants (reviewer request): gathers/scatters never run out of range
            assert 2 * (h_out - 1) * wp + wp <= n_acc
            assert 2 * (w_out - 1) <= wp - k
            assert h_out * wp_n + 1 + w_out <= lx_n
            cfg.update(h_out=h_out, w_out=w_out, wp_n=wp_n,
                       sel=add_resident(jnp.asarray(_col_selector(wp, w_out), jnp.bfloat16)),
                       rows=add_scratch((h_out * cout, wp), jnp.bfloat16),
                       nxt=add_scratch((cout, lx_n), jnp.bfloat16))
            cur_lx = lx_n

        cfgs.append(cfg)
        h, w = cfg["h_out"], cfg["w_out"]
        cin = cout

    # image: NCHW -> pad channels to cin0p -> zero-pad spatial -> flatten with a small zero tail
    hp0, wp0 = H + 2, W + 2
    L0 = hp0 * wp0 + 8
    x0 = jnp.pad(img_nchw, ((0, 0), (0, cin0p - C), (1, 1), (1, 1)))
    x0 = x0.reshape(B, cin0p, hp0 * wp0)
    x0 = jnp.pad(x0, ((0, 0), (0, 0), (0, L0 - hp0 * wp0))).astype(jnp.bfloat16)
    inputs[0] = x0
    in_specs[0] = pl.BlockSpec((1, cin0p, L0), lambda b: (b, 0, 0))

    n_out = h * w
    kernel = _make_kernel(tuple(cfgs), len(inputs), NEG_SLOPE)
    out = pl.pallas_call(
        kernel,
        out_shape=jax.ShapeDtypeStruct((B, 1, n_out), jnp.float32),
        grid_spec=pltpu.PrefetchScalarGridSpec(
            num_scalar_prefetch=0,
            grid=(B,),                                   # one image per grid step
            in_specs=in_specs,
            out_specs=pl.BlockSpec((1, 1, n_out), lambda b: (b, 0, 0)),
            scratch_shapes=scratch_shapes),
        compiler_params=pltpu.CompilerParams(
            dimension_semantics=("parallel",)),          # v7x: one image per TensorCore
    )(*inputs)

    pred = out.reshape(B, 1, h, w)
    return jnp.squeeze(pred)                             # same semantics as torch .squeeze()


# ----------------------------------------------------------------------------- params & reference
def init_feature_discriminator_params(key, input_nc=3, ndf=8, n_layers=3, kw=4):
    """Deterministic synthetic parameters matching the PyTorch module's shapes."""
    keys = jax.random.split(key, n_layers + 2)
    params = []
    w0 = 0.02 * jax.random.normal(keys[0], (ndf, input_nc, kw, kw), jnp.float32)
    b0 = 0.02 * jax.random.normal(keys[1], (ndf,), jnp.float32)
    params.append((w0, b0))
    cur = ndf
    for n in range(1, n_layers):
        wn = 0.02 * jax.random.normal(keys[n + 1], (2 * cur, cur, kw, kw), jnp.float32)
        params.append((wn, None))                        # bias=False
        cur = 2 * cur
    w_top = 0.02 * jax.random.normal(keys[-1], (1, cur, kw - 1, kw - 1), jnp.float32)
    return params, w_top


def _reference_forward(img, params, w_top, negative_slope=NEG_SLOPE):
    """Pure-JAX (XLA) f32 reference for correctness checking."""
    x = img
    for (wl, bl) in params:
        x = lax.conv_general_dilated(x, wl, (2, 2), ((1, 1), (1, 1)),
                                     dimension_numbers=("NCHW", "OIHW", "NCHW"))
        if bl is not None:
            x = x + bl.reshape(1, -1, 1, 1)
        x = jnp.where(x >= 0, x, negative_slope * x)
    x = lax.conv_general_dilated(x, w_top, (1, 1), ((1, 1), (1, 1)),
                                 dimension_numbers=("NCHW", "OIHW", "NCHW"))
    return jnp.squeeze(x)


if __name__ == "__main__":
    key = jax.random.PRNGKey(0)
    k_param, k_img = jax.random.split(key)

    # Small config consistent with the module: input_nc=3, ndf=8, n_layers=3, image_size=32.
    INPUT_NC, NDF, N_LAYERS, IMG = 3, 8, 3, 32
    params, w_top = init_feature_discriminator_params(
        k_param, input_nc=INPUT_NC, ndf=NDF, n_layers=N_LAYERS)

    img = jax.random.normal(k_img, (2, INPUT_NC, IMG, IMG), jnp.float32)  # NCHW, like PyTorch

    fwd = jax.jit(feature_discriminator_forward)
    pred_map = jax.block_until_ready(fwd(img, params, w_top))

    # 32 -> 16 -> 8 -> 4 spatially; head keeps 4x4; squeeze drops the channel dim -> (2, 4, 4)
    assert pred_map.shape == (2, IMG // (2 ** N_LAYERS), IMG // (2 ** N_LAYERS)), pred_map.shape
    assert bool(jnp.all(jnp.isfinite(pred_map)))

    # correctness vs the XLA f32 reference (tolerance covers the bf16 MXU path)
    ref = _reference_forward(img, params, w_top)
    err = float(jnp.max(jnp.abs(pred_map - ref)))
    scale = float(jnp.max(jnp.abs(ref))) + 1e-8
    assert err <= 0.1 * scale, (err, scale)

    print("KERNEL_OK")
</pallas_src>

<mosaic_0001>
module attributes {stable_mosaic.version = 11 : i64} {
  func.func @kernel(%arg0: i32, %arg1: memref<1x8x1164xbf16, #tpu.memory_space<vmem>>, %arg2: memref<8x128xbf16, #tpu.memory_space<vmem>>, %arg3: memref<8x1xf32, #tpu.memory_space<vmem>>, %arg4: memref<34x16xbf16, #tpu.memory_space<vmem>>, %arg5: memref<16x128xbf16, #tpu.memory_space<vmem>>, %arg6: memref<18x8xbf16, #tpu.memory_space<vmem>>, %arg7: memref<32x256xbf16, #tpu.memory_space<vmem>>, %arg8: memref<10x4xbf16, #tpu.memory_space<vmem>>, %arg9: memref<1x288xbf16, #tpu.memory_space<vmem>>, %arg10: memref<1x1x16xf32, #tpu.memory_space<vmem>>, %arg11: memref<128x1054xbf16, #tpu.memory_space<vmem>>, %arg12: memref<8x1054xf32, #tpu.memory_space<vmem>>, %arg13: memref<128x34xbf16, #tpu.memory_space<vmem>>, %arg14: memref<8x332xbf16, #tpu.memory_space<vmem>>, %arg15: memref<128x270xbf16, #tpu.memory_space<vmem>>, %arg16: memref<16x270xf32, #tpu.memory_space<vmem>>, %arg17: memref<128x18xbf16, #tpu.memory_space<vmem>>, %arg18: memref<16x108xbf16, #tpu.memory_space<vmem>>, %arg19: memref<256x70xbf16, #tpu.memory_space<vmem>>, %arg20: memref<32x70xf32, #tpu.memory_space<vmem>>, %arg21: memref<128x10xbf16, #tpu.memory_space<vmem>>, %arg22: memref<32x44xbf16, #tpu.memory_space<vmem>>, %arg23: memref<288x24xbf16, #tpu.memory_space<vmem>>, %arg24: memref<1x24xf32, #tpu.memory_space<vmem>>) attributes {dimension_semantics = [#tpu.dimension_semantics<parallel>], iteration_bounds = array<i64: 2>, scalar_prefetch = 0 : i64, scratch_operands = 14 : i64, tpu.core_type = #tpu.core_type<tc>, window_params = [{transform_indices = @transform_0, window_bounds = array<i64: 1, 8, 1164>}, {pipeline_mode = #tpu.pipeline_mode<synchronous>, transform_indices = @transform_1, window_bounds = array<i64: 8, 128>}, {pipeline_mode = #tpu.pipeline_mode<synchronous>, transform_indices = @transform_2, window_bounds = array<i64: 8, 1>}, {pipeline_mode = #tpu.pipeline_mode<synchronous>, transform_indices = @transform_3, window_bounds = array<i64: 34, 16>}, {pipeline_mode = #tpu.pipeline_mode<synchronous>, transform_indices = @transform_4, window_bounds = array<i64: 16, 128>}, {pipeline_mode = #tpu.pipeline_mode<synchronous>, transform_indices = @transform_5, window_bounds = array<i64: 18, 8>}, {pipeline_mode = #tpu.pipeline_mode<synchronous>, transform_indices = @transform_6, window_bounds = array<i64: 32, 256>}, {pipeline_mode = #tpu.pipeline_mode<synchronous>, transform_indices = @transform_7, window_bounds = array<i64: 10, 4>}, {pipeline_mode = #tpu.pipeline_mode<synchronous>, transform_indices = @transform_8, window_bounds = array<i64: 1, 288>}, {transform_indices = @transform_9, window_bounds = array<i64: 1, 1, 16>}]} {
    %c0 = arith.constant 0 : index
    %c0_0 = arith.constant 0 : index
    %c0_1 = arith.constant 0 : index
    %0 = vector.load %arg1[%c0, %c0_0, %c0_1] : memref<1x8x1164xbf16, #tpu.memory_space<vmem>>, vector<1x8x1054xbf16>
    %1 = vector.shape_cast %0 : vector<1x8x1054xbf16> to vector<8x1054xbf16>
    %c0_2 = arith.constant 0 : index
    %c0_3 = arith.constant 0 : index
    %2 = vector.load %arg11[%c0_2, %c0_3] : memref<128x1054xbf16, #tpu.memory_space<vmem>>, vector<8x1054xbf16>
    tpu.vector_store %arg11[%c0_2, %c0_3], %1 {strides = array<i32>} : memref<128x1054xbf16, #tpu.memory_space<vmem>>, vector<8x1054xbf16>,
    %c0_4 = arith.constant 0 : index
    %c0_5 = arith.constant 0 : index
    %c1 = arith.constant 1 : index
    %3 = vector.load %arg1[%c0_4, %c0_5, %c1] : memref<1x8x1164xbf16, #tpu.memory_space<vmem>>, vector<1x8x1054xbf16>
    %4 = vector.shape_cast %3 : vector<1x8x1054xbf16> to vector<8x1054xbf16>
    %c8 = arith.constant 8 : index
    %c0_6 = arith.constant 0 : index
    %5 = vector.load %arg11[%c8, %c0_6] : memref<128x1054xbf16, #tpu.memory_space<vmem>>, vector<8x1054xbf16>
    tpu.vector_store %arg11[%c8, %c0_6], %4 {strides = array<i32>} : memref<128x1054xbf16, #tpu.memory_space<vmem>>, vector<8x1054xbf16>,
    %c0_7 = arith.constant 0 : index
    %c0_8 = arith.constant 0 : index
    %c2 = arith.constant 2 : index
    %6 = vector.load %arg1[%c0_7, %c0_8, %c2] : memref<1x8x1164xbf16, #tpu.memory_space<vmem>>, vector<1x8x1054xbf16>
    %7 = vector.shape_cast %6 : vector<1x8x1054xbf16> to vector<8x1054xbf16>
    %c16 = arith.constant 16 : index
    %c0_9 = arith.constant 0 : index
    %8 = vector.load %arg11[%c16, %c0_9] : memref<128x1054xbf16, #tpu.memory_space<vmem>>, vector<8x1054xbf16>
    tpu.vector_store %arg11[%c16, %c0_9], %7 {strides = array<i32>} : memref<128x1054xbf16, #tpu.memory_space<vmem>>, vector<8x1054xbf16>,
    %c0_10 = arith.constant 0 : index
    %c0_11 = arith.constant 0 : index
    %c3 = arith.constant 3 : index
    %9 = vector.load %arg1[%c0_10, %c0_11, %c3] : memref<1x8x1164xbf16, #tpu.memory_space<vmem>>, vector<1x8x1054xbf16>
    %10 = vector.shape_cast %9 : vector<1x8x1054xbf16> to vector<8x1054xbf16>
    %c24 = arith.constant 24 : index
    %c0_12 = arith.constant 0 : index
    %11 = vector.load %arg11[%c24, %c0_12] : memref<128x1054xbf16, #tpu.memory_space<vmem>>, vector<8x1054xbf16>
    tpu.vector_store %arg11[%c24, %c0_12], %10 {strides = array<i32>} : memref<128x1054xbf16, #tpu.memory_space<vmem>>, vector<8x1054xbf16>,
    %c0_13 = arith.constant 0 : index
    %c0_14 = arith.constant 0 : index
    %c34 = arith.constant 34 : index
    %12 = vector.load %arg1[%c0_13, %c0_14, %c34] : memref<1x8x1164xbf16, #tpu.memory_space<vmem>>, vector<1x8x1054xbf16>
    %13 = vector.shape_cast %12 : vector<1x8x1054xbf16> to vector<8x1054xbf16>
    %c32 = arith.constant 32 : index
    %c0_15 = arith.constant 0 : index
    %14 = vector.load %arg11[%c32, %c0_15] : memref<128x1054xbf16, #tpu.memory_space<vmem>>, vector<8x1054xbf16>
    tpu.vector_store %arg11[%c32, %c0_15], %13 {strides = array<i32>} : memref<128x1054xbf16, #tpu.memory_space<vmem>>, vector<8x1054xbf16>,
    %c0_16 = arith.constant 0 : index
    %c0_17 = arith.constant 0 : index
    %c35 = arith.constant 35 : index
    %15 = vector.load %arg1[%c0_16, %c0_17, %c35] : memref<1x8x1164xbf16, #tpu.memory_space<vmem>>, vector<1x8x1054xbf16>
    %16 = vector.shape_cast %15 : vector<1x8x1054xbf16> to vector<8x1054xbf16>
    %c40 = arith.constant 40 : index
    %c0_18 = arith.constant 0 : index
    %17 = vector.load %arg11[%c40, %c0_18] : memref<128x1054xbf16, #tpu.memory_space<vmem>>, vector<8x1054xbf16>
    tpu.vector_store %arg11[%c40, %c0_18], %16 {strides = array<i32>} : memref<128x1054xbf16, #tpu.memory_space<vmem>>, vector<8x1054xbf16>,
    %c0_19 = arith.constant 0 : index
    %c0_20 = arith.constant 0 : index
    %c36 = arith.constant 36 : index
    %18 = vector.load %arg1[%c0_19, %c0_20, %c36] : memref<1x8x1164xbf16, #tpu.memory_space<vmem>>, vector<1x8x1054xbf16>
    %19 = vector.shape_cast %18 : vector<1x8x1054xbf16> to vector<8x1054xbf16>
    %c48 = arith.constant 48 : index
    %c0_21 = arith.constant 0 : index
    %20 = vector.load %arg11[%c48, %c0_21] : memref<128x1054xbf16, #tpu.memory_space<vmem>>, vector<8x1054xbf16>
    tpu.vector_store %arg11[%c48, %c0_21], %19 {strides = array<i32>} : memref<128x1054xbf16, #tpu.memory_space<vmem>>, vector<8x1054xbf16>,
    %c0_22 = arith.constant 0 : index
    %c0_23 = arith.constant 0 : index
    %c37 = arith.constant 37 : index
    %21 = vector.load %arg1[%c0_22, %c0_23, %c37] : memref<1x8x1164xbf16, #tpu.memory_space<vmem>>, vector<1x8x1054xbf16>
    %22 = vector.shape_cast %21 : vector<1x8x1054xbf16> to vector<8x1054xbf16>
    %c56 = arith.constant 56 : index
    %c0_24 = arith.constant 0 : index
    %23 = vector.load %arg11[%c56, %c0_24] : memref<128x1054xbf16, #tpu.memory_space<vmem>>, vector<8x1054xbf16>
    tpu.vector_store %arg11[%c56, %c0_24], %22 {strides = array<i32>} : memref<128x1054xbf16, #tpu.memory_space<vmem>>, vector<8x1054xbf16>,
    %c0_25 = arith.constant 0 : index
    %c0_26 = arith.constant 0 : index
    %c68 = arith.constant 68 : index
    %24 = vector.load %arg1[%c0_25, %c0_26, %c68] : memref<1x8x1164xbf16, #tpu.memory_space<vmem>>, vector<1x8x1054xbf16>
    %25 = vector.shape_cast %24 : vector<1x8x1054xbf16> to vector<8x1054xbf16>
    %c64 = arith.constant 64 : index
    %c0_27 = arith.constant 0 : index
    %26 = vector.load %arg11[%c64, %c0_27] : memref<128x1054xbf16, #tpu.memory_space<vmem>>, vector<8x1054xbf16>
    tpu.vector_store %arg11[%c64, %c0_27], %25 {strides = array<i32>} : memref<128x1054xbf16, #tpu.memory_space<vmem>>, vector<8x1054xbf16>,
    %c0_28 = arith.constant 0 : index
    %c0_29 = arith.constant 0 : index
    %c69 = arith.constant 69 : index
    %27 = vector.load %arg1[%c0_28, %c0_29, %c69] : memref<1x8x1164xbf16, #tpu.memory_space<vmem>>, vector<1x8x1054xbf16>
    %28 = vector.shape_cast %27 : vector<1x8x1054xbf16> to vector<8x1054xbf16>
    %c72 = arith.constant 72 : index
    %c0_30 = arith.constant 0 : index
    %29 = vector.load %arg11[%c72, %c0_30] : memref<128x1054xbf16, #tpu.memory_space<vmem>>, vector<8x1054xbf16>
    tpu.vector_store %arg11[%c72, %c0_30], %28 {strides = array<i32>} : memref<128x1054xbf16, #tpu.memory_space<vmem>>, vector<8x1054xbf16>,
    %c0_31 = arith.constant 0 : index
    %c0_32 = arith.constant 0 : index
    %c70 = arith.constant 70 : index
    %30 = vector.load %arg1[%c0_31, %c0_32, %c70] : memref<1x8x1164xbf16, #tpu.memory_space<vmem>>, vector<1x8x1054xbf16>
    %31 = vector.shape_cast %30 : vector<1x8x1054xbf16> to vector<8x1054xbf16>
    %c80 = arith.constant 80 : index
    %c0_33 = arith.constant 0 : index
    %32 = vector.load %arg11[%c80, %c0_33] : memref<128x1054xbf16, #tpu.memory_space<vmem>>, vector<8x1054xbf16>
    tpu.vector_store %arg11[%c80, %c0_33], %31 {strides = array<i32>} : memref<128x1054xbf16, #tpu.memory_space<vmem>>, vector<8x1054xbf16>,
    %c0_34 = arith.constant 0 : index
    %c0_35 = arith.constant 0 : index
    %c71 = arith.constant 71 : index
    %33 = vector.load %arg1[%c0_34, %c0_35, %c71] : memref<1x8x1164xbf16, #tpu.memory_space<vmem>>, vector<1x8x1054xbf16>
    %34 = vector.shape_cast %33 : vector<1x8x1054xbf16> to vector<8x1054xbf16>
    %c88 = arith.constant 88 : index
    %c0_36 = arith.constant 0 : index
    %35 = vector.load %arg11[%c88, %c0_36] : memref<128x1054xbf16, #tpu.memory_space<vmem>>, vector<8x1054xbf16>
    tpu.vector_store %arg11[%c88, %c0_36], %34 {strides = array<i32>} : memref<128x1054xbf16, #tpu.memory_space<vmem>>, vector<8x1054xbf16>,
    %c0_37 = arith.constant 0 : index
    %c0_38 = arith.constant 0 : index
    %c102 = arith.constant 102 : index
    %36 = vector.load %arg1[%c0_37, %c0_38, %c102] : memref<1x8x1164xbf16, #tpu.memory_space<vmem>>, vector<1x8x1054xbf16>
    %37 = vector.shape_cast %36 : vector<1x8x1054xbf16> to vector<8x1054xbf16>
    %c96 = arith.constant 96 : index
    %c0_39 = arith.constant 0 : index
    %38 = vector.load %arg11[%c96, %c0_39] : memref<128x1054xbf16, #tpu.memory_space<vmem>>, vector<8x1054xbf16>
    tpu.vector_store %arg11[%c96, %c0_39], %37 {strides = array<i32>} : memref<128x1054xbf16, #tpu.memory_space<vmem>>, vector<8x1054xbf16>,
    %c0_40 = arith.constant 0 : index
    %c0_41 = arith.constant 0 : index
    %c103 = arith.constant 103 : index
    %39 = vector.load %arg1[%c0_40, %c0_41, %c103] : memref<1x8x1164xbf16, #tpu.memory_space<vmem>>, vector<1x8x1054xbf16>
    %40 = vector.shape_cast %39 : vector<1x8x1054xbf16> to vector<8x1054xbf16>
    %c104 = arith.constant 104 : index
    %c0_42 = arith.constant 0 : index
    %41 = vector.load %arg11[%c104, %c0_42] : memref<128x1054xbf16, #tpu.memory_space<vmem>>, vector<8x1054xbf16>
    tpu.vector_store %arg11[%c104, %c0_42], %40 {strides = array<i32>} : memref<128x1054xbf16, #tpu.memory_space<vmem>>, vector<8x1054xbf16>,
    %c0_43 = arith.constant 0 : index
    %c0_44 = arith.constant 0 : index
    %c104_45 = arith.constant 104 : index
    %42 = vector.load %arg1[%c0_43, %c0_44, %c104_45] : memref<1x8x1164xbf16, #tpu.memory_space<vmem>>, vector<1x8x1054xbf16>
    %43 = vector.shape_cast %42 : vector<1x8x1054xbf16> to vector<8x1054xbf16>
    %c112 = arith.constant 112 : index
    %c0_46 = arith.constant 0 : index
    %44 = vector.load %arg11[%c112, %c0_46] : memref<128x1054xbf16, #tpu.memory_space<vmem>>, vector<8x1054xbf16>
    tpu.vector_store %arg11[%c112, %c0_46], %43 {strides = array<i32>} : memref<128x1054xbf16, #tpu.memory_space<vmem>>, vector<8x1054xbf16>,
    %c0_47 = arith.constant 0 : index
    %c0_48 = arith.constant 0 : index
    %c105 = arith.constant 105 : index
    %45 = vector.load %arg1[%c0_47, %c0_48, %c105] : memref<1x8x1164xbf16, #tpu.memory_space<vmem>>, vector<1x8x1054xbf16>
    %46 = vector.shape_cast %45 : vector<1x8x1054xbf16> to vector<8x1054xbf16>
    %c120 = arith.constant 120 : index
    %c0_49 = arith.constant 0 : index
    %47 = vector.load %arg11[%c120, %c0_49] : memref<128x1054xbf16, #tpu.memory_space<vmem>>, vector<8x1054xbf16>
    tpu.vector_store %arg11[%c120, %c0_49], %46 {strides = array<i32>} : memref<128x1054xbf16, #tpu.memory_space<vmem>>, vector<8x1054xbf16>,
    %c0_50 = arith.constant 0 : index
    %c0_51 = arith.constant 0 : index
    %48 = vector.load %arg2[%c0_50, %c0_51] : memref<8x128xbf16, #tpu.memory_space<vmem>>, vector<8x128xbf16>
    %c0_52 = arith.constant 0 : index
    %c0_53 = arith.constant 0 : index
    %49 = vector.load %arg11[%c0_52, %c0_53] : memref<128x1054xbf16, #tpu.memory_space<vmem>>, vector<128x1054xbf16>
    %cst = arith.constant dense<0.000000e+00> : vector<8x1054xf32>
    %50 = tpu.matmul %48, %49, %cst {dimension_numbers = #tpu.dot_dimension_numbers<[1], [0], [0], [1], [0, 0, 1, 1], [], []>} : vector<8x128xbf16>, vector<128x1054xbf16>, vector<8x1054xf32> -> vector<8x1054xf32>
    %c0_54 = arith.constant 0 : index
    %c0_55 = arith.constant 0 : index
    %51 = vector.load %arg3[%c0_54, %c0_55] : memref<8x1xf32, #tpu.memory_space<vmem>>, vector<8x1xf32>
    %52 = vector.broadcast %51 : vector<8x1xf32> to vector<8x1054xf32>
    %53 = arith.addf %50, %52 : vector<8x1054xf32>
    %cst_56 = arith.constant 0.000000e+00 : f32
    %54 = vector.broadcast %cst_56 : f32 to vector<8x1054xf32>
    %55 = arith.cmpf oge, %53, %54 : vector<8x1054xf32>
    %cst_57 = arith.constant 0.00999999977 : f32
    %56 = vector.broadcast %cst_57 : f32 to vector<8x1054xf32>
    %57 = arith.mulf %56, %53 : vector<8x1054xf32>
    %58 = arith.select %55, %53, %57 : vector<8x1054xi1>, vector<8x1054xf32>
    %c0_58 = arith.constant 0 : index
    %c0_59 = arith.constant 0 : index
    %59 = vector.load %arg12[%c0_58, %c0_59] : memref<8x1054xf32, #tpu.memory_space<vmem>>, vector<8x1054xf32>
    tpu.vector_store %arg12[%c0_58, %c0_59], %58 {strides = array<i32>} : memref<8x1054xf32, #tpu.memory_space<vmem>>, vector<8x1054xf32>,
    %c0_60 = arith.constant 0 : index
    %c0_61 = arith.constant 0 : index
    %60 = vector.load %arg12[%c0_60, %c0_61] : memref<8x1054xf32, #tpu.memory_space<vmem>>, vector<8x34xf32>
    %61 = arith.truncf %60 : vector<8x34xf32> to vector<8x34xbf16>
    %c0_62 = arith.constant 0 : index
    %c0_63 = arith.constant 0 : index
    %62 = vector.load %arg13[%c0_62, %c0_63] : memref<128x34xbf16, #tpu.memory_space<vmem>>, vector<8x34xbf16>
    tpu.vector_store %arg13[%c0_62, %c0_63], %61 {strides = array<i32>} : memref<128x34xbf16, #tpu.memory_space<vmem>>, vector<8x34xbf16>,
    %c0_64 = arith.constant 0 : index
    %c68_65 = arith.constant 68 : index
    %63 = vector.load %arg12[%c0_64, %c68_65] : memref<8x1054xf32, #tpu.memory_space<vmem>>, vector<8x34xf32>
    %64 = arith.truncf %63 : vector<8x34xf32> to vector<8x34xbf16>
    %c8_66 = arith.constant 8 : index
    %c0_67 = arith.constant 0 : index
    %65 = vector.load %arg13[%c8_66, %c0_67] : memref<128x34xbf16, #tpu.memory_space<vmem>>, vector<8x34xbf16>
    tpu.vector_store %arg13[%c8_66, %c0_67], %64 {strides = array<i32>} : memref<128x34xbf16, #tpu.memory_space<vmem>>, vector<8x34xbf16>,
    %c0_68 = arith.constant 0 : index
    %c136 = arith.constant 136 : index
    %66 = vector.load %arg12[%c0_68, %c136] : memref<8x1054xf32, #tpu.memory_space<vmem>>, vector<8x34xf32>
    %67 = arith.truncf %66 : vector<8x34xf32> to vector<8x34xbf16>
    %c16_69 = arith.constant 16 : index
    %c0_70 = arith.constant 0 : index
    %68 = vector.load %arg13[%c16_69, %c0_70] : memref<128x34xbf16, #tpu.memory_space<vmem>>, vector<8x34xbf16>
    tpu.vector_store %arg13[%c16_69, %c0_70], %67 {strides = array<i32>} : memref<128x34xbf16, #tpu.memory_space<vmem>>, vector<8x34xbf16>,
    %c0_71 = arith.constant 0 : index
    %c204 = arith.constant 204 : index
    %69 = vector.load %arg12[%c0_71, %c204] : memref<8x1054xf32, #tpu.memory_space<vmem>>, vector<8x34xf32>
    %70 = arith.truncf %69 : vector<8x34xf32> to vector<8x34xbf16>
    %c24_72 = arith.constant 24 : index
    %c0_73 = arith.constant 0 : index
    %71 = vector.load %arg13[%c24_72, %c0_73] : memref<128x34xbf16, #tpu.memory_space<vmem>>, vector<8x34xbf16>
    tpu.vector_store %arg13[%c24_72, %c0_73], %70 {strides = array<i32>} : memref<128x34xbf16, #tpu.memory_space<vmem>>, vector<8x34xbf16>,
    %c0_74 = arith.constant 0 : index
    %c272 = arith.constant 272 : index
    %72 = vector.load %arg12[%c0_74, %c272] : memref<8x1054xf32, #tpu.memory_space<vmem>>, vector<8x34xf32>
    %73 = arith.truncf %72 : vector<8x34xf32> to vector<8x34xbf16>
    %c32_75 = arith.constant 32 : index
    %c0_76 = arith.constant 0 : index
    %74 = vector.load %arg13[%c32_75, %c0_76] : memref<128x34xbf16, #tpu.memory_space<vmem>>, vector<8x34xbf16>
    tpu.vector_store %arg13[%c32_75, %c0_76], %73 {strides = array<i32>} : memref<128x34xbf16, #tpu.memory_space<vmem>>, vector<8x34xbf16>,
    %c0_77 = arith.constant 0 : index
    %c340 = arith.constant 340 : index
    %75 = vector.load %arg12[%c0_77, %c340] : memref<8x1054xf32, #tpu.memory_space<vmem>>, vector<8x34xf32>
    %76 = arith.truncf %75 : vector<8x34xf32> to vector<8x34xbf16>
    %c40_78 = arith.constant 40 : index
    %c0_79 = arith.constant 0 : index
    %77 = vector.load %arg13[%c40_78, %c0_79] : memref<128x34xbf16, #tpu.memory_space<vmem>>, vector<8x34xbf16>
    tpu.vector_store %arg13[%c40_78, %c0_79], %76 {strides = array<i32>} : memref<128x34xbf16, #tpu.memory_space<vmem>>, vector<8x34xbf16>,
    %c0_80 = arith.constant 0 : index
    %c408 = arith.constant 408 : index
    %78 = vector.load %arg12[%c0_80, %c408] : memref<8x1054xf32, #tpu.memory_space<vmem>>, vector<8x34xf32>
    %79 = arith.truncf %78 : vector<8x34xf32> to vector<8x34xbf16>
    %c48_81 = arith.constant 48 : index
    %c0_82 = arith.constant 0 : index
    %80 = vector.load %arg13[%c48_81, %c0_82] : memref<128x34xbf16, #tpu.memory_space<vmem>>, vector<8x34xbf16>
    tpu.vector_store %arg13[%c48_81, %c0_82], %79 {strides = array<i32>} : memref<128x34xbf16, #tpu.memory_space<vmem>>, vector<8x34xbf16>,
    %c0_83 = arith.constant 0 : index
    %c476 = arith.constant 476 : index
    %81 = vector.load %arg12[%c0_83, %c476] : memref<8x1054xf32, #tpu.memory_space<vmem>>, vector<8x34xf32>
    %82 = arith.truncf %81 : vector<8x34xf32> to vector<8x34xbf16>
    %c56_84 = arith.constant 56 : index
    %c0_85 = arith.constant 0 : index
    %83 = vector.load %arg13[%c56_84, %c0_85] : memref<128x34xbf16, #tpu.memory_space<vmem>>, vector<8x34xbf16>
    tpu.vector_store %arg13[%c56_84, %c0_85], %82 {strides = array<i32>} : memref<128x34xbf16, #tpu.memory_space<vmem>>, vector<8x34xbf16>,
    %c0_86 = arith.constant 0 : index
    %c544 = arith.constant 544 : index
    %84 = vector.load %arg12[%c0_86, %c544] : memref<8x1054xf32, #tpu.memory_space<vmem>>, vector<8x34xf32>
    %85 = arith.truncf %84 : vector<8x34xf32> to vector<8x34xbf16>
    %c64_87 = arith.constant 64 : index
    %c0_88 = arith.constant 0 : index
    %86 = vector.load %arg13[%c64_87, %c0_88] : memref<128x34xbf16, #tpu.memory_space<vmem>>, vector<8x34xbf16>
    tpu.vector_store %arg13[%c64_87, %c0_88], %85 {strides = array<i32>} : memref<128x34xbf16, #tpu.memory_space<vmem>>, vector<8x34xbf16>,
    %c0_89 = arith.constant 0 : index
    %c612 = arith.constant 612 : index
    %87 = vector.load %arg12[%c0_89, %c612] : memref<8x1054xf32, #tpu.memory_space<vmem>>, vector<8x34xf32>
    %88 = arith.truncf %87 : vector<8x34xf32> to vector<8x34xbf16>
    %c72_90 = arith.constant 72 : index
    %c0_91 = arith.constant 0 : index
    %89 = vector.load %arg13[%c72_90, %c0_91] : memref<128x34xbf16, #tpu.memory_space<vmem>>, vector<8x34xbf16>
    tpu.vector_store %arg13[%c72_90, %c0_91], %88 {strides = array<i32>} : memref<128x34xbf16, #tpu.memory_space<vmem>>, vector<8x34xbf16>,
    %c0_92 = arith.constant 0 : index
    %c680 = arith.constant 680 : index
    %90 = vector.load %arg12[%c0_92, %c680] : memref<8x1054xf32, #tpu.memory_space<vmem>>, vector<8x34xf32>
    %91 = arith.truncf %90 : vector<8x34xf32> to vector<8x34xbf16>
    %c80_93 = arith.constant 80 : index
    %c0_94 = arith.constant 0 : index
    %92 = vector.load %arg13[%c80_93, %c0_94] : memref<128x34xbf16, #tpu.memory_space<vmem>>, vector<8x34xbf16>
    tpu.vector_store %arg13[%c80_93, %c0_94], %91 {strides = array<i32>} : memref<128x34xbf16, #tpu.memory_space<vmem>>, vector<8x34xbf16>,
    %c0_95 = arith.constant 0 : index
    %c748 = arith.constant 748 : index
    %93 = vector.load %arg12[%c0_95, %c748] : memref<8x1054xf32, #tpu.memory_space<vmem>>, vector<8x34xf32>
    %94 = arith.truncf %93 : vector<8x34xf32> to vector<8x34xbf16>
    %c88_96 = arith.constant 88 : index
    %c0_97 = arith.constant 0 : index
    %95 = vector.load %arg13[%c88_96, %c0_97] : memref<128x34xbf16, #tpu.memory_space<vmem>>, vector<8x34xbf16>
    tpu.vector_store %arg13[%c88_96, %c0_97], %94 {strides = array<i32>} : memref<128x34xbf16, #tpu.memory_space<vmem>>, vector<8x34xbf16>,
    %c0_98 = arith.constant 0 : index
    %c816 = arith.constant 816 : index
    %96 = vector.load %arg12[%c0_98, %c816] : memref<8x1054xf32, #tpu.memory_space<vmem>>, vector<8x34xf32>
    %97 = arith.truncf %96 : vector<8x34xf32> to vector<8x34xbf16>
    %c96_99 = arith.constant 96 : index
    %c0_100 = arith.constant 0 : index
    %98 = vector.load %arg13[%c96_99, %c0_100] : memref<128x34xbf16, #tpu.memory_space<vmem>>, vector<8x34xbf16>
    tpu.vector_store %arg13[%c96_99, %c0_100], %97 {strides = array<i32>} : memref<128x34xbf16, #tpu.memory_space<vmem>>, vector<8x34xbf16>,
    %c0_101 = arith.constant 0 : index
    %c884 = arith.constant 884 : index
    %99 = vector.load %arg12[%c0_101, %c884] : memref<8x1054xf32, #tpu.memory_space<vmem>>, vector<8x34xf32>
    %100 = arith.truncf %99 : vector<8x34xf32> to vector<8x34xbf16>
    %c104_102 = arith.constant 104 : index
    %c0_103 = arith.constant 0 : index
    %101 = vector.load %arg13[%c104_102, %c0_103] : memref<128x34xbf16, #tpu.memory_space<vmem>>, vector<8x34xbf16>
    tpu.vector_store %arg13[%c104_102, %c0_103], %100 {strides = array<i32>} : memref<128x34xbf16, #tpu.memory_space<vmem>>, vector<8x34xbf16>,
    %c0_104 = arith.constant 0 : index
    %c952 = arith.constant 952 : index
    %102 = vector.load %arg12[%c0_104, %c952] : memref<8x1054xf32, #tpu.memory_space<vmem>>, vector<8x34xf32>
    %103 = arith.truncf %102 : vector<8x34xf32> to vector<8x34xbf16>
    %c112_105 = arith.constant 112 : index
    %c0_106 = arith.constant 0 : index
    %104 = vector.load %arg13[%c112_105, %c0_106] : memref<128x34xbf16, #tpu.memory_space<vmem>>, vector<8x34xbf16>
    tpu.vector_store %arg13[%c112_105, %c0_106], %103 {strides = array<i32>} : memref<128x34xbf16, #tpu.memory_space<vmem>>, vector<8x34xbf16>,
    %c0_107 = arith.constant 0 : index
    %c1020 = arith.constant 1020 : index
    %105 = vector.load %arg12[%c0_107, %c1020] : memref<8x1054xf32, #tpu.memory_space<vmem>>, vector<8x34xf32>
    %106 = arith.truncf %105 : vector<8x34xf32> to vector<8x34xbf16>
    %c120_108 = arith.constant 120 : index
    %c0_109 = arith.constant 0 : index
    %107 = vector.load %arg13[%c120_108, %c0_109] : memref<128x34xbf16, #tpu.memory_space<vmem>>, vector<8x34xbf16>
    tpu.vector_store %arg13[%c120_108, %c0_109], %106 {strides = array<i32>} : memref<128x34xbf16, #tpu.memory_space<vmem>>, vector<8x34xbf16>,
    %c0_110 = arith.constant 0 : index
    %c0_111 = arith.constant 0 : index
    %108 = vector.load %arg13[%c0_110, %c0_111] : memref<128x34xbf16, #tpu.memory_space<vmem>>, vector<128x34xbf16>
    %c0_112 = arith.constant 0 : index
    %c0_113 = arith.constant 0 : index
    %109 = vector.load %arg4[%c0_112, %c0_113] : memref<34x16xbf16, #tpu.memory_space<vmem>>, vector<34x16xbf16>
    %cst_114 = arith.constant dense<0.000000e+00> : vector<128x16xf32>
    %110 = tpu.matmul %108, %109, %cst_114 {dimension_numbers = #tpu.dot_dimension_numbers<[1], [0], [0], [1], [0, 0, 1, 1], [], []>} : vector<128x34xbf16>, vector<34x16xbf16>, vector<128x16xf32> -> vector<128x16xf32>
    %111 = arith.truncf %110 : vector<128x16xf32> to vector<128x16xbf16>
    %cst_115 = arith.constant 0.000000e+00 : bf16
    %112 = vector.broadcast %cst_115 : bf16 to vector<8x332xbf16>
    %c0_116 = arith.constant 0 : index
    %c0_117 = arith.constant 0 : index
    %113 = vector.load %arg14[%c0_116, %c0_117] : memref<8x332xbf16, #tpu.memory_space<vmem>>, vector<8x332xbf16>
    tpu.vector_store %arg14[%c0_116, %c0_117], %112 {strides = array<i32>} : memref<8x332xbf16, #tpu.memory_space<vmem>>, vector<8x332xbf16>,
    %114 = vector.extract_strided_slice %111 {offsets = [0, 0], sizes = [8, 16], strides = [1, 1]} : vector<128x16xbf16> to vector<8x16xbf16>
    %c0_118 = arith.constant 0 : index
    %c19 = arith.constant 19 : index
    %115 = vector.load %arg14[%c0_118, %c19] : memref<8x332xbf16, #tpu.memory_space<vmem>>, vector<8x16xbf16>
    tpu.vector_store %arg14[%c0_118, %c19], %114 {strides = array<i32>} : memref<8x332xbf16, #tpu.memory_space<vmem>>, vector<8x16xbf16>,
    %116 = vector.extract_strided_slice %111 {offsets = [8, 0], sizes = [8, 16], strides = [1, 1]} : vector<128x16xbf16> to vector<8x16xbf16>
    %c0_119 = arith.constant 0 : index
    %c37_120 = arith.constant 37 : index
    %117 = vector.load %arg14[%c0_119, %c37_120] : memref<8x332xbf16, #tpu.memory_space<vmem>>, vector<8x16xbf16>
    tpu.vector_store %arg14[%c0_119, %c37_120], %116 {strides = array<i32>} : memref<8x332xbf16, #tpu.memory_space<vmem>>, vector<8x16xbf16>,
    %118 = vector.extract_strided_slice %111 {offsets = [16, 0], sizes = [8, 16], strides = [1, 1]} : vector<128x16xbf16> to vector<8x16xbf16>
    %c0_121 = arith.constant 0 : index
    %c55 = arith.constant 55 : index
    %119 = vector.load %arg14[%c0_121, %c55] : memref<8x332xbf16, #tpu.memory_space<vmem>>, vector<8x16xbf16>
    tpu.vector_store %arg14[%c0_121, %c55], %118 {strides = array<i32>} : memref<8x332xbf16, #tpu.memory_space<vmem>>, vector<8x16xbf16>,
    %120 = vector.extract_strided_slice %111 {offsets = [24, 0], sizes = [8, 16], strides = [1, 1]} : vector<128x16xbf16> to vector<8x16xbf16>
    %c0_122 = arith.constant 0 : index
    %c73 = arith.constant 73 : index
    %121 = vector.load %arg14[%c0_122, %c73] : memref<8x332xbf16, #tpu.memory_space<vmem>>, vector<8x16xbf16>
    tpu.vector_store %arg14[%c0_122, %c73], %120 {strides = array<i32>} : memref<8x332xbf16, #tpu.memory_space<vmem>>, vector<8x16xbf16>,
    %122 = vector.extract_strided_slice %111 {offsets = [32, 0], sizes = [8, 16], strides = [1, 1]} : vector<128x16xbf16> to vector<8x16xbf16>
    %c0_123 = arith.constant 0 : index
    %c91 = arith.constant 91 : index
    %123 = vector.load %arg14[%c0_123, %c91] : memref<8x332xbf16, #tpu.memory_space<vmem>>, vector<8x16xbf16>
    tpu.vector_store %arg14[%c0_123, %c91], %122 {strides = array<i32>} : memref<8x332xbf16, #tpu.memory_space<vmem>>, vector<8x16xbf16>,
    %124 = vector.extract_strided_slice %111 {offsets = [40, 0], sizes = [8, 16], strides = [1, 1]} : vector<128x16xbf16> to vector<8x16xbf16>
    %c0_124 = arith.constant 0 : index
    %c109 = arith.constant 109 : index
    %125 = vector.load %arg14[%c0_124, %c109] : memref<8x332xbf16, #tpu.memory_space<vmem>>, vector<8x16xbf16>
    tpu.vector_store %arg14[%c0_124, %c109], %124 {strides = array<i32>} : memref<8x332xbf16, #tpu.memory_space<vmem>>, vector<8x16xbf16>,
    %126 = vector.extract_strided_slice %111 {offsets = [48, 0], sizes = [8, 16], strides = [1, 1]} : vector<128x16xbf16> to vector<8x16xbf16>
    %c0_125 = arith.constant 0 : index
    %c127 = arith.constant 127 : index
    %127 = vector.load %arg14[%c0_125, %c127] : memref<8x332xbf16, #tpu.memory_space<vmem>>, vector<8x16xbf16>
    tpu.vector_store %arg14[%c0_125, %c127], %126 {strides = array<i32>} : memref<8x332xbf16, #tpu.memory_space<vmem>>, vector<8x16xbf16>,
    %128 = vector.extract_strided_slice %111 {offsets = [56, 0], sizes = [8, 16], strides = [1, 1]} : vector<128x16xbf16> to vector<8x16xbf16>
    %c0_126 = arith.constant 0 : index
    %c145 = arith.constant 145 : index
    %129 = vector.load %arg14[%c0_126, %c145] : memref<8x332xbf16, #tpu.memory_space<vmem>>, vector<8x16xbf16>
    tpu.vector_store %arg14[%c0_126, %c145], %128 {strides = array<i32>} : memref<8x332xbf16, #tpu.memory_space<vmem>>, vector<8x16xbf16>,
    %130 = vector.extract_strided_slice %111 {offsets = [64, 0], sizes = [8, 16], strides = [1, 1]} : vector<128x16xbf16> to vector<8x16xbf16>
    %c0_127 = arith.constant 0 : index
    %c163 = arith.constant 163 : index
    %131 = vector.load %arg14[%c0_127, %c163] : memref<8x332xbf16, #tpu.memory_space<vmem>>, vector<8x16xbf16>
    tpu.vector_store %arg14[%c0_127, %c163], %130 {strides = array<i32>} : memref<8x332xbf16, #tpu.memory_space<vmem>>, vector<8x16xbf16>,
    %132 = vector.extract_strided_slice %111 {offsets = [72, 0], sizes = [8, 16], strides = [1, 1]} : vector<128x16xbf16> to vector<8x16xbf16>
    %c0_128 = arith.constant 0 : index
    %c181 = arith.constant 181 : index
    %133 = vector.load %arg14[%c0_128, %c181] : memref<8x332xbf16, #tpu.memory_space<vmem>>, vector<8x16xbf16>
    tpu.vector_store %arg14[%c0_128, %c181], %132 {strides = array<i32>} : memref<8x332xbf16, #tpu.memory_space<vmem>>, vector<8x16xbf16>,
    %134 = vector.extract_strided_slice %111 {offsets = [80, 0], sizes = [8, 16], strides = [1, 1]} : vector<128x16xbf16> to vector<8x16xbf16>
    %c0_129 = arith.constant 0 : index
    %c199 = arith.constant 199 : index
    %135 = vector.load %arg14[%c0_129, %c199] : memref<8x332xbf16, #tpu.memory_space<vmem>>, vector<8x16xbf16>
    tpu.vector_store %arg14[%c0_129, %c199], %134 {strides = array<i32>} : memref<8x332xbf16, #tpu.memory_space<vmem>>, vector<8x16xbf16>,
    %136 = vector.extract_strided_slice %111 {offsets = [88, 0], sizes = [8, 16], strides = [1, 1]} : vector<128x16xbf16> to vector<8x16xbf16>
    %c0_130 = arith.constant 0 : index
    %c217 = arith.constant 217 : index
    %137 = vector.load %arg14[%c0_130, %c217] : memref<8x332xbf16, #tpu.memory_space<vmem>>, vector<8x16xbf16>
    tpu.vector_store %arg14[%c0_130, %c217], %136 {strides = array<i32>} : memref<8x332xbf16, #tpu.memory_space<vmem>>, vector<8x16xbf16>,
    %138 = vector.extract_strided_slice %111 {offsets = [96, 0], sizes = [8, 16], strides = [1, 1]} : vector<128x16xbf16> to vector<8x16xbf16>
    %c0_131 = arith.constant 0 : index
    %c235 = arith.constant 235 : index
    %139 = vector.load %arg14[%c0_131, %c235] : memref<8x332xbf16, #tpu.memory_space<vmem>>, vector<8x16xbf16>
    tpu.vector_store %arg14[%c0_131, %c235], %138 {strides = array<i32>} : memref<8x332xbf16, #tpu.memory_space<vmem>>, vector<8x16xbf16>,
    %140 = vector.extract_strided_slice %111 {offsets = [104, 0], sizes = [8, 16], strides = [1, 1]} : vector<128x16xbf16> to vector<8x16xbf16>
    %c0_132 = arith.constant 0 : index
    %c253 = arith.constant 253 : index
    %141 = vector.load %arg14[%c0_132, %c253] : memref<8x332xbf16, #tpu.memory_space<vmem>>, vector<8x16xbf16>
    tpu.vector_store %arg14[%c0_132, %c253], %140 {strides = array<i32>} : memref<8x332xbf16, #tpu.memory_space<vmem>>, vector<8x16xbf16>,
    %142 = vector.extract_strided_slice %111 {offsets = [112, 0], sizes = [8, 16], strides = [1, 1]} : vector<128x16xbf16> to vector<8x16xbf16>
    %c0_133 = arith.constant 0 : index
    %c271 = arith.constant 271 : index
    %143 = vector.load %arg14[%c0_133, %c271] : memref<8x332xbf16, #tpu.memory_space<vmem>>, vector<8x16xbf16>
    tpu.vector_store %arg14[%c0_133, %c271], %142 {strides = array<i32>} : memref<8x332xbf16, #tpu.memory_space<vmem>>, vector<8x16xbf16>,
    %144 = vector.extract_strided_slice %111 {offsets = [120, 0], sizes = [8, 16], strides = [1, 1]} : vector<128x16xbf16> to vector<8x16xbf16>
    %c0_134 = arith.constant 0 : index
    %c289 = arith.constant 289 : index
    %145 = vector.load %arg14[%c0_134, %c289] : memref<8x332xbf16, #tpu.memory_space<vmem>>, vector<8x16xbf16>
    tpu.vector_store %arg14[%c0_134, %c289], %144 {strides = array<i32>} : memref<8x332xbf16, #tpu.memory_space<vmem>>, vector<8x16xbf16>,
    %c0_135 = arith.constant 0 : index
    %c0_136 = arith.constant 0 : index
    %146 = vector.load %arg14[%c0_135, %c0_136] : memref<8x332xbf16, #tpu.memory_space<vmem>>, vector<8x270xbf16>
    %c0_137 = arith.constant 0 : index
    %c0_138 = arith.constant 0 : index
    %147 = vector.load %arg15[%c0_137, %c0_138] : memref<128x270xbf16, #tpu.memory_space<vmem>>, vector<8x270xbf16>
    tpu.vector_store %arg15[%c0_137, %c0_138], %146 {strides = array<i32>} : memref<128x270xbf16, #tpu.memory_space<vmem>>, vector<8x270xbf16>,
    %c0_139 = arith.constant 0 : index
    %c1_140 = arith.constant 1 : index
    %148 = vector.load %arg14[%c0_139, %c1_140] : memref<8x332xbf16, #tpu.memory_space<vmem>>, vector<8x270xbf16>
    %c8_141 = arith.constant 8 : index
    %c0_142 = arith.constant 0 : index
    %149 = vector.load %arg15[%c8_141, %c0_142] : memref<128x270xbf16, #tpu.memory_space<vmem>>, vector<8x270xbf16>
    tpu.vector_store %arg15[%c8_141, %c0_142], %148 {strides = array<i32>} : memref<128x270xbf16, #tpu.memory_space<vmem>>, vector<8x270xbf16>,
    %c0_143 = arith.constant 0 : index
    %c2_144 = arith.constant 2 : index
    %150 = vector.load %arg14[%c0_143, %c2_144] : memref<8x332xbf16, #tpu.memory_space<vmem>>, vector<8x270xbf16>
    %c16_145 = arith.constant 16 : index
    %c0_146 = arith.constant 0 : index
    %151 = vector.load %arg15[%c16_145, %c0_146] : memref<128x270xbf16, #tpu.memory_space<vmem>>, vector<8x270xbf16>
    tpu.vector_store %arg15[%c16_145, %c0_146], %150 {strides = array<i32>} : memref<128x270xbf16, #tpu.memory_space<vmem>>, vector<8x270xbf16>,
    %c0_147 = arith.constant 0 : index
    %c3_148 = arith.constant 3 : index
    %152 = vector.load %arg14[%c0_147, %c3_148] : memref<8x332xbf16, #tpu.memory_space<vmem>>, vector<8x270xbf16>
    %c24_149 = arith.constant 24 : index
    %c0_150 = arith.constant 0 : index
    %153 = vector.load %arg15[%c24_149, %c0_150] : memref<128x270xbf16, #tpu.memory_space<vmem>>, vector<8x270xbf16>
    tpu.vector_store %arg15[%c24_149, %c0_150], %152 {strides = array<i32>} : memref<128x270xbf16, #tpu.memory_space<vmem>>, vector<8x270xbf16>,
    %c0_151 = arith.constant 0 : index
    %c18 = arith.constant 18 : index
    %154 = vector.load %arg14[%c0_151, %c18] : memref<8x332xbf16, #tpu.memory_space<vmem>>, vector<8x270xbf16>
    %c32_152 = arith.constant 32 : index
    %c0_153 = arith.constant 0 : index
    %155 = vector.load %arg15[%c32_152, %c0_153] : memref<128x270xbf16, #tpu.memory_space<vmem>>, vector<8x270xbf16>
    tpu.vector_store %arg15[%c32_152, %c0_153], %154 {strides = array<i32>} : memref<128x270xbf16, #tpu.memory_space<vmem>>, vector<8x270xbf16>,
    %c0_154 = arith.constant 0 : index
    %c19_155 = arith.constant 19 : index
    %156 = vector.load %arg14[%c0_154, %c19_155] : memref<8x332xbf16, #tpu.memory_space<vmem>>, vector<8x270xbf16>
    %c40_156 = arith.constant 40 : index
    %c0_157 = arith.constant 0 : index
    %157 = vector.load %arg15[%c40_156, %c0_157] : memref<128x270xbf16, #tpu.memory_space<vmem>>, vector<8x270xbf16>
    tpu.vector_store %arg15[%c40_156, %c0_157], %156 {strides = array<i32>} : memref<128x270xbf16, #tpu.memory_space<vmem>>, vector<8x270xbf16>,
    %c0_158 = arith.constant 0 : index
    %c20 = arith.constant 20 : index
    %158 = vector.load %arg14[%c0_158, %c20] : memref<8x332xbf16, #tpu.memory_space<vmem>>, vector<8x270xbf16>
    %c48_159 = arith.constant 48 : index
    %c0_160 = arith.constant 0 : index
    %159 = vector.load %arg15[%c48_159, %c0_160] : memref<128x270xbf16, #tpu.memory_space<vmem>>, vector<8x270xbf16>
    tpu.vector_store %arg15[%c48_159, %c0_160], %158 {strides = array<i32>} : memref<128x270xbf16, #tpu.memory_space<vmem>>, vector<8x270xbf16>,
    %c0_161 = arith.constant 0 : index
    %c21 = arith.constant 21 : index
    %160 = vector.load %arg14[%c0_161, %c21] : memref<8x332xbf16, #tpu.memory_space<vmem>>, vector<8x270xbf16>
    %c56_162 = arith.constant 56 : index
    %c0_163 = arith.constant 0 : index
    %161 = vector.load %arg15[%c56_162, %c0_163] : memref<128x270xbf16, #tpu.memory_space<vmem>>, vector<8x270xbf16>
    tpu.vector_store %arg15[%c56_162, %c0_163], %160 {strides = array<i32>} : memref<128x270xbf16, #tpu.memory_space<vmem>>, vector<8x270xbf16>,
    %c0_164 = arith.constant 0 : index
    %c36_165 = arith.constant 36 : index
    %162 = vector.load %arg14[%c0_164, %c36_165] : memref<8x332xbf16, #tpu.memory_space<vmem>>, vector<8x270xbf16>
    %c64_166 = arith.constant 64 : index
    %c0_167 = arith.constant 0 : index
    %163 = vector.load %arg15[%c64_166, %c0_167] : memref<128x270xbf16, #tpu.memory_space<vmem>>, vector<8x270xbf16>
    tpu.vector_store %arg15[%c64_166, %c0_167], %162 {strides = array<i32>} : memref<128x270xbf16, #tpu.memory_space<vmem>>, vector<8x270xbf16>,
    %c0_168 = arith.constant 0 : index
    %c37_169 = arith.constant 37 : index
    %164 = vector.load %arg14[%c0_168, %c37_169] : memref<8x332xbf16, #tpu.memory_space<vmem>>, vector<8x270xbf16>
    %c72_170 = arith.constant 72 : index
    %c0_171 = arith.constant 0 : index
    %165 = vector.load %arg15[%c72_170, %c0_171] : memref<128x270xbf16, #tpu.memory_space<vmem>>, vector<8x270xbf16>
    tpu.vector_store %arg15[%c72_170, %c0_171], %164 {strides = array<i32>} : memref<128x270xbf16, #tpu.memory_space<vmem>>, vector<8x270xbf16>,
    %c0_172 = arith.constant 0 : index
    %c38 = arith.constant 38 : index
    %166 = vector.load %arg14[%c0_172, %c38] : memref<8x332xbf16, #tpu.memory_space<vmem>>, vector<8x270xbf16>
    %c80_173 = arith.constant 80 : index
    %c0_174 = arith.constant 0 : index
    %167 = vector.load %arg15[%c80_173, %c0_174] : memref<128x270xbf16, #tpu.memory_space<vmem>>, vector<8x270xbf16>
    tpu.vector_store %arg15[%c80_173, %c0_174], %166 {strides = array<i32>} : memref<128x270xbf16, #tpu.memory_space<vmem>>, vector<8x270xbf16>,
    %c0_175 = arith.constant 0 : index
    %c39 = arith.constant 39 : index
    %168 = vector.load %arg14[%c0_175, %c39] : memref<8x332xbf16, #tpu.memory_space<vmem>>, vector<8x270xbf16>
    %c88_176 = arith.constant 88 : index
    %c0_177 = arith.constant 0 : index
    %169 = vector.load %arg15[%c88_176, %c0_177] : memref<128x270xbf16, #tpu.memory_space<vmem>>, vector<8x270xbf16>
    tpu.vector_store %arg15[%c88_176, %c0_177], %168 {strides = array<i32>} : memref<128x270xbf16, #tpu.memory_space<vmem>>, vector<8x270xbf16>,
    %c0_178 = arith.constant 0 : index
    %c54 = arith.constant 54 : index
    %170 = vector.load %arg14[%c0_178, %c54] : memref<8x332xbf16, #tpu.memory_space<vmem>>, vector<8x270xbf16>
    %c96_179 = arith.constant 96 : index
    %c0_180 = arith.constant 0 : index
    %171 = vector.load %arg15[%c96_179, %c0_180] : memref<128x270xbf16, #tpu.memory_space<vmem>>, vector<8x270xbf16>
    tpu.vector_store %arg15[%c96_179, %c0_180], %170 {strides = array<i32>} : memref<128x270xbf16, #tpu.memory_space<vmem>>, vector<8x270xbf16>,
    %c0_181 = arith.constant 0 : index
    %c55_182 = arith.constant 55 : index
    %172 = vector.load %arg14[%c0_181, %c55_182] : memref<8x332xbf16, #tpu.memory_space<vmem>>, vector<8x270xbf16>
    %c104_183 = arith.constant 104 : index
    %c0_184 = arith.constant 0 : index
    %173 = vector.load %arg15[%c104_183, %c0_184] : memref<128x270xbf16, #tpu.memory_space<vmem>>, vector<8x270xbf16>
    tpu.vector_store %arg15[%c104_183, %c0_184], %172 {strides = array<i32>} : memref<128x270xbf16, #tpu.memory_space<vmem>>, vector<8x270xbf16>,
    %c0_185 = arith.constant 0 : index
    %c56_186 = arith.constant 56 : index
    %174 = vector.load %arg14[%c0_185, %c56_186] : memref<8x332xbf16, #tpu.memory_space<vmem>>, vector<8x270xbf16>
    %c112_187 = arith.constant 112 : index
    %c0_188 = arith.constant 0 : index
    %175 = vector.load %arg15[%c112_187, %c0_188] : memref<128x270xbf16, #tpu.memory_space<vmem>>, vector<8x270xbf16>
    tpu.vector_store %arg15[%c112_187, %c0_188], %174 {strides = array<i32>} : memref<128x270xbf16, #tpu.memory_space<vmem>>, vector<8x270xbf16>,
    %c0_189 = arith.constant 0 : index
    %c57 = arith.constant 57 : index
    %176 = vector.load %arg14[%c0_189, %c57] : memref<8x332xbf16, #tpu.memory_space<vmem>>, vector<8x270xbf16>
    %c120_190 = arith.constant 120 : index
    %c0_191 = arith.constant 0 : index
    %177 = vector.load %arg15[%c120_190, %c0_191] : memref<128x270xbf16, #tpu.memory_space<vmem>>, vector<8x270xbf16>
    tpu.vector_store %arg15[%c120_190, %c0_191], %176 {strides = array<i32>} : memref<128x270xbf16, #tpu.memory_space<vmem>>, vector<8x270xbf16>,
    %c0_192 = arith.constant 0 : index
    %c0_193 = arith.constant 0 : index
    %178 = vector.load %arg5[%c0_192, %c0_193] : memref<16x128xbf16, #tpu.memory_space<vmem>>, vector<16x128xbf16>
    %c0_194 = arith.constant 0 : index
    %c0_195 = arith.constant 0 : index
    %179 = vector.load %arg15[%c0_194, %c0_195] : memref<128x270xbf16, #tpu.memory_space<vmem>>, vector<128x270xbf16>
    %cst_196 = arith.constant dense<0.000000e+00> : vector<16x270xf32>
    %180 = tpu.matmul %178, %179, %cst_196 {dimension_numbers = #tpu.dot_dimension_numbers<[1], [0], [0], [1], [0, 0, 1, 1], [], []>} : vector<16x128xbf16>, vector<128x270xbf16>, vector<16x270xf32> -> vector<16x270xf32>
    %cst_197 = arith.constant 0.000000e+00 : f32
    %181 = vector.broadcast %cst_197 : f32 to vector<16x270xf32>
    %182 = arith.cmpf oge, %180, %181 : vector<16x270xf32>
    %cst_198 = arith.constant 0.00999999977 : f32
    %183 = vector.broadcast %cst_198 : f32 to vector<16x270xf32>
    %184 = arith.mulf %183, %180 : vector<16x270xf32>
    %185 = arith.select %182, %180, %184 : vector<16x270xi1>, vector<16x270xf32>
    %c0_199 = arith.constant 0 : index
    %c0_200 = arith.constant 0 : index
    %186 = vector.load %arg16[%c0_199, %c0_200] : memref<16x270xf32, #tpu.memory_space<vmem>>, vector<16x270xf32>
    tpu.vector_store %arg16[%c0_199, %c0_200], %185 {strides = array<i32>} : memref<16x270xf32, #tpu.memory_space<vmem>>, vector<16x270xf32>,
    %c0_201 = arith.constant 0 : index
    %c0_202 = arith.constant 0 : index
    %187 = vector.load %arg16[%c0_201, %c0_202] : memref<16x270xf32, #tpu.memory_space<vmem>>, vector<16x18xf32>
    %188 = arith.truncf %187 : vector<16x18xf32> to vector<16x18xbf16>
    %c0_203 = arith.constant 0 : index
    %c0_204 = arith.constant 0 : index
    %189 = vector.load %arg17[%c0_203, %c0_204] : memref<128x18xbf16, #tpu.memory_space<vmem>>, vector<16x18xbf16>
    tpu.vector_store %arg17[%c0_203, %c0_204], %188 {strides = array<i32>} : memref<128x18xbf16, #tpu.memory_space<vmem>>, vector<16x18xbf16>,
    %c0_205 = arith.constant 0 : index
    %c36_206 = arith.constant 36 : index
    %190 = vector.load %arg16[%c0_205, %c36_206] : memref<16x270xf32, #tpu.memory_space<vmem>>, vector<16x18xf32>
    %191 = arith.truncf %190 : vector<16x18xf32> to vector<16x18xbf16>
    %c16_207 = arith.constant 16 : index
    %c0_208 = arith.constant 0 : index
    %192 = vector.load %arg17[%c16_207, %c0_208] : memref<128x18xbf16, #tpu.memory_space<vmem>>, vector<16x18xbf16>
    tpu.vector_store %arg17[%c16_207, %c0_208], %191 {strides = array<i32>} : memref<128x18xbf16, #tpu.memory_space<vmem>>, vector<16x18xbf16>,
    %c0_209 = arith.constant 0 : index
    %c72_210 = arith.constant 72 : index
    %193 = vector.load %arg16[%c0_209, %c72_210] : memref<16x270xf32, #tpu.memory_space<vmem>>, vector<16x18xf32>
    %194 = arith.truncf %193 : vector<16x18xf32> to vector<16x18xbf16>
    %c32_211 = arith.constant 32 : index
    %c0_212 = arith.constant 0 : index
    %195 = vector.load %arg17[%c32_211, %c0_212] : memref<128x18xbf16, #tpu.memory_space<vmem>>, vector<16x18xbf16>
    tpu.vector_store %arg17[%c32_211, %c0_212], %194 {strides = array<i32>} : memref<128x18xbf16, #tpu.memory_space<vmem>>, vector<16x18xbf16>,
    %c0_213 = arith.constant 0 : index
    %c108 = arith.constant 108 : index
    %196 = vector.load %arg16[%c0_213, %c108] : memref<16x270xf32, #tpu.memory_space<vmem>>, vector<16x18xf32>
    %197 = arith.truncf %196 : vector<16x18xf32> to vector<16x18xbf16>
    %c48_214 = arith.constant 48 : index
    %c0_215 = arith.constant 0 : index
    %198 = vector.load %arg17[%c48_214, %c0_215] : memref<128x18xbf16, #tpu.memory_space<vmem>>, vector<16x18xbf16>
    tpu.vector_store %arg17[%c48_214, %c0_215], %197 {strides = array<i32>} : memref<128x18xbf16, #tpu.memory_space<vmem>>, vector<16x18xbf16>,
    %c0_216 = arith.constant 0 : index
    %c144 = arith.constant 144 : index
    %199 = vector.load %arg16[%c0_216, %c144] : memref<16x270xf32, #tpu.memory_space<vmem>>, vector<16x18xf32>
    %200 = arith.truncf %199 : vector<16x18xf32> to vector<16x18xbf16>
    %c64_217 = arith.constant 64 : index
    %c0_218 = arith.constant 0 : index
    %201 = vector.load %arg17[%c64_217, %c0_218] : memref<128x18xbf16, #tpu.memory_space<vmem>>, vector<16x18xbf16>
    tpu.vector_store %arg17[%c64_217, %c0_218], %200 {strides = array<i32>} : memref<128x18xbf16, #tpu.memory_space<vmem>>, vector<16x18xbf16>,
    %c0_219 = arith.constant 0 : index
    %c180 = arith.constant 180 : index
    %202 = vector.load %arg16[%c0_219, %c180] : memref<16x270xf32, #tpu.memory_space<vmem>>, vector<16x18xf32>
    %203 = arith.truncf %202 : vector<16x18xf32> to vector<16x18xbf16>
    %c80_220 = arith.constant 80 : index
    %c0_221 = arith.constant 0 : index
    %204 = vector.load %arg17[%c80_220, %c0_221] : memref<128x18xbf16, #tpu.memory_space<vmem>>, vector<16x18xbf16>
    tpu.vector_store %arg17[%c80_220, %c0_221], %203 {strides = array<i32>} : memref<128x18xbf16, #tpu.memory_space<vmem>>, vector<16x18xbf16>,
    %c0_222 = arith.constant 0 : index
    %c216 = arith.constant 216 : index
    %205 = vector.load %arg16[%c0_222, %c216] : memref<16x270xf32, #tpu.memory_space<vmem>>, vector<16x18xf32>
    %206 = arith.truncf %205 : vector<16x18xf32> to vector<16x18xbf16>
    %c96_223 = arith.constant 96 : index
    %c0_224 = arith.constant 0 : index
    %207 = vector.load %arg17[%c96_223, %c0_224] : memref<128x18xbf16, #tpu.memory_space<vmem>>, vector<16x18xbf16>
    tpu.vector_store %arg17[%c96_223, %c0_224], %206 {strides = array<i32>} : memref<128x18xbf16, #tpu.memory_space<vmem>>, vector<16x18xbf16>,
    %c0_225 = arith.constant 0 : index
    %c252 = arith.constant 252 : index
    %208 = vector.load %arg16[%c0_225, %c252] : memref<16x270xf32, #tpu.memory_space<vmem>>, vector<16x18xf32>
    %209 = arith.truncf %208 : vector<16x18xf32> to vector<16x18xbf16>
    %c112_226 = arith.constant 112 : index
    %c0_227 = arith.constant 0 : index
    %210 = vector.load %arg17[%c112_226, %c0_227] : memref<128x18xbf16, #tpu.memory_space<vmem>>, vector<16x18xbf16>
    tpu.vector_store %arg17[%c112_226, %c0_227], %209 {strides = array<i32>} : memref<128x18xbf16, #tpu.memory_space<vmem>>, vector<16x18xbf16>,
    %c0_228 = arith.constant 0 : index
    %c0_229 = arith.constant 0 : index
    %211 = vector.load %arg17[%c0_228, %c0_229] : memref<128x18xbf16, #tpu.memory_space<vmem>>, vector<128x18xbf16>
    %c0_230 = arith.constant 0 : index
    %c0_231 = arith.constant 0 : index
    %212 = vector.load %arg6[%c0_230, %c0_231] : memref<18x8xbf16, #tpu.memory_space<vmem>>, vector<18x8xbf16>
    %cst_232 = arith.constant dense<0.000000e+00> : vector<128x8xf32>
    %213 = tpu.matmul %211, %212, %cst_232 {dimension_numbers = #tpu.dot_dimension_numbers<[1], [0], [0], [1], [0, 0, 1, 1], [], []>} : vector<128x18xbf16>, vector<18x8xbf16>, vector<128x8xf32> -> vector<128x8xf32>
    %214 = arith.truncf %213 : vector<128x8xf32> to vector<128x8xbf16>
    %cst_233 = arith.constant 0.000000e+00 : bf16
    %215 = vector.broadcast %cst_233 : bf16 to vector<16x108xbf16>
    %c0_234 = arith.constant 0 : index
    %c0_235 = arith.constant 0 : index
    %216 = vector.load %arg18[%c0_234, %c0_235] : memref<16x108xbf16, #tpu.memory_space<vmem>>, vector<16x108xbf16>
    tpu.vector_store %arg18[%c0_234, %c0_235], %215 {strides = array<i32>} : memref<16x108xbf16, #tpu.memory_space<vmem>>, vector<16x108xbf16>,
    %217 = vector.extract_strided_slice %214 {offsets = [0, 0], sizes = [16, 8], strides = [1, 1]} : vector<128x8xbf16> to vector<16x8xbf16>
    %c0_236 = arith.constant 0 : index
    %c11 = arith.constant 11 : index
    %218 = vector.load %arg18[%c0_236, %c11] : memref<16x108xbf16, #tpu.memory_space<vmem>>, vector<16x8xbf16>
    tpu.vector_store %arg18[%c0_236, %c11], %217 {strides = array<i32>} : memref<16x108xbf16, #tpu.memory_space<vmem>>, vector<16x8xbf16>,
    %219 = vector.extract_strided_slice %214 {offsets = [16, 0], sizes = [16, 8], strides = [1, 1]} : vector<128x8xbf16> to vector<16x8xbf16>
    %c0_237 = arith.constant 0 : index
    %c21_238 = arith.constant 21 : index
    %220 = vector.load %arg18[%c0_237, %c21_238] : memref<16x108xbf16, #tpu.memory_space<vmem>>, vector<16x8xbf16>
    tpu.vector_store %arg18[%c0_237, %c21_238], %219 {strides = array<i32>} : memref<16x108xbf16, #tpu.memory_space<vmem>>, vector<16x8xbf16>,
    %221 = vector.extract_strided_slice %214 {offsets = [32, 0], sizes = [16, 8], strides = [1, 1]} : vector<128x8xbf16> to vector<16x8xbf16>
    %c0_239 = arith.constant 0 : index
    %c31 = arith.constant 31 : index
    %222 = vector.load %arg18[%c0_239, %c31] : memref<16x108xbf16, #tpu.memory_space<vmem>>, vector<16x8xbf16>
    tpu.vector_store %arg18[%c0_239, %c31], %221 {strides = array<i32>} : memref<16x108xbf16, #tpu.memory_space<vmem>>, vector<16x8xbf16>,
    %223 = vector.extract_strided_slice %214 {offsets = [48, 0], sizes = [16, 8], strides = [1, 1]} : vector<128x8xbf16> to vector<16x8xbf16>
    %c0_240 = arith.constant 0 : index
    %c41 = arith.constant 41 : index
    %224 = vector.load %arg18[%c0_240, %c41] : memref<16x108xbf16, #tpu.memory_space<vmem>>, vector<16x8xbf16>
    tpu.vector_store %arg18[%c0_240, %c41], %223 {strides = array<i32>} : memref<16x108xbf16, #tpu.memory_space<vmem>>, vector<16x8xbf16>,
    %225 = vector.extract_strided_slice %214 {offsets = [64, 0], sizes = [16, 8], strides = [1, 1]} : vector<128x8xbf16> to vector<16x8xbf16>
    %c0_241 = arith.constant 0 : index
    %c51 = arith.constant 51 : index
    %226 = vector.load %arg18[%c0_241, %c51] : memref<16x108xbf16, #tpu.memory_space<vmem>>, vector<16x8xbf16>
    tpu.vector_store %arg18[%c0_241, %c51], %225 {strides = array<i32>} : memref<16x108xbf16, #tpu.memory_space<vmem>>, vector<16x8xbf16>,
    %227 = vector.extract_strided_slice %214 {offsets = [80, 0], sizes = [16, 8], strides = [1, 1]} : vector<128x8xbf16> to vector<16x8xbf16>
    %c0_242 = arith.constant 0 : index
    %c61 = arith.constant 61 : index
    %228 = vector.load %arg18[%c0_242, %c61] : memref<16x108xbf16, #tpu.memory_space<vmem>>, vector<16x8xbf16>
    tpu.vector_store %arg18[%c0_242, %c61], %227 {strides = array<i32>} : memref<16x108xbf16, #tpu.memory_space<vmem>>, vector<16x8xbf16>,
    %229 = vector.extract_strided_slice %214 {offsets = [96, 0], sizes = [16, 8], strides = [1, 1]} : vector<128x8xbf16> to vector<16x8xbf16>
    %c0_243 = arith.constant 0 : index
    %c71_244 = arith.constant 71 : index
    %230 = vector.load %arg18[%c0_243, %c71_244] : memref<16x108xbf16, #tpu.memory_space<vmem>>, vector<16x8xbf16>
    tpu.vector_store %arg18[%c0_243, %c71_244], %229 {strides = array<i32>} : memref<16x108xbf16, #tpu.memory_space<vmem>>, vector<16x8xbf16>,
    %231 = vector.extract_strided_slice %214 {offsets = [112, 0], sizes = [16, 8], strides = [1, 1]} : vector<128x8xbf16> to vector<16x8xbf16>
    %c0_245 = arith.constant 0 : index
    %c81 = arith.constant 81 : index
    %232 = vector.load %arg18[%c0_245, %c81] : memref<16x108xbf16, #tpu.memory_space<vmem>>, vector<16x8xbf16>
    tpu.vector_store %arg18[%c0_245, %c81], %231 {strides = array<i32>} : memref<16x108xbf16, #tpu.memory_space<vmem>>, vector<16x8xbf16>,
    %c0_246 = arith.constant 0 : index
    %c0_247 = arith.constant 0 : index
    %233 = vector.load %arg18[%c0_246, %c0_247] : memref<16x108xbf16, #tpu.memory_space<vmem>>, vector<16x70xbf16>
    %c0_248 = arith.constant 0 : index
    %c0_249 = arith.constant 0 : index
    %234 = vector.load %arg19[%c0_248, %c0_249] : memref<256x70xbf16, #tpu.memory_space<vmem>>, vector<16x70xbf16>
    tpu.vector_store %arg19[%c0_248, %c0_249], %233 {strides = array<i32>} : memref<256x70xbf16, #tpu.memory_space<vmem>>, vector<16x70xbf16>,
    %c0_250 = arith.constant 0 : index
    %c1_251 = arith.constant 1 : index
    %235 = vector.load %arg18[%c0_250, %c1_251] : memref<16x108xbf16, #tpu.memory_space<vmem>>, vector<16x70xbf16>
    %c16_252 = arith.constant 16 : index
    %c0_253 = arith.constant 0 : index
    %236 = vector.load %arg19[%c16_252, %c0_253] : memref<256x70xbf16, #tpu.memory_space<vmem>>, vector<16x70xbf16>
    tpu.vector_store %arg19[%c16_252, %c0_253], %235 {strides = array<i32>} : memref<256x70xbf16, #tpu.memory_space<vmem>>, vector<16x70xbf16>,
    %c0_254 = arith.constant 0 : index
    %c2_255 = arith.constant 2 : index
    %237 = vector.load %arg18[%c0_254, %c2_255] : memref<16x108xbf16, #tpu.memory_space<vmem>>, vector<16x70xbf16>
    %c32_256 = arith.constant 32 : index
    %c0_257 = arith.constant 0 : index
    %238 = vector.load %arg19[%c32_256, %c0_257] : memref<256x70xbf16, #tpu.memory_space<vmem>>, vector<16x70xbf16>
    tpu.vector_store %arg19[%c32_256, %c0_257], %237 {strides = array<i32>} : memref<256x70xbf16, #tpu.memory_space<vmem>>, vector<16x70xbf16>,
    %c0_258 = arith.constant 0 : index
    %c3_259 = arith.constant 3 : index
    %239 = vector.load %arg18[%c0_258, %c3_259] : memref<16x108xbf16, #tpu.memory_space<vmem>>, vector<16x70xbf16>
    %c48_260 = arith.constant 48 : index
    %c0_261 = arith.constant 0 : index
    %240 = vector.load %arg19[%c48_260, %c0_261] : memref<256x70xbf16, #tpu.memory_space<vmem>>, vector<16x70xbf16>
    tpu.vector_store %arg19[%c48_260, %c0_261], %239 {strides = array<i32>} : memref<256x70xbf16, #tpu.memory_space<vmem>>, vector<16x70xbf16>,
    %c0_262 = arith.constant 0 : index
    %c10 = arith.constant 10 : index
    %241 = vector.load %arg18[%c0_262, %c10] : memref<16x108xbf16, #tpu.memory_space<vmem>>, vector<16x70xbf16>
    %c64_263 = arith.constant 64 : index
    %c0_264 = arith.constant 0 : index
    %242 = vector.load %arg19[%c64_263, %c0_264] : memref<256x70xbf16, #tpu.memory_space<vmem>>, vector<16x70xbf16>
    tpu.vector_store %arg19[%c64_263, %c0_264], %241 {strides = array<i32>} : memref<256x70xbf16, #tpu.memory_space<vmem>>, vector<16x70xbf16>,
    %c0_265 = arith.constant 0 : index
    %c11_266 = arith.constant 11 : index
    %243 = vector.load %arg18[%c0_265, %c11_266] : memref<16x108xbf16, #tpu.memory_space<vmem>>, vector<16x70xbf16>
    %c80_267 = arith.constant 80 : index
    %c0_268 = arith.constant 0 : index
    %244 = vector.load %arg19[%c80_267, %c0_268] : memref<256x70xbf16, #tpu.memory_space<vmem>>, vector<16x70xbf16>
    tpu.vector_store %arg19[%c80_267, %c0_268], %243 {strides = array<i32>} : memref<256x70xbf16, #tpu.memory_space<vmem>>, vector<16x70xbf16>,
    %c0_269 = arith.constant 0 : index
    %c12 = arith.constant 12 : index
    %245 = vector.load %arg18[%c0_269, %c12] : memref<16x108xbf16, #tpu.memory_space<vmem>>, vector<16x70xbf16>
    %c96_270 = arith.constant 96 : index
    %c0_271 = arith.constant 0 : index
    %246 = vector.load %arg19[%c96_270, %c0_271] : memref<256x70xbf16, #tpu.memory_space<vmem>>, vector<16x70xbf16>
    tpu.vector_store %arg19[%c96_270, %c0_271], %245 {strides = array<i32>} : memref<256x70xbf16, #tpu.memory_space<vmem>>, vector<16x70xbf16>,
    %c0_272 = arith.constant 0 : index
    %c13 = arith.constant 13 : index
    %247 = vector.load %arg18[%c0_272, %c13] : memref<16x108xbf16, #tpu.memory_space<vmem>>, vector<16x70xbf16>
    %c112_273 = arith.constant 112 : index
    %c0_274 = arith.constant 0 : index
    %248 = vector.load %arg19[%c112_273, %c0_274] : memref<256x70xbf16, #tpu.memory_space<vmem>>, vector<16x70xbf16>
    tpu.vector_store %arg19[%c112_273, %c0_274], %247 {strides = array<i32>} : memref<256x70xbf16, #tpu.memory_space<vmem>>, vector<16x70xbf16>,
    %c0_275 = arith.constant 0 : index
    %c20_276 = arith.constant 20 : index
    %249 = vector.load %arg18[%c0_275, %c20_276] : memref<16x108xbf16, #tpu.memory_space<vmem>>, vector<16x70xbf16>
    %c128 = arith.constant 128 : index
    %c0_277 = arith.constant 0 : index
    %250 = vector.load %arg19[%c128, %c0_277] : memref<256x70xbf16, #tpu.memory_space<vmem>>, vector<16x70xbf16>
    tpu.vector_store %arg19[%c128, %c0_277], %249 {strides = array<i32>} : memref<256x70xbf16, #tpu.memory_space<vmem>>, vector<16x70xbf16>,
    %c0_278 = arith.constant 0 : index
    %c21_279 = arith.constant 21 : index
    %251 = vector.load %arg18[%c0_278, %c21_279] : memref<16x108xbf16, #tpu.memory_space<vmem>>, vector<16x70xbf16>
    %c144_280 = arith.constant 144 : index
    %c0_281 = arith.constant 0 : index
    %252 = vector.load %arg19[%c144_280, %c0_281] : memref<256x70xbf16, #tpu.memory_space<vmem>>, vector<16x70xbf16>
    tpu.vector_store %arg19[%c144_280, %c0_281], %251 {strides = array<i32>} : memref<256x70xbf16, #tpu.memory_space<vmem>>, vector<16x70xbf16>,
    %c0_282 = arith.constant 0 : index
    %c22 = arith.constant 22 : index
    %253 = vector.load %arg18[%c0_282, %c22] : memref<16x108xbf16, #tpu.memory_space<vmem>>, vector<16x70xbf16>
    %c160 = arith.constant 160 : index
    %c0_283 = arith.constant 0 : index
    %254 = vector.load %arg19[%c160, %c0_283] : memref<256x70xbf16, #tpu.memory_space<vmem>>, vector<16x70xbf16>
    tpu.vector_store %arg19[%c160, %c0_283], %253 {strides = array<i32>} : memref<256x70xbf16, #tpu.memory_space<vmem>>, vector<16x70xbf16>,
    %c0_284 = arith.constant 0 : index
    %c23 = arith.constant 23 : index
    %255 = vector.load %arg18[%c0_284, %c23] : memref<16x108xbf16, #tpu.memory_space<vmem>>, vector<16x70xbf16>
    %c176 = arith.constant 176 : index
    %c0_285 = arith.constant 0 : index
    %256 = vector.load %arg19[%c176, %c0_285] : memref<256x70xbf16, #tpu.memory_space<vmem>>, vector<16x70xbf16>
    tpu.vector_store %arg19[%c176, %c0_285], %255 {strides = array<i32>} : memref<256x70xbf16, #tpu.memory_space<vmem>>, vector<16x70xbf16>,
    %c0_286 = arith.constant 0 : index
    %c30 = arith.constant 30 : index
    %257 = vector.load %arg18[%c0_286, %c30] : memref<16x108xbf16, #tpu.memory_space<vmem>>, vector<16x70xbf16>
    %c192 = arith.constant 192 : index
    %c0_287 = arith.constant 0 : index
    %258 = vector.load %arg19[%c192, %c0_287] : memref<256x70xbf16, #tpu.memory_space<vmem>>, vector<16x70xbf16>
    tpu.vector_store %arg19[%c192, %c0_287], %257 {strides = array<i32>} : memref<256x70xbf16, #tpu.memory_space<vmem>>, vector<16x70xbf16>,
    %c0_288 = arith.constant 0 : index
    %c31_289 = arith.constant 31 : index
    %259 = vector.load %arg18[%c0_288, %c31_289] : memref<16x108xbf16, #tpu.memory_space<vmem>>, vector<16x70xbf16>
    %c208 = arith.constant 208 : index
    %c0_290 = arith.constant 0 : index
    %260 = vector.load %arg19[%c208, %c0_290] : memref<256x70xbf16, #tpu.memory_space<vmem>>, vector<16x70xbf16>
    tpu.vector_store %arg19[%c208, %c0_290], %259 {strides = array<i32>} : memref<256x70xbf16, #tpu.memory_space<vmem>>, vector<16x70xbf16>,
    %c0_291 = arith.constant 0 : index
    %c32_292 = arith.constant 32 : index
    %261 = vector.load %arg18[%c0_291, %c32_292] : memref<16x108xbf16, #tpu.memory_space<vmem>>, vector<16x70xbf16>
    %c224 = arith.constant 224 : index
    %c0_293 = arith.constant 0 : index
    %262 = vector.load %arg19[%c224, %c0_293] : memref<256x70xbf16, #tpu.memory_space<vmem>>, vector<16x70xbf16>
    tpu.vector_store %arg19[%c224, %c0_293], %261 {strides = array<i32>} : memref<256x70xbf16, #tpu.memory_space<vmem>>, vector<16x70xbf16>,
    %c0_294 = arith.constant 0 : index
    %c33 = arith.constant 33 : index
    %263 = vector.load %arg18[%c0_294, %c33] : memref<16x108xbf16, #tpu.memory_space<vmem>>, vector<16x70xbf16>
    %c240 = arith.constant 240 : index
    %c0_295 = arith.constant 0 : index
    %264 = vector.load %arg19[%c240, %c0_295] : memref<256x70xbf16, #tpu.memory_space<vmem>>, vector<16x70xbf16>
    tpu.vector_store %arg19[%c240, %c0_295], %263 {strides = array<i32>} : memref<256x70xbf16, #tpu.memory_space<vmem>>, vector<16x70xbf16>,
    %c0_296 = arith.constant 0 : index
    %c0_297 = arith.constant 0 : index
    %265 = vector.load %arg7[%c0_296, %c0_297] : memref<32x256xbf16, #tpu.memory_space<vmem>>, vector<32x256xbf16>
    %c0_298 = arith.constant 0 : index
    %c0_299 = arith.constant 0 : index
    %266 = vector.load %arg19[%c0_298, %c0_299] : memref<256x70xbf16, #tpu.memory_space<vmem>>, vector<256x70xbf16>
    %cst_300 = arith.constant dense<0.000000e+00> : vector<32x70xf32>
    %267 = tpu.matmul %265, %266, %cst_300 {dimension_numbers = #tpu.dot_dimension_numbers<[1], [0], [0], [1], [0, 0, 1, 1], [], []>} : vector<32x256xbf16>, vector<256x70xbf16>, vector<32x70xf32> -> vector<32x70xf32>
    %cst_301 = arith.constant 0.000000e+00 : f32
    %268 = vector.broadcast %cst_301 : f32 to vector<32x70xf32>
    %269 = arith.cmpf oge, %267, %268 : vector<32x70xf32>
    %cst_302 = arith.constant 0.00999999977 : f32
    %270 = vector.broadcast %cst_302 : f32 to vector<32x70xf32>
    %271 = arith.mulf %270, %267 : vector<32x70xf32>
    %272 = arith.select %269, %267, %271 : vector<32x70xi1>, vector<32x70xf32>
    %c0_303 = arith.constant 0 : index
    %c0_304 = arith.constant 0 : index
    %273 = vector.load %arg20[%c0_303, %c0_304] : memref<32x70xf32, #tpu.memory_space<vmem>>, vector<32x70xf32>
    tpu.vector_store %arg20[%c0_303, %c0_304], %272 {strides = array<i32>} : memref<32x70xf32, #tpu.memory_space<vmem>>, vector<32x70xf32>,
    %c0_305 = arith.constant 0 : index
    %c0_306 = arith.constant 0 : index
    %274 = vector.load %arg20[%c0_305, %c0_306] : memref<32x70xf32, #tpu.memory_space<vmem>>, vector<32x10xf32>
    %275 = arith.truncf %274 : vector<32x10xf32> to vector<32x10xbf16>
    %c0_307 = arith.constant 0 : index
    %c0_308 = arith.constant 0 : index
    %276 = vector.load %arg21[%c0_307, %c0_308] : memref<128x10xbf16, #tpu.memory_space<vmem>>, vector<32x10xbf16>
    tpu.vector_store %arg21[%c0_307, %c0_308], %275 {strides = array<i32>} : memref<128x10xbf16, #tpu.memory_space<vmem>>, vector<32x10xbf16>,
    %c0_309 = arith.constant 0 : index
    %c20_310 = arith.constant 20 : index
    %277 = vector.load %arg20[%c0_309, %c20_310] : memref<32x70xf32, #tpu.memory_space<vmem>>, vector<32x10xf32>
    %278 = arith.truncf %277 : vector<32x10xf32> to vector<32x10xbf16>
    %c32_311 = arith.constant 32 : index
    %c0_312 = arith.constant 0 : index
    %279 = vector.load %arg21[%c32_311, %c0_312] : memref<128x10xbf16, #tpu.memory_space<vmem>>, vector<32x10xbf16>
    tpu.vector_store %arg21[%c32_311, %c0_312], %278 {strides = array<i32>} : memref<128x10xbf16, #tpu.memory_space<vmem>>, vector<32x10xbf16>,
    %c0_313 = arith.constant 0 : index
    %c40_314 = arith.constant 40 : index
    %280 = vector.load %arg20[%c0_313, %c40_314] : memref<32x70xf32, #tpu.memory_space<vmem>>, vector<32x10xf32>
    %281 = arith.truncf %280 : vector<32x10xf32> to vector<32x10xbf16>
    %c64_315 = arith.constant 64 : index
    %c0_316 = arith.constant 0 : index
    %282 = vector.load %arg21[%c64_315, %c0_316] : memref<128x10xbf16, #tpu.memory_space<vmem>>, vector<32x10xbf16>
    tpu.vector_store %arg21[%c64_315, %c0_316], %281 {strides = array<i32>} : memref<128x10xbf16, #tpu.memory_space<vmem>>, vector<32x10xbf16>,
    %c0_317 = arith.constant 0 : index
    %c60 = arith.constant 60 : index
    %283 = vector.load %arg20[%c0_317, %c60] : memref<32x70xf32, #tpu.memory_space<vmem>>, vector<32x10xf32>
    %284 = arith.truncf %283 : vector<32x10xf32> to vector<32x10xbf16>
    %c96_318 = arith.constant 96 : index
    %c0_319 = arith.constant 0 : index
    %285 = vector.load %arg21[%c96_318, %c0_319] : memref<128x10xbf16, #tpu.memory_space<vmem>>, vector<32x10xbf16>
    tpu.vector_store %arg21[%c96_318, %c0_319], %284 {strides = array<i32>} : memref<128x10xbf16, #tpu.memory_space<vmem>>, vector<32x10xbf16>,
    %c0_320 = arith.constant 0 : index
    %c0_321 = arith.constant 0 : index
    %286 = vector.load %arg21[%c0_320, %c0_321] : memref<128x10xbf16, #tpu.memory_space<vmem>>, vector<128x10xbf16>
    %c0_322 = arith.constant 0 : index
    %c0_323 = arith.constant 0 : index
    %287 = vector.load %arg8[%c0_322, %c0_323] : memref<10x4xbf16, #tpu.memory_space<vmem>>, vector<10x4xbf16>
    %cst_324 = arith.constant dense<0.000000e+00> : vector<128x4xf32>
    %288 = tpu.matmul %286, %287, %cst_324 {dimension_numbers = #tpu.dot_dimension_numbers<[1], [0], [0], [1], [0, 0, 1, 1], [], []>} : vector<128x10xbf16>, vector<10x4xbf16>, vector<128x4xf32> -> vector<128x4xf32>
    %289 = arith.truncf %288 : vector<128x4xf32> to vector<128x4xbf16>
    %cst_325 = arith.constant 0.000000e+00 : bf16
    %290 = vector.broadcast %cst_325 : bf16 to vector<32x44xbf16>
    %c0_326 = arith.constant 0 : index
    %c0_327 = arith.constant 0 : index
    %291 = vector.load %arg22[%c0_326, %c0_327] : memref<32x44xbf16, #tpu.memory_space<vmem>>, vector<32x44xbf16>
    tpu.vector_store %arg22[%c0_326, %c0_327], %290 {strides = array<i32>} : memref<32x44xbf16, #tpu.memory_space<vmem>>, vector<32x44xbf16>,
    %292 = vector.extract_strided_slice %289 {offsets = [0, 0], sizes = [32, 4], strides = [1, 1]} : vector<128x4xbf16> to vector<32x4xbf16>
    %c0_328 = arith.constant 0 : index
    %c7 = arith.constant 7 : index
    %293 = vector.load %arg22[%c0_328, %c7] : memref<32x44xbf16, #tpu.memory_space<vmem>>, vector<32x4xbf16>
    tpu.vector_store %arg22[%c0_328, %c7], %292 {strides = array<i32>} : memref<32x44xbf16, #tpu.memory_space<vmem>>, vector<32x4xbf16>,
    %294 = vector.extract_strided_slice %289 {offsets = [32, 0], sizes = [32, 4], strides = [1, 1]} : vector<128x4xbf16> to vector<32x4xbf16>
    %c0_329 = arith.constant 0 : index
    %c13_330 = arith.constant 13 : index
    %295 = vector.load %arg22[%c0_329, %c13_330] : memref<32x44xbf16, #tpu.memory_space<vmem>>, vector<32x4xbf16>
    tpu.vector_store %arg22[%c0_329, %c13_330], %294 {strides = array<i32>} : memref<32x44xbf16, #tpu.memory_space<vmem>>, vector<32x4xbf16>,
    %296 = vector.extract_strided_slice %289 {offsets = [64, 0], sizes = [32, 4], strides = [1, 1]} : vector<128x4xbf16> to vector<32x4xbf16>
    %c0_331 = arith.constant 0 : index
    %c19_332 = arith.constant 19 : index
    %297 = vector.load %arg22[%c0_331, %c19_332] : memref<32x44xbf16, #tpu.memory_space<vmem>>, vector<32x4xbf16>
    tpu.vector_store %arg22[%c0_331, %c19_332], %296 {strides = array<i32>} : memref<32x44xbf16, #tpu.memory_space<vmem>>, vector<32x4xbf16>,
    %298 = vector.extract_strided_slice %289 {offsets = [96, 0], sizes = [32, 4], strides = [1, 1]} : vector<128x4xbf16> to vector<32x4xbf16>
    %c0_333 = arith.constant 0 : index
    %c25 = arith.constant 25 : index
    %299 = vector.load %arg22[%c0_333, %c25] : memref<32x44xbf16, #tpu.memory_space<vmem>>, vector<32x4xbf16>
    tpu.vector_store %arg22[%c0_333, %c25], %298 {strides = array<i32>} : memref<32x44xbf16, #tpu.memory_space<vmem>>, vector<32x4xbf16>,
    %c0_334 = arith.constant 0 : index
    %c0_335 = arith.constant 0 : index
    %300 = vector.load %arg22[%c0_334, %c0_335] : memref<32x44xbf16, #tpu.memory_space<vmem>>, vector<32x24xbf16>
    %c0_336 = arith.constant 0 : index
    %c0_337 = arith.constant 0 : index
    %301 = vector.load %arg23[%c0_336, %c0_337] : memref<288x24xbf16, #tpu.memory_space<vmem>>, vector<32x24xbf16>
    tpu.vector_store %arg23[%c0_336, %c0_337], %300 {strides = array<i32>} : memref<288x24xbf16, #tpu.memory_space<vmem>>, vector<32x24xbf16>,
    %c0_338 = arith.constant 0 : index
    %c1_339 = arith.constant 1 : index
    %302 = vector.load %arg22[%c0_338, %c1_339] : memref<32x44xbf16, #tpu.memory_space<vmem>>, vector<32x24xbf16>
    %c32_340 = arith.constant 32 : index
    %c0_341 = arith.constant 0 : index
    %303 = vector.load %arg23[%c32_340, %c0_341] : memref<288x24xbf16, #tpu.memory_space<vmem>>, vector<32x24xbf16>
    tpu.vector_store %arg23[%c32_340, %c0_341], %302 {strides = array<i32>} : memref<288x24xbf16, #tpu.memory_space<vmem>>, vector<32x24xbf16>,
    %c0_342 = arith.constant 0 : index
    %c2_343 = arith.constant 2 : index
    %304 = vector.load %arg22[%c0_342, %c2_343] : memref<32x44xbf16, #tpu.memory_space<vmem>>, vector<32x24xbf16>
    %c64_344 = arith.constant 64 : index
    %c0_345 = arith.constant 0 : index
    %305 = vector.load %arg23[%c64_344, %c0_345] : memref<288x24xbf16, #tpu.memory_space<vmem>>, vector<32x24xbf16>
    tpu.vector_store %arg23[%c64_344, %c0_345], %304 {strides = array<i32>} : memref<288x24xbf16, #tpu.memory_space<vmem>>, vector<32x24xbf16>,
    %c0_346 = arith.constant 0 : index
    %c6 = arith.constant 6 : index
    %306 = vector.load %arg22[%c0_346, %c6] : memref<32x44xbf16, #tpu.memory_space<vmem>>, vector<32x24xbf16>
    %c96_347 = arith.constant 96 : index
    %c0_348 = arith.constant 0 : index
    %307 = vector.load %arg23[%c96_347, %c0_348] : memref<288x24xbf16, #tpu.memory_space<vmem>>, vector<32x24xbf16>
    tpu.vector_store %arg23[%c96_347, %c0_348], %306 {strides = array<i32>} : memref<288x24xbf16, #tpu.memory_space<vmem>>, vector<32x24xbf16>,
    %c0_349 = arith.constant 0 : index
    %c7_350 = arith.constant 7 : index
    %308 = vector.load %arg22[%c0_349, %c7_350] : memref<32x44xbf16, #tpu.memory_space<vmem>>, vector<32x24xbf16>
    %c128_351 = arith.constant 128 : index
    %c0_352 = arith.constant 0 : index
    %309 = vector.load %arg23[%c128_351, %c0_352] : memref<288x24xbf16, #tpu.memory_space<vmem>>, vector<32x24xbf16>
    tpu.vector_store %arg23[%c128_351, %c0_352], %308 {strides = array<i32>} : memref<288x24xbf16, #tpu.memory_space<vmem>>, vector<32x24xbf16>,
    %c0_353 = arith.constant 0 : index
    %c8_354 = arith.constant 8 : index
    %310 = vector.load %arg22[%c0_353, %c8_354] : memref<32x44xbf16, #tpu.memory_space<vmem>>, vector<32x24xbf16>
    %c160_355 = arith.constant 160 : index
    %c0_356 = arith.constant 0 : index
    %311 = vector.load %arg23[%c160_355, %c0_356] : memref<288x24xbf16, #tpu.memory_space<vmem>>, vector<32x24xbf16>
    tpu.vector_store %arg23[%c160_355, %c0_356], %310 {strides = array<i32>} : memref<288x24xbf16, #tpu.memory_space<vmem>>, vector<32x24xbf16>,
    %c0_357 = arith.constant 0 : index
    %c12_358 = arith.constant 12 : index
    %312 = vector.load %arg22[%c0_357, %c12_358] : memref<32x44xbf16, #tpu.memory_space<vmem>>, vector<32x24xbf16>
    %c192_359 = arith.constant 192 : index
    %c0_360 = arith.constant 0 : index
    %313 = vector.load %arg23[%c192_359, %c0_360] : memref<288x24xbf16, #tpu.memory_space<vmem>>, vector<32x24xbf16>
    tpu.vector_store %arg23[%c192_359, %c0_360], %312 {strides = array<i32>} : memref<288x24xbf16, #tpu.memory_space<vmem>>, vector<32x24xbf16>,
    %c0_361 = arith.constant 0 : index
    %c13_362 = arith.constant 13 : index
    %314 = vector.load %arg22[%c0_361, %c13_362] : memref<32x44xbf16, #tpu.memory_space<vmem>>, vector<32x24xbf16>
    %c224_363 = arith.constant 224 : index
    %c0_364 = arith.constant 0 : index
    %315 = vector.load %arg23[%c224_363, %c0_364] : memref<288x24xbf16, #tpu.memory_space<vmem>>, vector<32x24xbf16>
    tpu.vector_store %arg23[%c224_363, %c0_364], %314 {strides = array<i32>} : memref<288x24xbf16, #tpu.memory_space<vmem>>, vector<32x24xbf16>,
    %c0_365 = arith.constant 0 : index
    %c14 = arith.constant 14 : index
    %316 = vector.load %arg22[%c0_365, %c14] : memref<32x44xbf16, #tpu.memory_space<vmem>>, vector<32x24xbf16>
    %c256 = arith.constant 256 : index
    %c0_366 = arith.constant 0 : index
    %317 = vector.load %arg23[%c256, %c0_366] : memref<288x24xbf16, #tpu.memory_space<vmem>>, vector<32x24xbf16>
    tpu.vector_store %arg23[%c256, %c0_366], %316 {strides = array<i32>} : memref<288x24xbf16, #tpu.memory_space<vmem>>, vector<32x24xbf16>,
    %c0_367 = arith.constant 0 : index
    %c0_368 = arith.constant 0 : index
    %318 = vector.load %arg9[%c0_367, %c0_368] : memref<1x288xbf16, #tpu.memory_space<vmem>>, vector<1x288xbf16>
    %c0_369 = arith.constant 0 : index
    %c0_370 = arith.constant 0 : index
    %319 = vector.load %arg23[%c0_369, %c0_370] : memref<288x24xbf16, #tpu.memory_space<vmem>>, vector<288x24xbf16>
    %cst_371 = arith.constant dense<0.000000e+00> : vector<1x24xf32>
    %320 = tpu.matmul %318, %319, %cst_371 {dimension_numbers = #tpu.dot_dimension_numbers<[1], [0], [0], [1], [0, 0, 1, 1], [], []>} : vector<1x288xbf16>, vector<288x24xbf16>, vector<1x24xf32> -> vector<1x24xf32>
    %c0_372 = arith.constant 0 : index
    %c0_373 = arith.constant 0 : index
    %321 = vector.load %arg24[%c0_372, %c0_373] : memref<1x24xf32, #tpu.memory_space<vmem>>, vector<1x24xf32>
    tpu.vector_store %arg24[%c0_372, %c0_373], %320 {strides = array<i32>} : memref<1x24xf32, #tpu.memory_space<vmem>>, vector<1x24xf32>,
    %c0_374 = arith.constant 0 : index
    %c0_375 = arith.constant 0 : index
    %322 = vector.load %arg24[%c0_374, %c0_375] : memref<1x24xf32, #tpu.memory_space<vmem>>, vector<1x4xf32>
    %c0_376 = arith.constant 0 : index
    %c0_377 = arith.constant 0 : index
    %c0_378 = arith.constant 0 : index
    %323 = vector.load %arg10[%c0_376, %c0_377, %c0_378] : memref<1x1x16xf32, #tpu.memory_space<vmem>>, vector<1x1x4xf32>
    %324 = vector.shape_cast %323 : vector<1x1x4xf32> to vector<1x4xf32>
    %325 = vector.shape_cast %322 : vector<1x4xf32> to vector<1x1x4xf32>
    tpu.vector_store %arg10[%c0_376, %c0_377, %c0_378], %325 {strides = array<i32>} : memref<1x1x16xf32, #tpu.memory_space<vmem>>, vector<1x1x4xf32>,
    %c0_379 = arith.constant 0 : index
    %c6_380 = arith.constant 6 : index
    %326 = vector.load %arg24[%c0_379, %c6_380] : memref<1x24xf32, #tpu.memory_space<vmem>>, vector<1x4xf32>
    %c0_381 = arith.constant 0 : index
    %c0_382 = arith.constant 0 : index
    %c4 = arith.constant 4 : index
    %327 = vector.load %arg10[%c0_381, %c0_382, %c4] : memref<1x1x16xf32, #tpu.memory_space<vmem>>, vector<1x1x4xf32>
    %328 = vector.shape_cast %327 : vector<1x1x4xf32> to vector<1x4xf32>
    %329 = vector.shape_cast %326 : vector<1x4xf32> to vector<1x1x4xf32>
    tpu.vector_store %arg10[%c0_381, %c0_382, %c4], %329 {strides = array<i32>} : memref<1x1x16xf32, #tpu.memory_space<vmem>>, vector<1x1x4xf32>,
    %c0_383 = arith.constant 0 : index
    %c12_384 = arith.constant 12 : index
    %330 = vector.load %arg24[%c0_383, %c12_384] : memref<1x24xf32, #tpu.memory_space<vmem>>, vector<1x4xf32>
    %c0_385 = arith.constant 0 : index
    %c0_386 = arith.constant 0 : index
    %c8_387 = arith.constant 8 : index
    %331 = vector.load %arg10[%c0_385, %c0_386, %c8_387] : memref<1x1x16xf32, #tpu.memory_space<vmem>>, vector<1x1x4xf32>
    %332 = vector.shape_cast %331 : vector<1x1x4xf32> to vector<1x4xf32>
    %333 = vector.shape_cast %330 : vector<1x4xf32> to vector<1x1x4xf32>
    tpu.vector_store %arg10[%c0_385, %c0_386, %c8_387], %333 {strides = array<i32>} : memref<1x1x16xf32, #tpu.memory_space<vmem>>, vector<1x1x4xf32>,
    %c0_388 = arith.constant 0 : index
    %c18_389 = arith.constant 18 : index
    %334 = vector.load %arg24[%c0_388, %c18_389] : memref<1x24xf32, #tpu.memory_space<vmem>>, vector<1x4xf32>
    %c0_390 = arith.constant 0 : index
    %c0_391 = arith.constant 0 : index
    %c12_392 = arith.constant 12 : index
    %335 = vector.load %arg10[%c0_390, %c0_391, %c12_392] : memref<1x1x16xf32, #tpu.memory_space<vmem>>, vector<1x1x4xf32>
    %336 = vector.shape_cast %335 : vector<1x1x4xf32> to vector<1x4xf32>
    %337 = vector.shape_cast %334 : vector<1x4xf32> to vector<1x1x4xf32>
    tpu.vector_store %arg10[%c0_390, %c0_391, %c12_392], %337 {strides = array<i32>} : memref<1x1x16xf32, #tpu.memory_space<vmem>>, vector<1x1x4xf32>,
    return
  }
  func.func @transform_0(%arg0: i32) -> (i32, i32, i32) {
    %c0_i32 = arith.constant 0 : i32
    %c0_i32_0 = arith.constant 0 : i32
    %c0_i32_1 = arith.constant 0 : i32
    return %arg0, %c0_i32, %c0_i32_0 : i32, i32, i32
  }
  func.func @transform_1(%arg0: i32) -> (i32, i32) {
    %c0_i32 = arith.constant 0 : i32
    %c0_i32_0 = arith.constant 0 : i32
    %c0_i32_1 = arith.constant 0 : i32
    return %c0_i32, %c0_i32_0 : i32, i32
  }
  func.func @transform_2(%arg0: i32) -> (i32, i32) {
    %c0_i32 = arith.constant 0 : i32
    %c0_i32_0 = arith.constant 0 : i32
    %c0_i32_1 = arith.constant 0 : i32
    return %c0_i32, %c0_i32_0 : i32, i32
  }
  func.func @transform_3(%arg0: i32) -> (i32, i32) {
    %c0_i32 = arith.constant 0 : i32
    %c0_i32_0 = arith.constant 0 : i32
    %c0_i32_1 = arith.constant 0 : i32
    return %c0_i32, %c0_i32_0 : i32, i32
  }
  func.func @transform_4(%arg0: i32) -> (i32, i32) {
    %c0_i32 = arith.constant 0 : i32
    %c0_i32_0 = arith.constant 0 : i32
    %c0_i32_1 = arith.constant 0 : i32
    return %c0_i32, %c0_i32_0 : i32, i32
  }
  func.func @transform_5(%arg0: i32) -> (i32, i32) {
    %c0_i32 = arith.constant 0 : i32
    %c0_i32_0 = arith.constant 0 : i32
    %c0_i32_1 = arith.constant 0 : i32
    return %c0_i32, %c0_i32_0 : i32, i32
  }
  func.func @transform_6(%arg0: i32) -> (i32, i32) {
    %c0_i32 = arith.constant 0 : i32
    %c0_i32_0 = arith.constant 0 : i32
    %c0_i32_1 = arith.constant 0 : i32
    return %c0_i32, %c0_i32_0 : i32, i32
  }
  func.func @transform_7(%arg0: i32) -> (i32, i32) {
    %c0_i32 = arith.constant 0 : i32
    %c0_i32_0 = arith.constant 0 : i32
    %c0_i32_1 = arith.constant 0 : i32
    return %c0_i32, %c0_i32_0 : i32, i32
  }
  func.func @transform_8(%arg0: i32) -> (i32, i32) {
    %c0_i32 = arith.constant 0 : i32
    %c0_i32_0 = arith.constant 0 : i32
    %c0_i32_1 = arith.constant 0 : i32
    return %c0_i32, %c0_i32_0 : i32, i32
  }
  func.func @transform_9(%arg0: i32) -> (i32, i32, i32) {
    %c0_i32 = arith.constant 0 : i32
    %c0_i32_0 = arith.constant 0 : i32
    %c0_i32_1 = arith.constant 0 : i32
    return %arg0, %c0_i32, %c0_i32_0 : i32, i32, i32
  }
}

</mosaic_0001>

<llo_original>
// kernel: feature_discriminator_forward.1
$region0: #{feature_discriminator_forward.1}
  #allocation0 [shape = 'u32[]', space=smem, size = 0x4, offset = 0x4, fixed_abs, tag = 'smem constant byte address 0x4 - core index']
  #allocation1 [shape = 'u32[144,128]{1,0:T(1,128)}', space=vmem, size = 0x12000, scoped, tag = 'internal scratch']
  #allocation2 [shape = 'bf16[128,1054]{1,0:T(16,128)(2,1)}', space=vmem, size = 0x48000, scoped, tag = 'scratch operand']
  #allocation3 [shape = 'f32[8,1054]{1,0:T(8,128)}', space=vmem, size = 0x9000, scoped, tag = 'scratch operand']
  #allocation4 [shape = 'bf16[128,34]{1,0:T(16,128)(2,1)}', space=vmem, size = 0x8000, scoped, tag = 'scratch operand']
  #allocation5 [shape = 'bf16[8,332]{1,0:T(8,128)(2,1)}', space=vmem, size = 0x1800, scoped, tag = 'scratch operand']
  #allocation6 [shape = 'bf16[128,270]{1,0:T(16,128)(2,1)}', space=vmem, size = 0x18000, scoped, tag = 'scratch operand']
  #allocation7 [shape = 'f32[16,270]{1,0:T(8,128)}', space=vmem, size = 0x6000, scoped, tag = 'scratch operand']
  #allocation8 [shape = 'bf16[128,18]{1,0:T(16,128)(2,1)}', space=vmem, size = 0x8000, scoped, tag = 'scratch operand']
  #allocation9 [shape = 'bf16[16,108]{1,0:T(16,128)(2,1)}', space=vmem, size = 0x1000, scoped, tag = 'scratch operand']
  #allocation10 [shape = 'bf16[256,70]{1,0:T(16,128)(2,1)}', space=vmem, size = 0x10000, scoped, tag = 'scratch operand']
  #allocation11 [shape = 'f32[32,70]{1,0:T(8,128)}', space=vmem, size = 0x4000, scoped, tag = 'scratch operand']
  #allocation12 [shape = 'bf16[128,10]{1,0:T(16,128)(2,1)}', space=vmem, size = 0x8000, scoped, tag = 'scratch operand']
  #allocation13 [shape = 'bf16[32,44]{1,0:T(16,128)(2,1)}', space=vmem, size = 0x2000, scoped, tag = 'scratch operand']
  #allocation14 [shape = 'bf16[288,24]{1,0:T(16,128)(2,1)}', space=vmem, size = 0x12000, scoped, tag = 'scratch operand']
  #allocation15 [shape = 'f32[1,24]{1,0:T(1,128)}', space=vmem, size = 0x200, scoped, tag = 'scratch operand']
  %s0 = inlined_call_operand.vmem [shape: bf16[2,8,1164], index: 0, kind: input, shape index: {}]
  %s1 = inlined_call_operand.vmem [shape: bf16[8,128], index: 1, kind: input, shape index: {}]
  %s2 = inlined_call_operand.vmem [shape: f32[8,1], index: 2, kind: input, shape index: {}]
  %s3 = inlined_call_operand.vmem [shape: bf16[34,16], index: 3, kind: input, shape index: {}]
  %s4 = inlined_call_operand.vmem [shape: bf16[16,128], index: 4, kind: input, shape index: {}]
  %s5 = inlined_call_operand.vmem [shape: bf16[18,8], index: 5, kind: input, shape index: {}]
  %s6 = inlined_call_operand.vmem [shape: bf16[32,256], index: 6, kind: input, shape index: {}]
  %s7 = inlined_call_operand.vmem [shape: bf16[10,4], index: 7, kind: input, shape index: {}]
  %s8 = inlined_call_operand.vmem [shape: bf16[1,288], index: 8, kind: input, shape index: {}]
  %s9 = inlined_call_operand.vmem [shape: f32[2,1,16], index: 9, kind: output, shape index: {}]
  %s10 = sld [smem:[#allocation0]]
  $region69: #{feature_discriminator_forward.1} parent=0
    _
  %s12 = ssub.s32 1, %s10
  %s13 = scalar_select 0, %s12, %s10
  loop: start=0, step=1, limit=4
  $region2: #{feature_discriminator_forward.1} parent=0 // loop_pre_header
    _
  $region3: #{feature_discriminator_forward.1} parent=0 // loop_header
    %s15 = sphi 0, %s19
    %p16 = scmp.ge.s32.totalorder %s15, 4
    %s25 = sphi 0, %s27
    %s28 = sphi 0, %s25
    %s29 = sphi 0, %s28
    %s45 = sphi 0, %s29
    %s49 = sphi 0, %s49
    %s51 = sphi 0, %s49
    %s52 = sphi 0, %s51
    %s66 = sphi 0, %s52
    %s70 = sphi 0, %s70
    %s72 = sphi 0, %s70
    %s73 = sphi 0, %s72
    %s87 = sphi 0, %s73
    %s91 = sphi 0, %s91
    %s93 = sphi 0, %s91
    %s94 = sphi 0, %s93
    %s108 = sphi 0, %s94
    %s112 = sphi 0, %s112
    %s114 = sphi 0, %s112
    %s115 = sphi 0, %s114
    %s129 = sphi 0, %s115
    %s133 = sphi 0, %s133
    %s135 = sphi 0, %s133
    %s136 = sphi 0, %s135
    %s150 = sphi 0, %s136
    %s154 = sphi 0, %s154
    %s156 = sphi 0, %s154
    %s157 = sphi 0, %s156
    %s171 = sphi 0, %s157
    %s175 = sphi 0, %s175
    %s177 = sphi 0, %s175
    %s178 = sphi 0, %s177
    %s192 = sphi 0, %s178
    %s196 = sphi 0, %s196
    %s198 = sphi 0, %s196
    %s199 = sphi 0, %s198
    %s213 = sphi 0, %s199
    %s219 = sphi 0, %s221
    %s222 = sphi 0, %s219
    %s223 = sphi 0, %s222
    %s239 = sphi 0, %s223
  $region4: #{feature_discriminator_forward.1} parent=0 // loop_header_branch
    %18 = sbr.rel (%p16) target = $region8
  $region5: #{feature_discriminator_forward.1} parent=0 // loop_body
    %s20 = ssub.s32 %s15, 1
    %s21 = ssub.s32 %s15, 2
    %s22 = sadd.s32 %s15, 1
    %s23 = ssub.s32 %s15, %s22
    %p24 = scmp.eq.s32.totalorder %s23, 0
    %s26 = sadd.s32 %s25, 1
    %s27 = scalar_select %p24, %s25, %s26
    %p30 = pneg %p24
    %p31 = scmp.eq.s32.totalorder %s15, 1
    %p32 = por %p30, %p31
    %p33 = scmp.ne.s32.totalorder %s25, %s28
    %p34 = scmp.eq.s32.totalorder %s15, 0
    %p35 = por %p33, %p34
    %p36 = scmp.ne.s32.totalorder %s25, %s28
    %p37 = scmp.eq.s32.totalorder %s20, 1
    %p38 = por %p36, %p37
    %p39 = scmp.ne.s32.totalorder %s28, %s29
    %p40 = scmp.eq.s32.totalorder %s20, 0
    %p41 = por %p39, %p40
    %p42 = scmp.ne.s32.totalorder %s28, %s29
    %p43 = scmp.eq.s32.totalorder %s21, 1
    %p44 = por %p42, %p43
    %p46 = scmp.ne.s32.totalorder %s29, %s45
    %p47 = scmp.eq.s32.totalorder %s21, 0
    %p48 = por %p46, %p47
    %s50 = sadd.s32 %s49, 1
    %p53 = scmp.eq.s32.totalorder %s15, 1
    %p54 = scmp.ne.s32.totalorder %s49, %s51
    %p55 = scmp.eq.s32.totalorder %s15, 0
    %p56 = por %p54, %p55
    %p57 = scmp.ne.s32.totalorder %s49, %s51
    %p58 = scmp.eq.s32.totalorder %s20, 1
    %p59 = por %p57, %p58
    %p60 = scmp.ne.s32.totalorder %s51, %s52
    %p61 = scmp.eq.s32.totalorder %s20, 0
    %p62 = por %p60, %p61
    %p63 = scmp.ne.s32.totalorder %s51, %s52
    %p64 = scmp.eq.s32.totalorder %s21, 1
    %p65 = por %p63, %p64
    %p67 = scmp.ne.s32.totalorder %s52, %s66
    %p68 = scmp.eq.s32.totalorder %s21, 0
    %p69 = por %p67, %p68
    %s71 = sadd.s32 %s70, 1
    %p74 = scmp.eq.s32.totalorder %s15, 1
    %p75 = scmp.ne.s32.totalorder %s70, %s72
    %p76 = scmp.eq.s32.totalorder %s15, 0
    %p77 = por %p75, %p76
    %p78 = scmp.ne.s32.totalorder %s70, %s72
    %p79 = scmp.eq.s32.totalorder %s20, 1
    %p80 = por %p78, %p79
    %p81 = scmp.ne.s32.totalorder %s72, %s73
    %p82 = scmp.eq.s32.totalorder %s20, 0
    %p83 = por %p81, %p82
    %p84 = scmp.ne.s32.totalorder %s72, %s73
    %p85 = scmp.eq.s32.totalorder %s21, 1
    %p86 = por %p84, %p85
    %p88 = scmp.ne.s32.totalorder %s73, %s87
    %p89 = scmp.eq.s32.totalorder %s21, 0
    %p90 = por %p88, %p89
    %s92 = sadd.s32 %s91, 1
    %p95 = scmp.eq.s32.totalorder %s15, 1
    %p96 = scmp.ne.s32.totalorder %s91, %s93
    %p97 = scmp.eq.s32.totalorder %s15, 0
    %p98 = por %p96, %p97
    %p99 = scmp.ne.s32.totalorder %s91, %s93
    %p100 = scmp.eq.s32.totalorder %s20, 1
    %p101 = por %p99, %p100
    %p102 = scmp.ne.s32.totalorder %s93, %s94
    %p103 = scmp.eq.s32.totalorder %s20, 0
    %p104 = por %p102, %p103
    %p105 = scmp.ne.s32.totalorder %s93, %s94
    %p106 = scmp.eq.s32.totalorder %s21, 1
    %p107 = por %p105, %p106
    %p109 = scmp.ne.s32.totalorder %s94, %s108
    %p110 = scmp.eq.s32.totalorder %s21, 0
    %p111 = por %p109, %p110
    %s113 = sadd.s32 %s112, 1
    %p116 = scmp.eq.s32.totalorder %s15, 1
    %p117 = scmp.ne.s32.totalorder %s112, %s114
    %p118 = scmp.eq.s32.totalorder %s15, 0
    %p119 = por %p117, %p118
    %p120 = scmp.ne.s32.totalorder %s112, %s114
    %p121 = scmp.eq.s32.totalorder %s20, 1
    %p122 = por %p120, %p121
    %p123 = scmp.ne.s32.totalorder %s114, %s115
    %p124 = scmp.eq.s32.totalorder %s20, 0
    %p125 = por %p123, %p124
    %p126 = scmp.ne.s32.totalorder %s114, %s115
    %p127 = scmp.eq.s32.totalorder %s21, 1
    %p128 = por %p126, %p127
    %p130 = scmp.ne.s32.totalorder %s115, %s129
    %p131 = scmp.eq.s32.totalorder %s21, 0
    %p132 = por %p130, %p131
    %s134 = sadd.s32 %s133, 1
    %p137 = scmp.eq.s32.totalorder %s15, 1
    %p138 = scmp.ne.s32.totalorder %s133, %s135
    %p139 = scmp.eq.s32.totalorder %s15, 0
    %p140 = por %p138, %p139
    %p141 = scmp.ne.s32.totalorder %s133, %s135
    %p142 = scmp.eq.s32.totalorder %s20, 1
    %p143 = por %p141, %p142
    %p144 = scmp.ne.s32.totalorder %s135, %s136
    %p145 = scmp.eq.s32.totalorder %s20, 0
    %p146 = por %p144, %p145
    %p147 = scmp.ne.s32.totalorder %s135, %s136
    %p148 = scmp.eq.s32.totalorder %s21, 1
    %p149 = por %p147, %p148
    %p151 = scmp.ne.s32.totalorder %s136, %s150
    %p152 = scmp.eq.s32.totalorder %s21, 0
    %p153 = por %p151, %p152
    %s155 = sadd.s32 %s154, 1
    %p158 = scmp.eq.s32.totalorder %s15, 1
    %p159 = scmp.ne.s32.totalorder %s154, %s156
    %p160 = scmp.eq.s32.totalorder %s15, 0
    %p161 = por %p159, %p160
    %p162 = scmp.ne.s32.totalorder %s154, %s156
    %p163 = scmp.eq.s32.totalorder %s20, 1
    %p164 = por %p162, %p163
    %p165 = scmp.ne.s32.totalorder %s156, %s157
    %p166 = scmp.eq.s32.totalorder %s20, 0
    %p167 = por %p165, %p166
    %p168 = scmp.ne.s32.totalorder %s156, %s157
    %p169 = scmp.eq.s32.totalorder %s21, 1
    %p170 = por %p168, %p169
    %p172 = scmp.ne.s32.totalorder %s157, %s171
    %p173 = scmp.eq.s32.totalorder %s21, 0
    %p174 = por %p172, %p173
    %s176 = sadd.s32 %s175, 1
    %p179 = scmp.eq.s32.totalorder %s15, 1
    %p180 = scmp.ne.s32.totalorder %s175, %s177
    %p181 = scmp.eq.s32.totalorder %s15, 0
    %p182 = por %p180, %p181
    %p183 = scmp.ne.s32.totalorder %s175, %s177
    %p184 = scmp.eq.s32.totalorder %s20, 1
    %p185 = por %p183, %p184
    %p186 = scmp.ne.s32.totalorder %s177, %s178
    %p187 = scmp.eq.s32.totalorder %s20, 0
    %p188 = por %p186, %p187
    %p189 = scmp.ne.s32.totalorder %s177, %s178
    %p190 = scmp.eq.s32.totalorder %s21, 1
    %p191 = por %p189, %p190
    %p193 = scmp.ne.s32.totalorder %s178, %s192
    %p194 = scmp.eq.s32.totalorder %s21, 0
    %p195 = por %p193, %p194
    %s197 = sadd.s32 %s196, 1
    %p200 = scmp.eq.s32.totalorder %s15, 1
    %p201 = scmp.ne.s32.totalorder %s196, %s198
    %p202 = scmp.eq.s32.totalorder %s15, 0
    %p203 = por %p201, %p202
    %p204 = scmp.ne.s32.totalorder %s196, %s198
    %p205 = scmp.eq.s32.totalorder %s20, 1
    %p206 = por %p204, %p205
    %p207 = scmp.ne.s32.totalorder %s198, %s199
    %p208 = scmp.eq.s32.totalorder %s20, 0
    %p209 = por %p207, %p208
    %p210 = scmp.ne.s32.totalorder %s198, %s199
    %p211 = scmp.eq.s32.totalorder %s21, 1
    %p212 = por %p210, %p211
    %p214 = scmp.ne.s32.totalorder %s199, %s213
    %p215 = scmp.eq.s32.totalorder %s21, 0
    %p216 = por %p214, %p215
    %s217 = ssub.s32 %s15, %s22
    %p218 = scmp.eq.s32.totalorder %s217, 0
    %s220 = sadd.s32 %s219, 1
    %s221 = scalar_select %p218, %s219, %s220
    %p224 = pneg %p218
    %p225 = scmp.eq.s32.totalorder %s15, 1
    %p226 = por %p224, %p225
    %p227 = scmp.ne.s32.totalorder %s219, %s222
    %p228 = scmp.eq.s32.totalorder %s15, 0
    %p229 = por %p227, %p228
    %p230 = scmp.ne.s32.totalorder %s219, %s222
    %p231 = scmp.eq.s32.totalorder %s20, 1
    %p232 = por %p230, %p231
    %p233 = scmp.ne.s32.totalorder %s222, %s223
    %p234 = scmp.eq.s32.totalorder %s20, 0
    %p235 = por %p233, %p234
    %p236 = scmp.ne.s32.totalorder %s222, %s223
    %p237 = scmp.eq.s32.totalorder %s21, 1
    %p238 = por %p236, %p237
    %p240 = scmp.ne.s32.totalorder %s223, %s239
    %p241 = scmp.eq.s32.totalorder %s21, 0
    %p242 = por %p240, %p241
    %p243 = scmp.le.s32.totalorder 1, %s15
    %p244 = scmp.lt.s32.totalorder %s15, 3
    %p245 = pnand %p243, %p244
    %p246 = pneg %p245
    // Predicated region
    $region9: #{feature_discriminator_forward.1} parent=5 // pred_check
      _
    $region10: #{feature_discriminator_forward.1} parent=5 // pred_check_branch
      %248 = sbr.rel (%p245) target = $region12
    $region11: #{feature_discriminator_forward.1} parent=5 // pred_region
      %s249 = ssub.s32 %s15, 1
      // Predicated region
      $region13: #{feature_discriminator_forward.1} parent=11 // pred_check
        %p250 = pneg %p62
      $region14: #{feature_discriminator_forward.1} parent=11 // pred_check_branch
        %252 = sbr.rel (%p250) target = $region16
      $region15: #{feature_discriminator_forward.1} parent=11 // pred_region
        _
      $region16: #{feature_discriminator_forward.1} parent=11 // pred_fallthru
        _
      // Predicated region
      $region17: #{feature_discriminator_forward.1} parent=11 // pred_check
        %p253 = pneg %p83
      $region18: #{feature_discriminator_forward.1} parent=11 // pred_check_branch
        %255 = sbr.rel (%p253) target = $region20
      $region19: #{feature_discriminator_forward.1} parent=11 // pred_region
        _
      $region20: #{feature_discriminator_forward.1} parent=11 // pred_fallthru
        _
      // Predicated region
      $region21: #{feature_discriminator_forward.1} parent=11 // pred_check
        %p256 = pneg %p104
      $region22: #{feature_discriminator_forward.1} parent=11 // pred_check_branch
        %258 = sbr.rel (%p256) target = $region24
      $region23: #{feature_discriminator_forward.1} parent=11 // pred_region
        _
      $region24: #{feature_discriminator_forward.1} parent=11 // pred_fallthru
        _
      // Predicated region
      $region25: #{feature_discriminator_forward.1} parent=11 // pred_check
        %p259 = pneg %p125
      $region26: #{feature_discriminator_forward.1} parent=11 // pred_check_branch
        %261 = sbr.rel (%p259) target = $region28
      $region27: #{feature_discriminator_forward.1} parent=11 // pred_region
        _
      $region28: #{feature_discriminator_forward.1} parent=11 // pred_fallthru
        _
      // Predicated region
      $region29: #{feature_discriminator_forward.1} parent=11 // pred_check
        %p262 = pneg %p146
      $region30: #{feature_discriminator_forward.1} parent=11 // pred_check_branch
        %264 = sbr.rel (%p262) target = $region32
      $region31: #{feature_discriminator_forward.1} parent=11 // pred_region
        _
      $region32: #{feature_discriminator_forward.1} parent=11 // pred_fallthru
        _
      // Predicated region
      $region33: #{feature_discriminator_forward.1} parent=11 // pred_check
        %p265 = pneg %p167
      $region34: #{feature_discriminator_forward.1} parent=11 // pred_check_branch
        %267 = sbr.rel (%p265) target = $region36
      $region35: #{feature_discriminator_forward.1} parent=11 // pred_region
        _
      $region36: #{feature_discriminator_forward.1} parent=11 // pred_fallthru
        _
      // Predicated region
      $region37: #{feature_discriminator_forward.1} parent=11 // pred_check
        %p268 = pneg %p188
      $region38: #{feature_discriminator_forward.1} parent=11 // pred_check_branch
        %270 = sbr.rel (%p268) target = $region40
      $region39: #{feature_discriminator_forward.1} parent=11 // pred_region
        _
      $region40: #{feature_discriminator_forward.1} parent=11 // pred_fallthru
        _
      // Predicated region
      $region41: #{feature_discriminator_forward.1} parent=11 // pred_check
        %p271 = pneg %p209
      $region42: #{feature_discriminator_forward.1} parent=11 // pred_check_branch
        %273 = sbr.rel (%p271) target = $region44
      $region43: #{feature_discriminator_forward.1} parent=11 // pred_region
        _
      $region44: #{feature_discriminator_forward.1} parent=11 // pred_fallthru
        _
    $region12: #{feature_discriminator_forward.1} parent=5 // pred_fallthru
      _
    %p274 = scmp.lt.s32.totalorder %s15, 2
    // Predicated region
    $region45: #{feature_discriminator_forward.1} parent=5 // pred_check
      %p275 = pneg %p274
    $region46: #{feature_discriminator_forward.1} parent=5 // pred_check_branch
      %277 = sbr.rel (%p275) target = $region48
    $region47: #{feature_discriminator_forward.1} parent=5 // pred_region
      // Predicated region
      $region49: #{feature_discriminator_forward.1} parent=47 // pred_check
        %p278 = pneg %p35
      $region50: #{feature_discriminator_forward.1} parent=47 // pred_check_branch
        %280 = sbr.rel (%p278) target = $region52
      $region51: #{feature_discriminator_forward.1} parent=47 // pred_region
        %p281 = scmp.lt.s32.totalorder %s15, 1
        %s282 = scalar_select %p281, %s15, 1
        %s283 = smul.addr %s282, 10
        %s284 = smul.addr %s283, 4
        %s285 = scalar_lea.vmem %s0, %s284
      $region52: #{feature_discriminator_forward.1} parent=47 // pred_fallthru
        _
    $region48: #{feature_discriminator_forward.1} parent=5 // pred_fallthru
      _
    %p286 = scmp.le.s32.totalorder 1, %s15
    %p287 = scmp.lt.s32.totalorder %s15, 3
    %p288 = pnand %p286, %p287
    %p289 = pneg %p288
    // Predicated region
    $region53: #{feature_discriminator_forward.1} parent=5 // pred_check
      _
    $region54: #{feature_discriminator_forward.1} parent=5 // pred_check_branch
      %291 = sbr.rel (%p288) target = $region56
    $region55: #{feature_discriminator_forward.1} parent=5 // pred_region
      %s292 = ssub.s32 %s15, 1
      %p293 = scmp.lt.s32.totalorder %s20, 1
      %s294 = scalar_select %p293, %s20, 1
      %s295 = smul.addr %s294, 10
      %s296 = smul.addr %s295, 4
      %s297 = scalar_lea.vmem %s0, %s296
      %p298 = pneg %p41
      %p299 = pneg %p38
      %p300 = pneg %p62
      %p301 = pneg %p59
      %p302 = pneg %p83
      %p303 = pneg %p80
      %p304 = pneg %p104
      %p305 = pneg %p101
      %p306 = pneg %p125
      %p307 = pneg %p122
      %p308 = pneg %p146
      %p309 = pneg %p143
      %p310 = pneg %p167
      %p311 = pneg %p164
      %p312 = pneg %p188
      %p313 = pneg %p185
      %p314 = pneg %p209
      %p315 = pneg %p206
      %p316 = pneg %p235
      %p317 = pneg %p232
      %p318 = scmp.lt.s32.totalorder %s20, 1
      %s319 = scalar_select %p318, %s20, 1
      %s320 = scalar_lea.vmem %s9, %s319
      %p321 = scmp.lt.s32.totalorder %s20, 1
      %s322 = scalar_select %p321, %s20, 1
      %s323 = smul.addr %s322, 10
      %s324 = smul.addr %s323, 4
      %s325 = scalar_lea.vmem %s0, %s324
      %p326 = scmp.lt.s32.totalorder %s20, 1
      %s327 = scalar_select %p326, %s20, 1
      %s328 = scalar_lea.vmem %s9, %s327
      %v330 = vld [vmem:[%s325] sm:$0xff]
      %v331 = vld [vmem:[%s325 + $0x8] sm:$0xff]
      %v332 = vld [vmem:[%s325 + $0x10] sm:$0xff]
      %v333 = vld [vmem:[%s325 + $0x18] sm:$0xff]
      %v334 = vld [vmem:[%s325 + $0x20] sm:$0xf]
      %v340 = vunpack.c.l.b16 %v330
      %v341 = vunpack.c.h.b16 %v330
      %v342 = vunpack.c.l.b16 %v331
      %v343 = vunpack.c.h.b16 %v331
      %v344 = vunpack.c.l.b16 %v332
      %v345 = vunpack.c.h.b16 %v332
      %v346 = vunpack.c.l.b16 %v333
      %v347 = vunpack.c.h.b16 %v333
      %v348 = vunpack.c.l.b16 %v334
      %v349 = vpack.c.b16 %v340, %v340
      %v350 = vpack.c.b16 %v341, %v341
      %v351 = vpack.c.b16 %v342, %v342
      %v352 = vpack.c.b16 %v343, %v343
      %v353 = vpack.c.b16 %v344, %v344
      %v354 = vpack.c.b16 %v345, %v345
      %v355 = vpack.c.b16 %v346, %v346
      %v356 = vpack.c.b16 %v347, %v347
      %v357 = vpack.c.b16 %v348, %v348
      %367 = vst [vmem:[#allocation2] sm:$0xf] %v349
      %368 = vst [vmem:[#allocation2 + $0x8] sm:$0xf] %v350
      %369 = vst [vmem:[#allocation2 + $0x10] sm:$0xf] %v351
      %370 = vst [vmem:[#allocation2 + $0x18] sm:$0xf] %v352
      %371 = vst [vmem:[#allocation2 + $0x20] sm:$0xf] %v353
      %372 = vst [vmem:[#allocation2 + $0x28] sm:$0xf] %v354
      %373 = vst [vmem:[#allocation2 + $0x30] sm:$0xf] %v355
      %374 = vst [vmem:[#allocation2 + $0x38] sm:$0xf] %v356
      %vm375 = vcmask 240640
      %376 = vst.msk [vmem:[#allocation2 + $0x40] sm:$0xf] %vm375, %v357
      %v377 = vld [vmem:[%s325] sm:$0xff]
      %v378 = vld [vmem:[%s325 + $0x8] sm:$0xff]
      %v379 = vld [vmem:[%s325 + $0x10] sm:$0xff]
      %v380 = vld [vmem:[%s325 + $0x18] sm:$0xff]
      %v381 = vld [vmem:[%s325 + $0x20] sm:$0xf]
      %v387 = vunpack.c.l.b16 %v377
      %v388 = vunpack.c.h.b16 %v377
      %v389 = vunpack.c.l.b16 %v378
      %v390 = vunpack.c.h.b16 %v378
      %v391 = vunpack.c.l.b16 %v379
      %v392 = vunpack.c.h.b16 %v379
      %v393 = vunpack.c.l.b16 %v380
      %v394 = vunpack.c.h.b16 %v380
      %v395 = vunpack.c.l.b16 %v381
      %v396 = vpack.c.b16 %v387, %v387
      %v397 = vpack.c.b16 %v388, %v388
      %v398 = vpack.c.b16 %v389, %v389
      %v399 = vpack.c.b16 %v390, %v390
      %v400 = vpack.c.b16 %v391, %v391
      %v401 = vpack.c.b16 %v392, %v392
      %v402 = vpack.c.b16 %v393, %v393
      %v403 = vpack.c.b16 %v394, %v394
      %v404 = vpack.c.b16 %v395, %v395
      %405 = vrot.lane.b32.xlu0 %v396, 127
      %v406 = vpop.permute.xlu0 %405
      %407 = vrot.lane.b32.xlu0 %v397, 127
      %v408 = vpop.permute.xlu0 %407
      %409 = vrot.lane.b32.xlu0 %v398, 127
      %v410 = vpop.permute.xlu0 %409
      %411 = vrot.lane.b32.xlu0 %v399, 127
      %v412 = vpop.permute.xlu0 %411
      %413 = vrot.lane.b32.xlu0 %v400, 127
      %v414 = vpop.permute.xlu0 %413
      %415 = vrot.lane.b32.xlu0 %v401, 127
      %v416 = vpop.permute.xlu0 %415
      %417 = vrot.lane.b32.xlu0 %v402, 127
      %v418 = vpop.permute.xlu0 %417
      %419 = vrot.lane.b32.xlu0 %v403, 127
      %v420 = vpop.permute.xlu0 %419
      %421 = vrot.lane.b32.xlu0 %v404, 127
      %v422 = vpop.permute.xlu0 %421
      %vm423 = vcmask 1039360
      %v424 = vsel %vm423, %v406, %v408
      %v425 = vsel %vm423, %v408, %v410
      %v426 = vsel %vm423, %v410, %v412
      %v427 = vsel %vm423, %v412, %v414
      %v428 = vsel %vm423, %v414, %v416
      %v429 = vsel %vm423, %v416, %v418
      %v430 = vsel %vm423, %v418, %v420
      %v431 = vsel %vm423, %v420, %v422
      %441 = vst [vmem:[#allocation2] sm:$0xf0] %v424
      %442 = vst [vmem:[#allocation2 + $0x8] sm:$0xf0] %v425
      %443 = vst [vmem:[#allocation2 + $0x10] sm:$0xf0] %v426
      %444 = vst [vmem:[#allocation2 + $0x18] sm:$0xf0] %v427
      %445 = vst [vmem:[#allocation2 + $0x20] sm:$0xf0] %v428
      %446 = vst [vmem:[#allocation2 + $0x28] sm:$0xf0] %v429
      %447 = vst [vmem:[#allocation2 + $0x30] sm:$0xf0] %v430
      %448 = vst [vmem:[#allocation2 + $0x38] sm:$0xf0] %v431
      %vm449 = vcmask 244740
      %450 = vst.msk [vmem:[#allocation2 + $0x40] sm:$0xf0] %vm449, %v422
      %v451 = vld [vmem:[%s325] sm:$0xff]
      %v452 = vld [vmem:[%s325 + $0x8] sm:$0xff]
      %v453 = vld [vmem:[%s325 + $0x10] sm:$0xff]
      %v454 = vld [vmem:[%s325 + $0x18] sm:$0xff]
      %v455 = vld [vmem:[%s325 + $0x20] sm:$0xf]
      %v461 = vunpack.c.l.b16 %v451
      %v462 = vunpack.c.h.b16 %v451
      %v463 = vunpack.c.l.b16 %v452
      %v464 = vunpack.c.h.b16 %v452
      %v465 = vunpack.c.l.b16 %v453
      %v466 = vunpack.c.h.b16 %v453
      %v467 = vunpack.c.l.b16 %v454
      %v468 = vunpack.c.h.b16 %v454
      %v469 = vunpack.c.l.b16 %v455
      %v470 = vpack.c.b16 %v461, %v461
      %v471 = vpack.c.b16 %v462, %v462
      %v472 = vpack.c.b16 %v463, %v463
      %v473 = vpack.c.b16 %v464, %v464
      %v474 = vpack.c.b16 %v465, %v465
      %v475 = vpack.c.b16 %v466, %v466
      %v476 = vpack.c.b16 %v467, %v467
      %v477 = vpack.c.b16 %v468, %v468
      %v478 = vpack.c.b16 %v469, %v469
      %479 = vrot.lane.b32.xlu0 %v470, 126
      %v480 = vpop.permute.xlu0 %479
      %481 = vrot.lane.b32.xlu0 %v471, 126
      %v482 = vpop.permute.xlu0 %481
      %483 = vrot.lane.b32.xlu0 %v472, 126
      %v484 = vpop.permute.xlu0 %483
      %485 = vrot.lane.b32.xlu0 %v473, 126
      %v486 = vpop.permute.xlu0 %485
      %487 = vrot.lane.b32.xlu0 %v474, 126
      %v488 = vpop.permute.xlu0 %487
      %489 = vrot.lane.b32.xlu0 %v475, 126
      %v490 = vpop.permute.xlu0 %489
      %491 = vrot.lane.b32.xlu0 %v476, 126
      %v492 = vpop.permute.xlu0 %491
      %493 = vrot.lane.b32.xlu0 %v477, 126
      %v494 = vpop.permute.xlu0 %493
      %495 = vrot.lane.b32.xlu0 %v478, 126
      %v496 = vpop.permute.xlu0 %495
      %vm497 = vcmask 1031168
      %v498 = vsel %vm497, %v480, %v482
      %v499 = vsel %vm497, %v482, %v484
      %v500 = vsel %vm497, %v484, %v486
      %v501 = vsel %vm497, %v486, %v488
      %v502 = vsel %vm497, %v488, %v490
      %v503 = vsel %vm497, %v490, %v492
      %v504 = vsel %vm497, %v492, %v494
      %v505 = vsel %vm497, %v494, %v496
      %515 = vst [vmem:[#allocation2 + $0x48] sm:$0xf] %v498
      %516 = vst [vmem:[#allocation2 + $0x50] sm:$0xf] %v499
      %517 = vst [vmem:[#allocation2 + $0x58] sm:$0xf] %v500
      %518 = vst [vmem:[#allocation2 + $0x60] sm:$0xf] %v501
      %519 = vst [vmem:[#allocation2 + $0x68] sm:$0xf] %v502
      %520 = vst [vmem:[#allocation2 + $0x70] sm:$0xf] %v503
      %521 = vst [vmem:[#allocation2 + $0x78] sm:$0xf] %v504
      %522 = vst [vmem:[#allocation2 + $0x80] sm:$0xf] %v505
      %523 = vst.msk [vmem:[#allocation2 + $0x88] sm:$0xf] %vm375, %v496
      %v524 = vld [vmem:[%s325] sm:$0xff]
      %v525 = vld [vmem:[%s325 + $0x8] sm:$0xff]
      %v526 = vld [vmem:[%s325 + $0x10] sm:$0xff]
      %v527 = vld [vmem:[%s325 + $0x18] sm:$0xff]
      %v528 = vld [vmem:[%s325 + $0x20] sm:$0xf]
      %v534 = vunpack.c.l.b16 %v524
      %v535 = vunpack.c.h.b16 %v524
      %v536 = vunpack.c.l.b16 %v525
      %v537 = vunpack.c.h.b16 %v525
      %v538 = vunpack.c.l.b16 %v526
      %v539 = vunpack.c.h.b16 %v526
      %v540 = vunpack.c.l.b16 %v527
      %v541 = vunpack.c.h.b16 %v527
      %v542 = vunpack.c.l.b16 %v528
      %v543 = vpack.c.b16 %v534, %v534
      %v544 = vpack.c.b16 %v535, %v535
      %v545 = vpack.c.b16 %v536, %v536
      %v546 = vpack.c.b16 %v537, %v537
      %v547 = vpack.c.b16 %v538, %v538
      %v548 = vpack.c.b16 %v539, %v539
      %v549 = vpack.c.b16 %v540, %v540
      %v550 = vpack.c.b16 %v541, %v541
      %v551 = vpack.c.b16 %v542, %v542
      %552 = vrot.lane.b32.xlu0 %v543, 125
      %v553 = vpop.permute.xlu0 %552
      %554 = vrot.lane.b32.xlu0 %v544, 125
      %v555 = vpop.permute.xlu0 %554
      %556 = vrot.lane.b32.xlu0 %v545, 125
      %v557 = vpop.permute.xlu0 %556
      %558 = vrot.lane.b32.xlu0 %v546, 125
      %v559 = vpop.permute.xlu0 %558
      %560 = vrot.lane.b32.xlu0 %v547, 125
      %v561 = vpop.permute.xlu0 %560
      %562 = vrot.lane.b32.xlu0 %v548, 125
      %v563 = vpop.permute.xlu0 %562
      %564 = vrot.lane.b32.xlu0 %v549, 125
      %v565 = vpop.permute.xlu0 %564
      %566 = vrot.lane.b32.xlu0 %v550, 125
      %v567 = vpop.permute.xlu0 %566
      %568 = vrot.lane.b32.xlu0 %v551, 125
      %v569 = vpop.permute.xlu0 %568
      %vm570 = vcmask 1022976
      %v571 = vsel %vm570, %v553, %v555
      %v572 = vsel %vm570, %v555, %v557
      %v573 = vsel %vm570, %v557, %v559
      %v574 = vsel %vm570, %v559, %v561
      %v575 = vsel %vm570, %v561, %v563
      %v576 = vsel %vm570, %v563, %v565
      %v577 = vsel %vm570, %v565, %v567
      %v578 = vsel %vm570, %v567, %v569
      %588 = vst [vmem:[#allocation2 + $0x48] sm:$0xf0] %v571
      %589 = vst [vmem:[#allocation2 + $0x50] sm:$0xf0] %v572
      %590 = vst [vmem:[#allocation2 + $0x58] sm:$0xf0] %v573
      %591 = vst [vmem:[#allocation2 + $0x60] sm:$0xf0] %v574
      %592 = vst [vmem:[#allocation2 + $0x68] sm:$0xf0] %v575
      %593 = vst [vmem:[#allocation2 + $0x70] sm:$0xf0] %v576
      %594 = vst [vmem:[#allocation2 + $0x78] sm:$0xf0] %v577
      %595 = vst [vmem:[#allocation2 + $0x80] sm:$0xf0] %v578
      %596 = vst.msk [vmem:[#allocation2 + $0x88] sm:$0xf0] %vm449, %v569
      %v597 = vld [vmem:[%s325] sm:$0xff]
      %v598 = vld [vmem:[%s325 + $0x8] sm:$0xff]
      %v599 = vld [vmem:[%s325 + $0x10] sm:$0xff]
      %v600 = vld [vmem:[%s325 + $0x18] sm:$0xff]
      %v601 = vld [vmem:[%s325 + $0x20] sm:$0xf]
      %v607 = vunpack.c.l.b16 %v597
      %v608 = vunpack.c.h.b16 %v597
      %v609 = vunpack.c.l.b16 %v598
      %v610 = vunpack.c.h.b16 %v598
      %v611 = vunpack.c.l.b16 %v599
      %v612 = vunpack.c.h.b16 %v599
      %v613 = vunpack.c.l.b16 %v600
      %v614 = vunpack.c.h.b16 %v600
      %v615 = vunpack.c.l.b16 %v601
      %v616 = vpack.c.b16 %v607, %v607
      %v617 = vpack.c.b16 %v608, %v608
      %v618 = vpack.c.b16 %v609, %v609
      %v619 = vpack.c.b16 %v610, %v610
      %v620 = vpack.c.b16 %v611, %v611
      %v621 = vpack.c.b16 %v612, %v612
      %v622 = vpack.c.b16 %v613, %v613
      %v623 = vpack.c.b16 %v614, %v614
      %v624 = vpack.c.b16 %v615, %v615
      %625 = vrot.lane.b32.xlu0 %v616, 94
      %v626 = vpop.permute.xlu0 %625
      %627 = vrot.lane.b32.xlu0 %v617, 94
      %v628 = vpop.permute.xlu0 %627
      %629 = vrot.lane.b32.xlu0 %v618, 94
      %v630 = vpop.permute.xlu0 %629
      %631 = vrot.lane.b32.xlu0 %v619, 94
      %v632 = vpop.permute.xlu0 %631
      %633 = vrot.lane.b32.xlu0 %v620, 94
      %v634 = vpop.permute.xlu0 %633
      %635 = vrot.lane.b32.xlu0 %v621, 94
      %v636 = vpop.permute.xlu0 %635
      %637 = vrot.lane.b32.xlu0 %v622, 94
      %v638 = vpop.permute.xlu0 %637
      %639 = vrot.lane.b32.xlu0 %v623, 94
      %v640 = vpop.permute.xlu0 %639
      %641 = vrot.lane.b32.xlu0 %v624, 94
      %v642 = vpop.permute.xlu0 %641
      %vm643 = vcmask 769024
      %v644 = vsel %vm643, %v626, %v628
      %v645 = vsel %vm643, %v628, %v630
      %v646 = vsel %vm643, %v630, %v632
      %v647 = vsel %vm643, %v632, %v634
      %v648 = vsel %vm643, %v634, %v636
      %v649 = vsel %vm643, %v636, %v638
      %v650 = vsel %vm643, %v638, %v640
      %v651 = vsel %vm643, %v640, %v642
      %661 = vst [vmem:[#allocation2 + $0x90] sm:$0xf] %v644
      %662 = vst [vmem:[#allocation2 + $0x98] sm:$0xf] %v645
      %663 = vst [vmem:[#allocation2 + $0xa0] sm:$0xf] %v646
      %664 = vst [vmem:[#allocation2 + $0xa8] sm:$0xf] %v647
      %665 = vst [vmem:[#allocation2 + $0xb0] sm:$0xf] %v648
      %666 = vst [vmem:[#allocation2 + $0xb8] sm:$0xf] %v649
      %667 = vst [vmem:[#allocation2 + $0xc0] sm:$0xf] %v650
      %668 = vst [vmem:[#allocation2 + $0xc8] sm:$0xf] %v651
      %669 = vst.msk [vmem:[#allocation2 + $0xd0] sm:$0xf] %vm375, %v642
      %v670 = vld [vmem:[%s325] sm:$0xff]
      %v671 = vld [vmem:[%s325 + $0x8] sm:$0xff]
      %v672 = vld [vmem:[%s325 + $0x10] sm:$0xff]
      %v673 = vld [vmem:[%s325 + $0x18] sm:$0xff]
      %v674 = vld [vmem:[%s325 + $0x20] sm:$0xf]
      %v680 = vunpack.c.l.b16 %v670
      %v681 = vunpack.c.h.b16 %v670
      %v682 = vunpack.c.l.b16 %v671
      %v683 = vunpack.c.h.b16 %v671
      %v684 = vunpack.c.l.b16 %v672
      %v685 = vunpack.c.h.b16 %v672
      %v686 = vunpack.c.l.b16 %v673
      %v687 = vunpack.c.h.b16 %v673
      %v688 = vunpack.c.l.b16 %v674
      %v689 = vpack.c.b16 %v680, %v680
      %v690 = vpack.c.b16 %v681, %v681
      %v691 = vpack.c.b16 %v682, %v682
      %v692 = vpack.c.b16 %v683, %v683
      %v693 = vpack.c.b16 %v684, %v684
      %v694 = vpack.c.b16 %v685, %v685
      %v695 = vpack.c.b16 %v686, %v686
      %v696 = vpack.c.b16 %v687, %v687
      %v697 = vpack.c.b16 %v688, %v688
      %698 = vrot.lane.b32.xlu0 %v689, 93
      %v699 = vpop.permute.xlu0 %698
      %700 = vrot.lane.b32.xlu0 %v690, 93
      %v701 = vpop.permute.xlu0 %700
      %702 = vrot.lane.b32.xlu0 %v691, 93
      %v703 = vpop.permute.xlu0 %702
      %704 = vrot.lane.b32.xlu0 %v692, 93
      %v705 = vpop.permute.xlu0 %704
      %706 = vrot.lane.b32.xlu0 %v693, 93
      %v707 = vpop.permute.xlu0 %706
      %708 = vrot.lane.b32.xlu0 %v694, 93
      %v709 = vpop.permute.xlu0 %708
      %710 = vrot.lane.b32.xlu0 %v695, 93
      %v711 = vpop.permute.xlu0 %710
      %712 = vrot.lane.b32.xlu0 %v696, 93
      %v713 = vpop.permute.xlu0 %712
      %714 = vrot.lane.b32.xlu0 %v697, 93
      %v715 = vpop.permute.xlu0 %714
      %vm716 = vcmask 760832
      %v717 = vsel %vm716, %v699, %v701
      %v718 = vsel %vm716, %v701, %v703
      %v719 = vsel %vm716, %v703, %v705
      %v720 = vsel %vm716, %v705, %v707
      %v721 = vsel %vm716, %v707, %v709
      %v722 = vsel %vm716, %v709, %v711
      %v723 = vsel %vm716, %v711, %v713
      %v724 = vsel %vm716, %v713, %v715
      %734 = vst [vmem:[#allocation2 + $0x90] sm:$0xf0] %v717
      %735 = vst [vmem:[#allocation2 + $0x98] sm:$0xf0] %v718
      %736 = vst [vmem:[#allocation2 + $0xa0] sm:$0xf0] %v719
      %737 = vst [vmem:[#allocation2 + $0xa8] sm:$0xf0] %v720
      %738 = vst [vmem:[#allocation2 + $0xb0] sm:$0xf0] %v721
      %739 = vst [vmem:[#allocation2 + $0xb8] sm:$0xf0] %v722
      %740 = vst [vmem:[#allocation2 + $0xc0] sm:$0xf0] %v723
      %741 = vst [vmem:[#allocation2 + $0xc8] sm:$0xf0] %v724
      %742 = vst.msk [vmem:[#allocation2 + $0xd0] sm:$0xf0] %vm449, %v715
      %v743 = vld [vmem:[%s325] sm:$0xff]
      %v744 = vld [vmem:[%s325 + $0x8] sm:$0xff]
      %v745 = vld [vmem:[%s325 + $0x10] sm:$0xff]
      %v746 = vld [vmem:[%s325 + $0x18] sm:$0xff]
      %v747 = vld [vmem:[%s325 + $0x20] sm:$0xf]
      %v753 = vunpack.c.l.b16 %v743
      %v754 = vunpack.c.h.b16 %v743
      %v755 = vunpack.c.l.b16 %v744
      %v756 = vunpack.c.h.b16 %v744
      %v757 = vunpack.c.l.b16 %v745
      %v758 = vunpack.c.h.b16 %v745
      %v759 = vunpack.c.l.b16 %v746
      %v760 = vunpack.c.h.b16 %v746
      %v761 = vunpack.c.l.b16 %v747
      %v762 = vpack.c.b16 %v753, %v753
      %v763 = vpack.c.b16 %v754, %v754
      %v764 = vpack.c.b16 %v755, %v755
      %v765 = vpack.c.b16 %v756, %v756
      %v766 = vpack.c.b16 %v757, %v757
      %v767 = vpack.c.b16 %v758, %v758
      %v768 = vpack.c.b16 %v759, %v759
      %v769 = vpack.c.b16 %v760, %v760
      %v770 = vpack.c.b16 %v761, %v761
      %771 = vrot.lane.b32.xlu0 %v762, 92
      %v772 = vpop.permute.xlu0 %771
      %773 = vrot.lane.b32.xlu0 %v763, 92
      %v774 = vpop.permute.xlu0 %773
      %775 = vrot.lane.b32.xlu0 %v764, 92
      %v776 = vpop.permute.xlu0 %775
      %777 = vrot.lane.b32.xlu0 %v765, 92
      %v778 = vpop.permute.xlu0 %777
      %779 = vrot.lane.b32.xlu0 %v766, 92
      %v780 = vpop.permute.xlu0 %779
      %781 = vrot.lane.b32.xlu0 %v767, 92
      %v782 = vpop.permute.xlu0 %781
      %783 = vrot.lane.b32.xlu0 %v768, 92
      %v784 = vpop.permute.xlu0 %783
      %785 = vrot.lane.b32.xlu0 %v769, 92
      %v786 = vpop.permute.xlu0 %785
      %787 = vrot.lane.b32.xlu0 %v770, 92
      %v788 = vpop.permute.xlu0 %787
      %vm789 = vcmask 752640
      %v790 = vsel %vm789, %v772, %v774
      %v791 = vsel %vm789, %v774, %v776
      %v792 = vsel %vm789, %v776, %v778
      %v793 = vsel %vm789, %v778, %v780
      %v794 = vsel %vm789, %v780, %v782
      %v795 = vsel %vm789, %v782, %v784
      %v796 = vsel %vm789, %v784, %v786
      %v797 = vsel %vm789, %v786, %v788
      %807 = vst [vmem:[#allocation2 + $0xd8] sm:$0xf] %v790
      %808 = vst [vmem:[#allocation2 + $0xe0] sm:$0xf] %v791
      %809 = vst [vmem:[#allocation2 + $0xe8] sm:$0xf] %v792
      %810 = vst [vmem:[#allocation2 + $0xf0] sm:$0xf] %v793
      %811 = vst [vmem:[#allocation2 + $0xf8] sm:$0xf] %v794
      %812 = vst [vmem:[#allocation2 + $0x100] sm:$0xf] %v795
      %813 = vst [vmem:[#allocation2 + $0x108] sm:$0xf] %v796
      %814 = vst [vmem:[#allocation2 + $0x110] sm:$0xf] %v797
      %815 = vst.msk [vmem:[#allocation2 + $0x118] sm:$0xf] %vm375, %v788
      %v816 = vld [vmem:[%s325] sm:$0xff]
      %v817 = vld [vmem:[%s325 + $0x8] sm:$0xff]
      %v818 = vld [vmem:[%s325 + $0x10] sm:$0xff]
      %v819 = vld [vmem:[%s325 + $0x18] sm:$0xff]
      %v820 = vld [vmem:[%s325 + $0x20] sm:$0xf]
      %v826 = vunpack.c.l.b16 %v816
      %v827 = vunpack.c.h.b16 %v816
      %v828 = vunpack.c.l.b16 %v817
      %v829 = vunpack.c.h.b16 %v817
      %v830 = vunpack.c.l.b16 %v818
      %v831 = vunpack.c.h.b16 %v818
      %v832 = vunpack.c.l.b16 %v819
      %v833 = vunpack.c.h.b16 %v819
      %v834 = vunpack.c.l.b16 %v820
      %v835 = vpack.c.b16 %v826, %v826
      %v836 = vpack.c.b16 %v827, %v827
      %v837 = vpack.c.b16 %v828, %v828
      %v838 = vpack.c.b16 %v829, %v829
      %v839 = vpack.c.b16 %v830, %v830
      %v840 = vpack.c.b16 %v831, %v831
      %v841 = vpack.c.b16 %v832, %v832
      %v842 = vpack.c.b16 %v833, %v833
      %v843 = vpack.c.b16 %v834, %v834
      %844 = vrot.lane.b32.xlu0 %v835, 91
      %v845 = vpop.permute.xlu0 %844
      %846 = vrot.lane.b32.xlu0 %v836, 91
      %v847 = vpop.permute.xlu0 %846
      %848 = vrot.lane.b32.xlu0 %v837, 91
      %v849 = vpop.permute.xlu0 %848
      %850 = vrot.lane.b32.xlu0 %v838, 91
      %v851 = vpop.permute.xlu0 %850
      %852 = vrot.lane.b32.xlu0 %v839, 91
      %v853 = vpop.permute.xlu0 %852
      %854 = vrot.lane.b32.xlu0 %v840, 91
      %v855 = vpop.permute.xlu0 %854
      %856 = vrot.lane.b32.xlu0 %v841, 91
      %v857 = vpop.permute.xlu0 %856
      %858 = vrot.lane.b32.xlu0 %v842, 91
      %v859 = vpop.permute.xlu0 %858
      %860 = vrot.lane.b32.xlu0 %v843, 91
      %v861 = vpop.permute.xlu0 %860
      %vm862 = vcmask 744448
      %v863 = vsel %vm862, %v845, %v847
      %v864 = vsel %vm862, %v847, %v849
      %v865 = vsel %vm862, %v849, %v851
      %v866 = vsel %vm862, %v851, %v853
      %v867 = vsel %vm862, %v853, %v855
      %v868 = vsel %vm862, %v855, %v857
      %v869 = vsel %vm862, %v857, %v859
      %v870 = vsel %vm862, %v859, %v861
      %880 = vst [vmem:[#allocation2 + $0xd8] sm:$0xf0] %v863
      %881 = vst [vmem:[#allocation2 + $0xe0] sm:$0xf0] %v864
      %882 = vst [vmem:[#allocation2 + $0xe8] sm:$0xf0] %v865
      %883 = vst [vmem:[#allocation2 + $0xf0] sm:$0xf0] %v866
      %884 = vst [vmem:[#allocation2 + $0xf8] sm:$0xf0] %v867
      %885 = vst [vmem:[#allocation2 + $0x100] sm:$0xf0] %v868
      %886 = vst [vmem:[#allocation2 + $0x108] sm:$0xf0] %v869
      %887 = vst [vmem:[#allocation2 + $0x110] sm:$0xf0] %v870
      %888 = vst.msk [vmem:[#allocation2 + $0x118] sm:$0xf0] %vm449, %v861
      %v889 = vld [vmem:[%s325] sm:$0xff]
      %v890 = vld [vmem:[%s325 + $0x8] sm:$0xff]
      %v891 = vld [vmem:[%s325 + $0x10] sm:$0xff]
      %v892 = vld [vmem:[%s325 + $0x18] sm:$0xff]
      %v893 = vld [vmem:[%s325 + $0x20] sm:$0xf]
      %v899 = vunpack.c.l.b16 %v889
      %v900 = vunpack.c.h.b16 %v889
      %v901 = vunpack.c.l.b16 %v890
      %v902 = vunpack.c.h.b16 %v890
      %v903 = vunpack.c.l.b16 %v891
      %v904 = vunpack.c.h.b16 %v891
      %v905 = vunpack.c.l.b16 %v892
      %v906 = vunpack.c.h.b16 %v892
      %v907 = vunpack.c.l.b16 %v893
      %v908 = vpack.c.b16 %v899, %v899
      %v909 = vpack.c.b16 %v900, %v900
      %v910 = vpack.c.b16 %v901, %v901
      %v911 = vpack.c.b16 %v902, %v902
      %v912 = vpack.c.b16 %v903, %v903
      %v913 = vpack.c.b16 %v904, %v904
      %v914 = vpack.c.b16 %v905, %v905
      %v915 = vpack.c.b16 %v906, %v906
      %v916 = vpack.c.b16 %v907, %v907
      %917 = vrot.lane.b32.xlu0 %v908, 60
      %v918 = vpop.permute.xlu0 %917
      %919 = vrot.lane.b32.xlu0 %v909, 60
      %v920 = vpop.permute.xlu0 %919
      %921 = vrot.lane.b32.xlu0 %v910, 60
      %v922 = vpop.permute.xlu0 %921
      %923 = vrot.lane.b32.xlu0 %v911, 60
      %v924 = vpop.permute.xlu0 %923
      %925 = vrot.lane.b32.xlu0 %v912, 60
      %v926 = vpop.permute.xlu0 %925
      %927 = vrot.lane.b32.xlu0 %v913, 60
      %v928 = vpop.permute.xlu0 %927
      %929 = vrot.lane.b32.xlu0 %v914, 60
      %v930 = vpop.permute.xlu0 %929
      %931 = vrot.lane.b32.xlu0 %v915, 60
      %v932 = vpop.permute.xlu0 %931
      %933 = vrot.lane.b32.xlu0 %v916, 60
      %v934 = vpop.permute.xlu0 %933
      %vm935 = vcmask 490496
      %v936 = vsel %vm935, %v918, %v920
      %v937 = vsel %vm935, %v920, %v922
      %v938 = vsel %vm935, %v922, %v924
      %v939 = vsel %vm935, %v924, %v926
      %v940 = vsel %vm935, %v926, %v928
      %v941 = vsel %vm935, %v928, %v930
      %v942 = vsel %vm935, %v930, %v932
      %v943 = vsel %vm935, %v932, %v934
      %953 = vst [vmem:[#allocation2 + $0x120] sm:$0xf] %v936
      %954 = vst [vmem:[#allocation2 + $0x128] sm:$0xf] %v937
      %955 = vst [vmem:[#allocation2 + $0x130] sm:$0xf] %v938
      %956 = vst [vmem:[#allocation2 + $0x138] sm:$0xf] %v939
      %957 = vst [vmem:[#allocation2 + $0x140] sm:$0xf] %v940
      %958 = vst [vmem:[#allocation2 + $0x148] sm:$0xf] %v941
      %959 = vst [vmem:[#allocation2 + $0x150] sm:$0xf] %v942
      %960 = vst [vmem:[#allocation2 + $0x158] sm:$0xf] %v943
      %961 = vst.msk [vmem:[#allocation2 + $0x160] sm:$0xf] %vm375, %v934
      %v962 = vld [vmem:[%s325] sm:$0xff]
      %v963 = vld [vmem:[%s325 + $0x8] sm:$0xff]
      %v964 = vld [vmem:[%s325 + $0x10] sm:$0xff]
      %v965 = vld [vmem:[%s325 + $0x18] sm:$0xff]
      %v966 = vld [vmem:[%s325 + $0x20] sm:$0xf]
      %v972 = vunpack.c.l.b16 %v962
      %v973 = vunpack.c.h.b16 %v962
      %v974 = vunpack.c.l.b16 %v963
      %v975 = vunpack.c.h.b16 %v963
      %v976 = vunpack.c.l.b16 %v964
      %v977 = vunpack.c.h.b16 %v964
      %v978 = vunpack.c.l.b16 %v965
      %v979 = vunpack.c.h.b16 %v965
      %v980 = vunpack.c.l.b16 %v966
      %v981 = vpack.c.b16 %v972, %v972
      %v982 = vpack.c.b16 %v973, %v973
      %v983 = vpack.c.b16 %v974, %v974
      %v984 = vpack.c.b16 %v975, %v975
      %v985 = vpack.c.b16 %v976, %v976
      %v986 = vpack.c.b16 %v977, %v977
      %v987 = vpack.c.b16 %v978, %v978
      %v988 = vpack.c.b16 %v979, %v979
      %v989 = vpack.c.b16 %v980, %v980
      %990 = vrot.lane.b32.xlu0 %v981, 59
      %v991 = vpop.permute.xlu0 %990
      %992 = vrot.lane.b32.xlu0 %v982, 59
      %v993 = vpop.permute.xlu0 %992
      %994 = vrot.lane.b32.xlu0 %v983, 59
      %v995 = vpop.permute.xlu0 %994
      %996 = vrot.lane.b32.xlu0 %v984, 59
      %v997 = vpop.permute.xlu0 %996
      %998 = vrot.lane.b32.xlu0 %v985, 59
      %v999 = vpop.permute.xlu0 %998
      %1000 = vrot.lane.b32.xlu0 %v986, 59
      %v1001 = vpop.permute.xlu0 %1000
      %1002 = vrot.lane.b32.xlu0 %v987, 59
      %v1003 = vpop.permute.xlu0 %1002
      %1004 = vrot.lane.b32.xlu0 %v988, 59
      %v1005 = vpop.permute.xlu0 %1004
      %1006 = vrot.lane.b32.xlu0 %v989, 59
      %v1007 = vpop.permute.xlu0 %1006
      %vm1008 = vcmask 482304
      %v1009 = vsel %vm1008, %v991, %v993
      %v1010 = vsel %vm1008, %v993, %v995
      %v1011 = vsel %vm1008, %v995, %v997
      %v1012 = vsel %vm1008, %v997, %v999
      %v1013 = vsel %vm1008, %v999, %v1001
      %v1014 = vsel %vm1008, %v1001, %v1003
      %v1015 = vsel %vm1008, %v1003, %v1005
      %v1016 = vsel %vm1008, %v1005, %v1007
      %1026 = vst [vmem:[#allocation2 + $0x120] sm:$0xf0] %v1009
      %1027 = vst [vmem:[#allocation2 + $0x128] sm:$0xf0] %v1010
      %1028 = vst [vmem:[#allocation2 + $0x130] sm:$0xf0] %v1011
      %1029 = vst [vmem:[#allocation2 + $0x138] sm:$0xf0] %v1012
      %1030 = vst [vmem:[#allocation2 + $0x140] sm:$0xf0] %v1013
      %1031 = vst [vmem:[#allocation2 + $0x148] sm:$0xf0] %v1014
      %1032 = vst [vmem:[#allocation2 + $0x150] sm:$0xf0] %v1015
      %1033 = vst [vmem:[#allocation2 + $0x158] sm:$0xf0] %v1016
      %1034 = vst.msk [vmem:[#allocation2 + $0x160] sm:$0xf0] %vm449, %v1007
      %v1035 = vld [vmem:[%s325] sm:$0xff]
      %v1036 = vld [vmem:[%s325 + $0x8] sm:$0xff]
      %v1037 = vld [vmem:[%s325 + $0x10] sm:$0xff]
      %v1038 = vld [vmem:[%s325 + $0x18] sm:$0xff]
      %v1039 = vld [vmem:[%s325 + $0x20] sm:$0xf]
      %v1045 = vunpack.c.l.b16 %v1035
      %v1046 = vunpack.c.h.b16 %v1035
      %v1047 = vunpack.c.l.b16 %v1036
      %v1048 = vunpack.c.h.b16 %v1036
      %v1049 = vunpack.c.l.b16 %v1037
      %v1050 = vunpack.c.h.b16 %v1037
      %v1051 = vunpack.c.l.b16 %v1038
      %v1052 = vunpack.c.h.b16 %v1038
      %v1053 = vunpack.c.l.b16 %v1039
      %v1054 = vpack.c.b16 %v1045, %v1045
      %v1055 = vpack.c.b16 %v1046, %v1046
      %v1056 = vpack.c.b16 %v1047, %v1047
      %v1057 = vpack.c.b16 %v1048, %v1048
      %v1058 = vpack.c.b16 %v1049, %v1049
      %v1059 = vpack.c.b16 %v1050, %v1050
      %v1060 = vpack.c.b16 %v1051, %v1051
      %v1061 = vpack.c.b16 %v1052, %v1052
      %v1062 = vpack.c.b16 %v1053, %v1053
      %1063 = vrot.lane.b32.xlu0 %v1054, 58
      %v1064 = vpop.permute.xlu0 %1063
      %1065 = vrot.lane.b32.xlu0 %v1055, 58
      %v1066 = vpop.permute.xlu0 %1065
      %1067 = vrot.lane.b32.xlu0 %v1056, 58
      %v1068 = vpop.permute.xlu0 %1067
      %1069 = vrot.lane.b32.xlu0 %v1057, 58
      %v1070 = vpop.permute.xlu0 %1069
      %1071 = vrot.lane.b32.xlu0 %v1058, 58
      %v1072 = vpop.permute.xlu0 %1071
      %1073 = vrot.lane.b32.xlu0 %v1059, 58
      %v1074 = vpop.permute.xlu0 %1073
      %1075 = vrot.lane.b32.xlu0 %v1060, 58
      %v1076 = vpop.permute.xlu0 %1075
      %1077 = vrot.lane.b32.xlu0 %v1061, 58
      %v1078 = vpop.permute.xlu0 %1077
      %1079 = vrot.lane.b32.xlu0 %v1062, 58
      %v1080 = vpop.permute.xlu0 %1079
      %vm1081 = vcmask 474112
      %v1082 = vsel %vm1081, %v1064, %v1066
      %v1083 = vsel %vm1081, %v1066, %v1068
      %v1084 = vsel %vm1081, %v1068, %v1070
      %v1085 = vsel %vm1081, %v1070, %v1072
      %v1086 = vsel %vm1081, %v1072, %v1074
      %v1087 = vsel %vm1081, %v1074, %v1076
      %v1088 = vsel %vm1081, %v1076, %v1078
      %v1089 = vsel %vm1081, %v1078, %v1080
      %1099 = vst [vmem:[#allocation2 + $0x168] sm:$0xf] %v1082
      %1100 = vst [vmem:[#allocation2 + $0x170] sm:$0xf] %v1083
      %1101 = vst [vmem:[#allocation2 + $0x178] sm:$0xf] %v1084
      %1102 = vst [vmem:[#allocation2 + $0x180] sm:$0xf] %v1085
      %1103 = vst [vmem:[#allocation2 + $0x188] sm:$0xf] %v1086
      %1104 = vst [vmem:[#allocation2 + $0x190] sm:$0xf] %v1087
      %1105 = vst [vmem:[#allocation2 + $0x198] sm:$0xf] %v1088
      %1106 = vst [vmem:[#allocation2 + $0x1a0] sm:$0xf] %v1089
      %1107 = vst.msk [vmem:[#allocation2 + $0x1a8] sm:$0xf] %vm375, %v1080
      %v1108 = vld [vmem:[%s325] sm:$0xff]
      %v1109 = vld [vmem:[%s325 + $0x8] sm:$0xff]
      %v1110 = vld [vmem:[%s325 + $0x10] sm:$0xff]
      %v1111 = vld [vmem:[%s325 + $0x18] sm:$0xff]
      %v1112 = vld [vmem:[%s325 + $0x20] sm:$0xf]
      %v1118 = vunpack.c.l.b16 %v1108
      %v1119 = vunpack.c.h.b16 %v1108
      %v1120 = vunpack.c.l.b16 %v1109
      %v1121 = vunpack.c.h.b16 %v1109
      %v1122 = vunpack.c.l.b16 %v1110
      %v1123 = vunpack.c.h.b16 %v1110
      %v1124 = vunpack.c.l.b16 %v1111
      %v1125 = vunpack.c.h.b16 %v1111
      %v1126 = vunpack.c.l.b16 %v1112
      %v1127 = vpack.c.b16 %v1118, %v1118
      %v1128 = vpack.c.b16 %v1119, %v1119
      %v1129 = vpack.c.b16 %v1120, %v1120
      %v1130 = vpack.c.b16 %v1121, %v1121
      %v1131 = vpack.c.b16 %v1122, %v1122
      %v1132 = vpack.c.b16 %v1123, %v1123
      %v1133 = vpack.c.b16 %v1124, %v1124
      %v1134 = vpack.c.b16 %v1125, %v1125
      %v1135 = vpack.c.b16 %v1126, %v1126
      %1136 = vrot.lane.b32.xlu0 %v1127, 57
      %v1137 = vpop.permute.xlu0 %1136
      %1138 = vrot.lane.b32.xlu0 %v1128, 57
      %v1139 = vpop.permute.xlu0 %1138
      %1140 = vrot.lane.b32.xlu0 %v1129, 57
      %v1141 = vpop.permute.xlu0 %1140
      %1142 = vrot.lane.b32.xlu0 %v1130, 57
      %v1143 = vpop.permute.xlu0 %1142
      %1144 = vrot.lane.b32.xlu0 %v1131, 57
      %v1145 = vpop.permute.xlu0 %1144
      %1146 = vrot.lane.b32.xlu0 %v1132, 57
      %v1147 = vpop.permute.xlu0 %1146
      %1148 = vrot.lane.b32.xlu0 %v1133, 57
      %v1149 = vpop.permute.xlu0 %1148
      %1150 = vrot.lane.b32.xlu0 %v1134, 57
      %v1151 = vpop.permute.xlu0 %1150
      %1152 = vrot.lane.b32.xlu0 %v1135, 57
      %v1153 = vpop.permute.xlu0 %1152
      %vm1154 = vcmask 465920
      %v1155 = vsel %vm1154, %v1137, %v1139
      %v1156 = vsel %vm1154, %v1139, %v1141
      %v1157 = vsel %vm1154, %v1141, %v1143
      %v1158 = vsel %vm1154, %v1143, %v1145
      %v1159 = vsel %vm1154, %v1145, %v1147
      %v1160 = vsel %vm1154, %v1147, %v1149
      %v1161 = vsel %vm1154, %v1149, %v1151
      %v1162 = vsel %vm1154, %v1151, %v1153
      %1172 = vst [vmem:[#allocation2 + $0x168] sm:$0xf0] %v1155
      %1173 = vst [vmem:[#allocation2 + $0x170] sm:$0xf0] %v1156
      %1174 = vst [vmem:[#allocation2 + $0x178] sm:$0xf0] %v1157
      %1175 = vst [vmem:[#allocation2 + $0x180] sm:$0xf0] %v1158
      %1176 = vst [vmem:[#allocation2 + $0x188] sm:$0xf0] %v1159
      %1177 = vst [vmem:[#allocation2 + $0x190] sm:$0xf0] %v1160
      %1178 = vst [vmem:[#allocation2 + $0x198] sm:$0xf0] %v1161
      %1179 = vst [vmem:[#allocation2 + $0x1a0] sm:$0xf0] %v1162
      %1180 = vst.msk [vmem:[#allocation2 + $0x1a8] sm:$0xf0] %vm449, %v1153
      %v1181 = vld [vmem:[%s325] sm:$0xff]
      %v1182 = vld [vmem:[%s325 + $0x8] sm:$0xff]
      %v1183 = vld [vmem:[%s325 + $0x10] sm:$0xff]
      %v1184 = vld [vmem:[%s325 + $0x18] sm:$0xff]
      %v1185 = vld [vmem:[%s325 + $0x20] sm:$0xff]
      %v1191 = vunpack.c.l.b16 %v1181
      %v1192 = vunpack.c.h.b16 %v1181
      %v1193 = vunpack.c.l.b16 %v1182
      %v1194 = vunpack.c.h.b16 %v1182
      %v1195 = vunpack.c.l.b16 %v1183
      %v1196 = vunpack.c.h.b16 %v1183
      %v1197 = vunpack.c.l.b16 %v1184
      %v1198 = vunpack.c.h.b16 %v1184
      %v1199 = vunpack.c.l.b16 %v1185
      %v1200 = vunpack.c.h.b16 %v1185
      %v1201 = vpack.c.b16 %v1191, %v1191
      %v1202 = vpack.c.b16 %v1192, %v1192
      %v1203 = vpack.c.b16 %v1193, %v1193
      %v1204 = vpack.c.b16 %v1194, %v1194
      %v1205 = vpack.c.b16 %v1195, %v1195
      %v1206 = vpack.c.b16 %v1196, %v1196
      %v1207 = vpack.c.b16 %v1197, %v1197
      %v1208 = vpack.c.b16 %v1198, %v1198
      %v1209 = vpack.c.b16 %v1199, %v1199
      %v1210 = vpack.c.b16 %v1200, %v1200
      %1211 = vrot.lane.b32.xlu0 %v1201, 26
      %v1212 = vpop.permute.xlu0 %1211
      %1213 = vrot.lane.b32.xlu0 %v1202, 26
      %v1214 = vpop.permute.xlu0 %1213
      %1215 = vrot.lane.b32.xlu0 %v1203, 26
      %v1216 = vpop.permute.xlu0 %1215
      %1217 = vrot.lane.b32.xlu0 %v1204, 26
      %v1218 = vpop.permute.xlu0 %1217
      %1219 = vrot.lane.b32.xlu0 %v1205, 26
      %v1220 = vpop.permute.xlu0 %1219
      %1221 = vrot.lane.b32.xlu0 %v1206, 26
      %v1222 = vpop.permute.xlu0 %1221
      %1223 = vrot.lane.b32.xlu0 %v1207, 26
      %v1224 = vpop.permute.xlu0 %1223
      %1225 = vrot.lane.b32.xlu0 %v1208, 26
      %v1226 = vpop.permute.xlu0 %1225
      %1227 = vrot.lane.b32.xlu0 %v1209, 26
      %v1228 = vpop.permute.xlu0 %1227
      %1229 = vrot.lane.b32.xlu0 %v1210, 26
      %v1230 = vpop.permute.xlu0 %1229
      %vm1231 = vcmask 211968
      %v1232 = vsel %vm1231, %v1212, %v1214
      %v1233 = vsel %vm1231, %v1214, %v1216
      %v1234 = vsel %vm1231, %v1216, %v1218
      %v1235 = vsel %vm1231, %v1218, %v1220
      %v1236 = vsel %vm1231, %v1220, %v1222
      %v1237 = vsel %vm1231, %v1222, %v1224
      %v1238 = vsel %vm1231, %v1224, %v1226
      %v1239 = vsel %vm1231, %v1226, %v1228
      %v1240 = vsel %vm1231, %v1228, %v1230
      %1250 = vst [vmem:[#allocation2 + $0x1b0] sm:$0xf] %v1232
      %1251 = vst [vmem:[#allocation2 + $0x1b8] sm:$0xf] %v1233
      %1252 = vst [vmem:[#allocation2 + $0x1c0] sm:$0xf] %v1234
      %1253 = vst [vmem:[#allocation2 + $0x1c8] sm:$0xf] %v1235
      %1254 = vst [vmem:[#allocation2 + $0x1d0] sm:$0xf] %v1236
      %1255 = vst [vmem:[#allocation2 + $0x1d8] sm:$0xf] %v1237
      %1256 = vst [vmem:[#allocation2 + $0x1e0] sm:$0xf] %v1238
      %1257 = vst [vmem:[#allocation2 + $0x1e8] sm:$0xf] %v1239
      %1258 = vst.msk [vmem:[#allocation2 + $0x1f0] sm:$0xf] %vm375, %v1240
      %v1259 = vld [vmem:[%s325] sm:$0xff]
      %v1260 = vld [vmem:[%s325 + $0x8] sm:$0xff]
      %v1261 = vld [vmem:[%s325 + $0x10] sm:$0xff]
      %v1262 = vld [vmem:[%s325 + $0x18] sm:$0xff]
      %v1263 = vld [vmem:[%s325 + $0x20] sm:$0xff]
      %v1269 = vunpack.c.l.b16 %v1259
      %v1270 = vunpack.c.h.b16 %v1259
      %v1271 = vunpack.c.l.b16 %v1260
      %v1272 = vunpack.c.h.b16 %v1260
      %v1273 = vunpack.c.l.b16 %v1261
      %v1274 = vunpack.c.h.b16 %v1261
      %v1275 = vunpack.c.l.b16 %v1262
      %v1276 = vunpack.c.h.b16 %v1262
      %v1277 = vunpack.c.l.b16 %v1263
      %v1278 = vunpack.c.h.b16 %v1263
      %v1279 = vpack.c.b16 %v1269, %v1269
      %v1280 = vpack.c.b16 %v1270, %v1270
      %v1281 = vpack.c.b16 %v1271, %v1271
      %v1282 = vpack.c.b16 %v1272, %v1272
      %v1283 = vpack.c.b16 %v1273, %v1273
      %v1284 = vpack.c.b16 %v1274, %v1274
      %v1285 = vpack.c.b16 %v1275, %v1275
      %v1286 = vpack.c.b16 %v1276, %v1276
      %v1287 = vpack.c.b16 %v1277, %v1277
      %v1288 = vpack.c.b16 %v1278, %v1278
      %1289 = vrot.lane.b32.xlu0 %v1279, 25
      %v1290 = vpop.permute.xlu0 %1289
      %1291 = vrot.lane.b32.xlu0 %v1280, 25
      %v1292 = vpop.permute.xlu0 %1291
      %1293 = vrot.lane.b32.xlu0 %v1281, 25
      %v1294 = vpop.permute.xlu0 %1293
      %1295 = vrot.lane.b32.xlu0 %v1282, 25
      %v1296 = vpop.permute.xlu0 %1295
      %1297 = vrot.lane.b32.xlu0 %v1283, 25
      %v1298 = vpop.permute.xlu0 %1297
      %1299 = vrot.lane.b32.xlu0 %v1284, 25
      %v1300 = vpop.permute.xlu0 %1299
      %1301 = vrot.lane.b32.xlu0 %v1285, 25
      %v1302 = vpop.permute.xlu0 %1301
      %1303 = vrot.lane.b32.xlu0 %v1286, 25
      %v1304 = vpop.permute.xlu0 %1303
      %1305 = vrot.lane.b32.xlu0 %v1287, 25
      %v1306 = vpop.permute.xlu0 %1305
      %1307 = vrot.lane.b32.xlu0 %v1288, 25
      %v1308 = vpop.permute.xlu0 %1307
      %vm1309 = vcmask 203776
      %v1310 = vsel %vm1309, %v1290, %v1292
      %v1311 = vsel %vm1309, %v1292, %v1294
      %v1312 = vsel %vm1309, %v1294, %v1296
      %v1313 = vsel %vm1309, %v1296, %v1298
      %v1314 = vsel %vm1309, %v1298, %v1300
      %v1315 = vsel %vm1309, %v1300, %v1302
      %v1316 = vsel %vm1309, %v1302, %v1304
      %v1317 = vsel %vm1309, %v1304, %v1306
      %v1318 = vsel %vm1309, %v1306, %v1308
      %1328 = vst [vmem:[#allocation2 + $0x1b0] sm:$0xf0] %v1310
      %1329 = vst [vmem:[#allocation2 + $0x1b8] sm:$0xf0] %v1311
      %1330 = vst [vmem:[#allocation2 + $0x1c0] sm:$0xf0] %v1312
      %1331 = vst [vmem:[#allocation2 + $0x1c8] sm:$0xf0] %v1313
      %1332 = vst [vmem:[#allocation2 + $0x1d0] sm:$0xf0] %v1314
      %1333 = vst [vmem:[#allocation2 + $0x1d8] sm:$0xf0] %v1315
      %1334 = vst [vmem:[#allocation2 + $0x1e0] sm:$0xf0] %v1316
      %1335 = vst [vmem:[#allocation2 + $0x1e8] sm:$0xf0] %v1317
      %1336 = vst.msk [vmem:[#allocation2 + $0x1f0] sm:$0xf0] %vm449, %v1318
      %v1337 = vld [vmem:[%s325] sm:$0xff]
      %v1338 = vld [vmem:[%s325 + $0x8] sm:$0xff]
      %v1339 = vld [vmem:[%s325 + $0x10] sm:$0xff]
      %v1340 = vld [vmem:[%s325 + $0x18] sm:$0xff]
      %v1341 = vld [vmem:[%s325 + $0x20] sm:$0xff]
      %v1347 = vunpack.c.l.b16 %v1337
      %v1348 = vunpack.c.h.b16 %v1337
      %v1349 = vunpack.c.l.b16 %v1338
      %v1350 = vunpack.c.h.b16 %v1338
      %v1351 = vunpack.c.l.b16 %v1339
      %v1352 = vunpack.c.h.b16 %v1339
      %v1353 = vunpack.c.l.b16 %v1340
      %v1354 = vunpack.c.h.b16 %v1340
      %v1355 = vunpack.c.l.b16 %v1341
      %v1356 = vunpack.c.h.b16 %v1341
      %v1357 = vpack.c.b16 %v1347, %v1347
      %v1358 = vpack.c.b16 %v1348, %v1348
      %v1359 = vpack.c.b16 %v1349, %v1349
      %v1360 = vpack.c.b16 %v1350, %v1350
      %v1361 = vpack.c.b16 %v1351, %v1351
      %v1362 = vpack.c.b16 %v1352, %v1352
      %v1363 = vpack.c.b16 %v1353, %v1353
      %v1364 = vpack.c.b16 %v1354, %v1354
      %v1365 = vpack.c.b16 %v1355, %v1355
      %v1366 = vpack.c.b16 %v1356, %v1356
      %1367 = vrot.lane.b32.xlu0 %v1357, 24
      %v1368 = vpop.permute.xlu0 %1367
      %1369 = vrot.lane.b32.xlu0 %v1358, 24
      %v1370 = vpop.permute.xlu0 %1369
      %1371 = vrot.lane.b32.xlu0 %v1359, 24
      %v1372 = vpop.permute.xlu0 %1371
      %1373 = vrot.lane.b32.xlu0 %v1360, 24
      %v1374 = vpop.permute.xlu0 %1373
      %1375 = vrot.lane.b32.xlu0 %v1361, 24
      %v1376 = vpop.permute.xlu0 %1375
      %1377 = vrot.lane.b32.xlu0 %v1362, 24
      %v1378 = vpop.permute.xlu0 %1377
      %1379 = vrot.lane.b32.xlu0 %v1363, 24
      %v1380 = vpop.permute.xlu0 %1379
      %1381 = vrot.lane.b32.xlu0 %v1364, 24
      %v1382 = vpop.permute.xlu0 %1381
      %1383 = vrot.lane.b32.xlu0 %v1365, 24
      %v1384 = vpop.permute.xlu0 %1383
      %1385 = vrot.lane.b32.xlu0 %v1366, 24
      %v1386 = vpop.permute.xlu0 %1385
      %vm1387 = vcmask 195584
      %v1388 = vsel %vm1387, %v1368, %v1370
      %v1389 = vsel %vm1387, %v1370, %v1372
      %v1390 = vsel %vm1387, %v1372, %v1374
      %v1391 = vsel %vm1387, %v1374, %v1376
      %v1392 = vsel %vm1387, %v1376, %v1378
      %v1393 = vsel %vm1387, %v1378, %v1380
      %v1394 = vsel %vm1387, %v1380, %v1382
      %v1395 = vsel %vm1387, %v1382, %v1384
      %v1396 = vsel %vm1387, %v1384, %v1386
      %1406 = vst [vmem:[#allocation2 + $0x1f8] sm:$0xf] %v1388
      %1407 = vst [vmem:[#allocation2 + $0x200] sm:$0xf] %v1389
      %1408 = vst [vmem:[#allocation2 + $0x208] sm:$0xf] %v1390
      %1409 = vst [vmem:[#allocation2 + $0x210] sm:$0xf] %v1391
      %1410 = vst [vmem:[#allocation2 + $0x218] sm:$0xf] %v1392
      %1411 = vst [vmem:[#allocation2 + $0x220] sm:$0xf] %v1393
      %1412 = vst [vmem:[#allocation2 + $0x228] sm:$0xf] %v1394
      %1413 = vst [vmem:[#allocation2 + $0x230] sm:$0xf] %v1395
      %1414 = vst.msk [vmem:[#allocation2 + $0x238] sm:$0xf] %vm375, %v1396
      %v1415 = vld [vmem:[%s325] sm:$0xff]
      %v1416 = vld [vmem:[%s325 + $0x8] sm:$0xff]
      %v1417 = vld [vmem:[%s325 + $0x10] sm:$0xff]
      %v1418 = vld [vmem:[%s325 + $0x18] sm:$0xff]
      %v1419 = vld [vmem:[%s325 + $0x20] sm:$0xff]
      %v1425 = vunpack.c.l.b16 %v1415
      %v1426 = vunpack.c.h.b16 %v1415
      %v1427 = vunpack.c.l.b16 %v1416
      %v1428 = vunpack.c.h.b16 %v1416
      %v1429 = vunpack.c.l.b16 %v1417
      %v1430 = vunpack.c.h.b16 %v1417
      %v1431 = vunpack.c.l.b16 %v1418
      %v1432 = vunpack.c.h.b16 %v1418
      %v1433 = vunpack.c.l.b16 %v1419
      %v1434 = vunpack.c.h.b16 %v1419
      %v1435 = vpack.c.b16 %v1425, %v1425
      %v1436 = vpack.c.b16 %v1426, %v1426
      %v1437 = vpack.c.b16 %v1427, %v1427
      %v1438 = vpack.c.b16 %v1428, %v1428
      %v1439 = vpack.c.b16 %v1429, %v1429
      %v1440 = vpack.c.b16 %v1430, %v1430
      %v1441 = vpack.c.b16 %v1431, %v1431
      %v1442 = vpack.c.b16 %v1432, %v1432
      %v1443 = vpack.c.b16 %v1433, %v1433
      %v1444 = vpack.c.b16 %v1434, %v1434
      %1445 = vrot.lane.b32.xlu0 %v1435, 23
      %v1446 = vpop.permute.xlu0 %1445
      %1447 = vrot.lane.b32.xlu0 %v1436, 23
      %v1448 = vpop.permute.xlu0 %1447
      %1449 = vrot.lane.b32.xlu0 %v1437, 23
      %v1450 = vpop.permute.xlu0 %1449
      %1451 = vrot.lane.b32.xlu0 %v1438, 23
      %v1452 = vpop.permute.xlu0 %1451
      %1453 = vrot.lane.b32.xlu0 %v1439, 23
      %v1454 = vpop.permute.xlu0 %1453
      %1455 = vrot.lane.b32.xlu0 %v1440, 23
      %v1456 = vpop.permute.xlu0 %1455
      %1457 = vrot.lane.b32.xlu0 %v1441, 23
      %v1458 = vpop.permute.xlu0 %1457
      %1459 = vrot.lane.b32.xlu0 %v1442, 23
      %v1460 = vpop.permute.xlu0 %1459
      %1461 = vrot.lane.b32.xlu0 %v1443, 23
      %v1462 = vpop.permute.xlu0 %1461
      %1463 = vrot.lane.b32.xlu0 %v1444, 23
      %v1464 = vpop.permute.xlu0 %1463
      %vm1465 = vcmask 187392
      %v1466 = vsel %vm1465, %v1446, %v1448
      %v1467 = vsel %vm1465, %v1448, %v1450
      %v1468 = vsel %vm1465, %v1450, %v1452
      %v1469 = vsel %vm1465, %v1452, %v1454
      %v1470 = vsel %vm1465, %v1454, %v1456
      %v1471 = vsel %vm1465, %v1456, %v1458
      %v1472 = vsel %vm1465, %v1458, %v1460
      %v1473 = vsel %vm1465, %v1460, %v1462
      %v1474 = vsel %vm1465, %v1462, %v1464
      %1484 = vst [vmem:[#allocation2 + $0x1f8] sm:$0xf0] %v1466
      %1485 = vst [vmem:[#allocation2 + $0x200] sm:$0xf0] %v1467
      %1486 = vst [vmem:[#allocation2 + $0x208] sm:$0xf0] %v1468
      %1487 = vst [vmem:[#allocation2 + $0x210] sm:$0xf0] %v1469
      %1488 = vst [vmem:[#allocation2 + $0x218] sm:$0xf0] %v1470
      %1489 = vst [vmem:[#allocation2 + $0x220] sm:$0xf0] %v1471
      %1490 = vst [vmem:[#allocation2 + $0x228] sm:$0xf0] %v1472
      %1491 = vst [vmem:[#allocation2 + $0x230] sm:$0xf0] %v1473
      %1492 = vst.msk [vmem:[#allocation2 + $0x238] sm:$0xf0] %vm449, %v1474
      %v1493 = vld [vmem:[%s1] sm:$0xf]
      %v1494 = vld [vmem:[#allocation2] sm:$0xff]
      %v1495 = vld [vmem:[#allocation2 + $0x8] sm:$0xff]
      %v1496 = vld [vmem:[#allocation2 + $0x10] sm:$0xff]
      %v1497 = vld [vmem:[#allocation2 + $0x18] sm:$0xff]
      %v1498 = vld [vmem:[#allocation2 + $0x20] sm:$0xff]
      %v1499 = vld [vmem:[#allocation2 + $0x28] sm:$0xff]
      %v1500 = vld [vmem:[#allocation2 + $0x30] sm:$0xff]
      %v1501 = vld [vmem:[#allocation2 + $0x38] sm:$0xff]
      %v1502 = vld [vmem:[#allocation2 + $0x40] sm:$0xff]
      %v1503 = vld [vmem:[#allocation2 + $0x48] sm:$0xff]
      %v1504 = vld [vmem:[#allocation2 + $0x50] sm:$0xff]
      %v1505 = vld [vmem:[#allocation2 + $0x58] sm:$0xff]
      %v1506 = vld [vmem:[#allocation2 + $0x60] sm:$0xff]
      %v1507 = vld [vmem:[#allocation2 + $0x68] sm:$0xff]
      %v1508 = vld [vmem:[#allocation2 + $0x70] sm:$0xff]
      %v1509 = vld [vmem:[#allocation2 + $0x78] sm:$0xff]
      %v1510 = vld [vmem:[#allocation2 + $0x80] sm:$0xff]
      %v1511 = vld [vmem:[#allocation2 + $0x88] sm:$0xff]
      %v1512 = vld [vmem:[#allocation2 + $0x90] sm:$0xff]
      %v1513 = vld [vmem:[#allocation2 + $0x98] sm:$0xff]
      %v1514 = vld [vmem:[#allocation2 + $0xa0] sm:$0xff]
      %v1515 = vld [vmem:[#allocation2 + $0xa8] sm:$0xff]
      %v1516 = vld [vmem:[#allocation2 + $0xb0] sm:$0xff]
      %v1517 = vld [vmem:[#allocation2 + $0xb8] sm:$0xff]
      %v1518 = vld [vmem:[#allocation2 + $0xc0] sm:$0xff]
      %v1519 = vld [vmem:[#allocation2 + $0xc8] sm:$0xff]
      %v1520 = vld [vmem:[#allocation2 + $0xd0] sm:$0xff]
      %v1521 = vld [vmem:[#allocation2 + $0xd8] sm:$0xff]
      %v1522 = vld [vmem:[#allocation2 + $0xe0] sm:$0xff]
      %v1523 = vld [vmem:[#allocation2 + $0xe8] sm:$0xff]
      %v1524 = vld [vmem:[#allocation2 + $0xf0] sm:$0xff]
      %v1525 = vld [vmem:[#allocation2 + $0xf8] sm:$0xff]
      %v1526 = vld [vmem:[#allocation2 + $0x100] sm:$0xff]
      %v1527 = vld [vmem:[#allocation2 + $0x108] sm:$0xff]
      %v1528 = vld [vmem:[#allocation2 + $0x110] sm:$0xff]
      %v1529 = vld [vmem:[#allocation2 + $0x118] sm:$0xff]
      %v1530 = vld [vmem:[#allocation2 + $0x120] sm:$0xff]
      %v1531 = vld [vmem:[#allocation2 + $0x128] sm:$0xff]
      %v1532 = vld [vmem:[#allocation2 + $0x130] sm:$0xff]
      %v1533 = vld [vmem:[#allocation2 + $0x138] sm:$0xff]
      %v1534 = vld [vmem:[#allocation2 + $0x140] sm:$0xff]
      %v1535 = vld [vmem:[#allocation2 + $0x148] sm:$0xff]
      %v1536 = vld [vmem:[#allocation2 + $0x150] sm:$0xff]
      %v1537 = vld [vmem:[#allocation2 + $0x158] sm:$0xff]
      %v1538 = vld [vmem:[#allocation2 + $0x160] sm:$0xff]
      %v1539 = vld [vmem:[#allocation2 + $0x168] sm:$0xff]
      %v1540 = vld [vmem:[#allocation2 + $0x170] sm:$0xff]
      %v1541 = vld [vmem:[#allocation2 + $0x178] sm:$0xff]
      %v1542 = vld [vmem:[#allocation2 + $0x180] sm:$0xff]
      %v1543 = vld [vmem:[#allocation2 + $0x188] sm:$0xff]
      %v1544 = vld [vmem:[#allocation2 + $0x190] sm:$0xff]
      %v1545 = vld [vmem:[#allocation2 + $0x198] sm:$0xff]
      %v1546 = vld [vmem:[#allocation2 + $0x1a0] sm:$0xff]
      %v1547 = vld [vmem:[#allocation2 + $0x1a8] sm:$0xff]
      %v1548 = vld [vmem:[#allocation2 + $0x1b0] sm:$0xff]
      %v1549 = vld [vmem:[#allocation2 + $0x1b8] sm:$0xff]
      %v1550 = vld [vmem:[#allocation2 + $0x1c0] sm:$0xff]
      %v1551 = vld [vmem:[#allocation2 + $0x1c8] sm:$0xff]
      %v1552 = vld [vmem:[#allocation2 + $0x1d0] sm:$0xff]
      %v1553 = vld [vmem:[#allocation2 + $0x1d8] sm:$0xff]
      %v1554 = vld [vmem:[#allocation2 + $0x1e0] sm:$0xff]
      %v1555 = vld [vmem:[#allocation2 + $0x1e8] sm:$0xff]
      %v1556 = vld [vmem:[#allocation2 + $0x1f0] sm:$0xff]
      %v1557 = vld [vmem:[#allocation2 + $0x1f8] sm:$0xff]
      %v1558 = vld [vmem:[#allocation2 + $0x200] sm:$0xff]
      %v1559 = vld [vmem:[#allocation2 + $0x208] sm:$0xff]
      %v1560 = vld [vmem:[#allocation2 + $0x210] sm:$0xff]
      %v1561 = vld [vmem:[#allocation2 + $0x218] sm:$0xff]
      %v1562 = vld [vmem:[#allocation2 + $0x220] sm:$0xff]
      %v1563 = vld [vmem:[#allocation2 + $0x228] sm:$0xff]
      %v1564 = vld [vmem:[#allocation2 + $0x230] sm:$0xff]
      %v1565 = vld [vmem:[#allocation2 + $0x238] sm:$0xff]
      %v1566 = vld [vmem:[%s2] sm:$0xff]
      %1568 = vset.pattern.permute.xlu0 0
      %1569 = vperm.xlu0 %1568, %v1566
      %v1570 = vpop.permute.xlu0 %1569
      %1572 = vmatprep.subr.bf16.mxu0 %v1495
      %1573 = vmatpush1.bf16.msra.mxu0 %v1494
      %1574 = vmatprep.subr.bf16.mxu0 %v1504
      %1575 = vmatpush1.bf16.msra.mxu0 %v1503
      %1576 = vmatprep.subr.bf16.mxu0 %v1513
      %1577 = vmatpush1.bf16.msra.mxu0 %v1512
      %1578 = vmatprep.subr.bf16.mxu0 %v1522
      %1579 = vmatpush1.bf16.msra.mxu0 %v1521
      %1580 = vmatprep.subr.bf16.mxu0 %v1531
      %1581 = vmatpush1.bf16.msra.mxu0 %v1530
      %1582 = vmatprep.subr.bf16.mxu0 %v1540
      %1583 = vmatpush1.bf16.msra.mxu0 %v1539
      %1584 = vmatprep.subr.bf16.mxu0 %v1549
      %1585 = vmatpush1.bf16.msra.mxu0 %v1548
      %1586 = vmatprep.subr.bf16.mxu0 %v1558
      %1587 = vmatpush1.bf16.msra.mxu0 %v1557
      %1588 = vmatprep.subr.bf16.mxu0 0
      %1589 = vmatpush1.bf16.msra.mxu0 0
      %1590 = vmatprep.subr.bf16.mxu0 0
      %1591 = vmatpush1.bf16.msra.mxu0 0
      %1592 = vmatprep.subr.bf16.mxu0 0
      %1593 = vmatpush1.bf16.msra.mxu0 0
      %1594 = vmatprep.subr.bf16.mxu0 0
      %1595 = vmatpush1.bf16.msra.mxu0 0
      %1596 = vmatprep.subr.bf16.mxu0 0
      %1597 = vmatpush1.bf16.msra.mxu0 0
      %1598 = vmatprep.subr.bf16.mxu0 0
      %1599 = vmatpush1.bf16.msra.mxu0 0
      %1600 = vmatprep.subr.bf16.mxu0 0
      %1601 = vmatpush1.bf16.msra.mxu0 0
      %1602 = vmatprep.subr.bf16.mxu0 0
      %1603 = vmatpush1.bf16.msra.mxu0 0
      %1604 = vmatprep.mubr.bf16.mxu0 0
      %1605 = vmatmul.mubr.bf16.gmra.mrb[0].mxu0 %v1493
      %v1606 = vpop.f32.mrb[0].mxu0
      %v1607 = vadd.f32 %v1570, %v1606
      %v1608 = vpop.f32.mrb[0].mxu0
      %v1609 = vadd.f32 %v1570, %v1608
      %v1610 = vpop.f32.mrb[0].mxu0
      %v1611 = vpop.f32.mrb[0].mxu0
      %1612 = vdwg.mxu0
      %1613 = vmatprep.subr.bf16.mxu0 %v1497
      %1614 = vmatpush1.bf16.msra.mxu0 %v1496
      %1615 = vmatprep.subr.bf16.mxu0 %v1506
      %1616 = vmatpush1.bf16.msra.mxu0 %v1505
      %1617 = vmatprep.subr.bf16.mxu0 %v1515
      %1618 = vmatpush1.bf16.msra.mxu0 %v1514
      %1619 = vmatprep.subr.bf16.mxu0 %v1524
      %1620 = vmatpush1.bf16.msra.mxu0 %v1523
      %1621 = vmatprep.subr.bf16.mxu0 %v1533
      %1622 = vmatpush1.bf16.msra.mxu0 %v1532
      %1623 = vmatprep.subr.bf16.mxu0 %v1542
      %1624 = vmatpush1.bf16.msra.mxu0 %v1541
      %1625 = vmatprep.subr.bf16.mxu0 %v1551
      %1626 = vmatpush1.bf16.msra.mxu0 %v1550
      %1627 = vmatprep.subr.bf16.mxu0 %v1560
      %1628 = vmatpush1.bf16.msra.mxu0 %v1559
      %1629 = vmatprep.subr.bf16.mxu0 0
      %1630 = vmatpush1.bf16.msra.mxu0 0
      %1631 = vmatprep.subr.bf16.mxu0 0
      %1632 = vmatpush1.bf16.msra.mxu0 0
      %1633 = vmatprep.subr.bf16.mxu0 0
      %1634 = vmatpush1.bf16.msra.mxu0 0
      %1635 = vmatprep.subr.bf16.mxu0 0
      %1636 = vmatpush1.bf16.msra.mxu0 0
      %1637 = vmatprep.subr.bf16.mxu0 0
      %1638 = vmatpush1.bf16.msra.mxu0 0
      %1639 = vmatprep.subr.bf16.mxu0 0
      %1640 = vmatpush1.bf16.msra.mxu0 0
      %1641 = vmatprep.subr.bf16.mxu0 0
      %1642 = vmatpush1.bf16.msra.mxu0 0
      %1643 = vmatprep.subr.bf16.mxu0 0
      %1644 = vmatpush1.bf16.msra.mxu0 0
      %1645 = vmatprep.mubr.bf16.mxu0 0
      %1646 = vmatmul.mubr.bf16.gmra.mrb[0].mxu0 %v1493
      %v1647 = vpop.f32.mrb[0].mxu0
      %v1648 = vadd.f32 %v1570, %v1647
      %v1649 = vpop.f32.mrb[0].mxu0
      %v1650 = vadd.f32 %v1570, %v1649
      %v1651 = vpop.f32.mrb[0].mxu0
      %v1652 = vpop.f32.mrb[0].mxu0
      %1653 = vdwg.mxu0
      %1654 = vmatprep.subr.bf16.mxu0 %v1499
      %1655 = vmatpush1.bf16.msra.mxu0 %v1498
      %1656 = vmatprep.subr.bf16.mxu0 %v1508
      %1657 = vmatpush1.bf16.msra.mxu0 %v1507
      %1658 = vmatprep.subr.bf16.mxu0 %v1517
      %1659 = vmatpush1.bf16.msra.mxu0 %v1516
      %1660 = vmatprep.subr.bf16.mxu0 %v1526
      %1661 = vmatpush1.bf16.msra.mxu0 %v1525
      %1662 = vmatprep.subr.bf16.mxu0 %v1535
      %1663 = vmatpush1.bf16.msra.mxu0 %v1534
      %1664 = vmatprep.subr.bf16.mxu0 %v1544
      %1665 = vmatpush1.bf16.msra.mxu0 %v1543
      %1666 = vmatprep.subr.bf16.mxu0 %v1553
      %1667 = vmatpush1.bf16.msra.mxu0 %v1552
      %1668 = vmatprep.subr.bf16.mxu0 %v1562
      %1669 = vmatpush1.bf16.msra.mxu0 %v1561
      %1670 = vmatprep.subr.bf16.mxu0 0
      %1671 = vmatpush1.bf16.msra.mxu0 0
      %1672 = vmatprep.subr.bf16.mxu0 0
      %1673 = vmatpush1.bf16.msra.mxu0 0
      %1674 = vmatprep.subr.bf16.mxu0 0
      %1675 = vmatpush1.bf16.msra.mxu0 0
      %1676 = vmatprep.subr.bf16.mxu0 0
      %1677 = vmatpush1.bf16.msra.mxu0 0
      %1678 = vmatprep.subr.bf16.mxu0 0
      %1679 = vmatpush1.bf16.msra.mxu0 0
      %1680 = vmatprep.subr.bf16.mxu0 0
      %1681 = vmatpush1.bf16.msra.mxu0 0
      %1682 = vmatprep.subr.bf16.mxu0 0
      %1683 = vmatpush1.bf16.msra.mxu0 0
      %1684 = vmatprep.subr.bf16.mxu0 0
      %1685 = vmatpush1.bf16.msra.mxu0 0
      %1686 = vmatprep.mubr.bf16.mxu0 0
      %1687 = vmatmul.mubr.bf16.gmra.mrb[0].mxu0 %v1493
      %v1688 = vpop.f32.mrb[0].mxu0
      %v1689 = vadd.f32 %v1570, %v1688
      %v1690 = vpop.f32.mrb[0].mxu0
      %v1691 = vadd.f32 %v1570, %v1690
      %v1692 = vpop.f32.mrb[0].mxu0
      %v1693 = vpop.f32.mrb[0].mxu0
      %1694 = vdwg.mxu0
      %1695 = vmatprep.subr.bf16.mxu0 %v1501
      %1696 = vmatpush1.bf16.msra.mxu0 %v1500
      %1697 = vmatprep.subr.bf16.mxu0 %v1510
      %1698 = vmatpush1.bf16.msra.mxu0 %v1509
      %1699 = vmatprep.subr.bf16.mxu0 %v1519
      %1700 = vmatpush1.bf16.msra.mxu0 %v1518
      %1701 = vmatprep.subr.bf16.mxu0 %v1528
      %1702 = vmatpush1.bf16.msra.mxu0 %v1527
      %1703 = vmatprep.subr.bf16.mxu0 %v1537
      %1704 = vmatpush1.bf16.msra.mxu0 %v1536
      %1705 = vmatprep.subr.bf16.mxu0 %v1546
      %1706 = vmatpush1.bf16.msra.mxu0 %v1545
      %1707 = vmatprep.subr.bf16.mxu0 %v1555
      %1708 = vmatpush1.bf16.msra.mxu0 %v1554
      %1709 = vmatprep.subr.bf16.mxu0 %v1564
      %1710 = vmatpush1.bf16.msra.mxu0 %v1563
      %1711 = vmatprep.subr.bf16.mxu0 0
      %1712 = vmatpush1.bf16.msra.mxu0 0
      %1713 = vmatprep.subr.bf16.mxu0 0
      %1714 = vmatpush1.bf16.msra.mxu0 0
      %1715 = vmatprep.subr.bf16.mxu0 0
      %1716 = vmatpush1.bf16.msra.mxu0 0
      %1717 = vmatprep.subr.bf16.mxu0 0
      %1718 = vmatpush1.bf16.msra.mxu0 0
      %1719 = vmatprep.subr.bf16.mxu0 0
      %1720 = vmatpush1.bf16.msra.mxu0 0
      %1721 = vmatprep.subr.bf16.mxu0 0
      %1722 = vmatpush1.bf16.msra.mxu0 0
      %1723 = vmatprep.subr.bf16.mxu0 0
      %1724 = vmatpush1.bf16.msra.mxu0 0
      %1725 = vmatprep.subr.bf16.mxu0 0
      %1726 = vmatpush1.bf16.msra.mxu0 0
      %1727 = vmatprep.mubr.bf16.mxu0 0
      %1728 = vmatmul.mubr.bf16.gmra.mrb[0].mxu0 %v1493
      %v1729 = vpop.f32.mrb[0].mxu0
      %v1730 = vadd.f32 %v1570, %v1729
      %v1731 = vpop.f32.mrb[0].mxu0
      %v1732 = vadd.f32 %v1570, %v1731
      %v1733 = vpop.f32.mrb[0].mxu0
      %v1734 = vpop.f32.mrb[0].mxu0
      %1735 = vdwg.mxu0
      %1736 = vmatprep.subr.bf16.mxu0 0
      %1737 = vmatpush1.bf16.msra.mxu0 %v1502
      %1738 = vmatprep.subr.bf16.mxu0 0
      %1739 = vmatpush1.bf16.msra.mxu0 %v1511
      %1740 = vmatprep.subr.bf16.mxu0 0
      %1741 = vmatpush1.bf16.msra.mxu0 %v1520
      %1742 = vmatprep.subr.bf16.mxu0 0
      %1743 = vmatpush1.bf16.msra.mxu0 %v1529
      %1744 = vmatprep.subr.bf16.mxu0 0
      %1745 = vmatpush1.bf16.msra.mxu0 %v1538
      %1746 = vmatprep.subr.bf16.mxu0 0
      %1747 = vmatpush1.bf16.msra.mxu0 %v1547
      %1748 = vmatprep.subr.bf16.mxu0 0
      %1749 = vmatpush1.bf16.msra.mxu0 %v1556
      %1750 = vmatprep.subr.bf16.mxu0 0
      %1751 = vmatpush1.bf16.msra.mxu0 %v1565
      %1752 = vmatprep.subr.bf16.mxu0 0
      %1753 = vmatpush1.bf16.msra.mxu0 0
      %1754 = vmatprep.subr.bf16.mxu0 0
      %1755 = vmatpush1.bf16.msra.mxu0 0
      %1756 = vmatprep.subr.bf16.mxu0 0
      %1757 = vmatpush1.bf16.msra.mxu0 0
      %1758 = vmatprep.subr.bf16.mxu0 0
      %1759 = vmatpush1.bf16.msra.mxu0 0
      %1760 = vmatprep.subr.bf16.mxu0 0
      %1761 = vmatpush1.bf16.msra.mxu0 0
      %1762 = vmatprep.subr.bf16.mxu0 0
      %1763 = vmatpush1.bf16.msra.mxu0 0
      %1764 = vmatprep.subr.bf16.mxu0 0
      %1765 = vmatpush1.bf16.msra.mxu0 0
      %1766 = vmatprep.subr.bf16.mxu0 0
      %1767 = vmatpush1.bf16.msra.mxu0 0
      %1768 = vmatprep.mubr.bf16.mxu0 0
      %1769 = vmatmul.mubr.bf16.gmra.mrb[0].mxu0 %v1493
      %v1770 = vpop.f32.mrb[0].mxu0
      %v1771 = vadd.f32 %v1570, %v1770
      %v1772 = vpop.f32.mrb[0].mxu0
      %v1773 = vpop.f32.mrb[0].mxu0
      %v1774 = vpop.f32.mrb[0].mxu0
      %1775 = vdwg.mxu0
      %vm1776 = vcmp.ge.f32.partialorder %v1607, 0.0
      %vm1777 = vcmp.ge.f32.partialorder %v1609, 0.0
      %vm1778 = vcmp.ge.f32.partialorder %v1648, 0.0
      %vm1779 = vcmp.ge.f32.partialorder %v1650, 0.0
      %vm1780 = vcmp.ge.f32.partialorder %v1689, 0.0
      %vm1781 = vcmp.ge.f32.partialorder %v1691, 0.0
      %vm1782 = vcmp.ge.f32.partialorder %v1730, 0.0
      %vm1783 = vcmp.ge.f32.partialorder %v1732, 0.0
      %vm1784 = vcmp.ge.f32.partialorder %v1771, 0.0
      %v1785 = vmul.f32 %v1607, 0.01
      %v1786 = vmul.f32 %v1609, 0.01
      %v1787 = vmul.f32 %v1648, 0.01
      %v1788 = vmul.f32 %v1650, 0.01
      %v1789 = vmul.f32 %v1689, 0.01
      %v1790 = vmul.f32 %v1691, 0.01
      %v1791 = vmul.f32 %v1730, 0.01
      %v1792 = vmul.f32 %v1732, 0.01
      %v1793 = vmul.f32 %v1771, 0.01
      %v1794 = vsel %vm1776, %v1607, %v1785
      %v1795 = vsel %vm1777, %v1609, %v1786
      %v1796 = vsel %vm1778, %v1648, %v1787
      %v1797 = vsel %vm1779, %v1650, %v1788
      %v1798 = vsel %vm1780, %v1689, %v1789
      %v1799 = vsel %vm1781, %v1691, %v1790
      %v1800 = vsel %vm1782, %v1730, %v1791
      %v1801 = vsel %vm1783, %v1732, %v1792
      %v1802 = vsel %vm1784, %v1771, %v1793
      %1803 = vst [vmem:[#allocation3] sm:$0xff] %v1794
      %1804 = vst [vmem:[#allocation3 + $0x8] sm:$0xff] %v1795
      %1805 = vst [vmem:[#allocation3 + $0x10] sm:$0xff] %v1796
      %1806 = vst [vmem:[#allocation3 + $0x18] sm:$0xff] %v1797
      %1807 = vst [vmem:[#allocation3 + $0x20] sm:$0xff] %v1798
      %1808 = vst [vmem:[#allocation3 + $0x28] sm:$0xff] %v1799
      %1809 = vst [vmem:[#allocation3 + $0x30] sm:$0xff] %v1800
      %1810 = vst [vmem:[#allocation3 + $0x38] sm:$0xff] %v1801
      %vm1811 = vcmask 244736
      %1812 = vst.msk [vmem:[#allocation3 + $0x40] sm:$0xff] %vm1811, %v1802
      %v1813 = vld [vmem:[#allocation3] sm:$0xff]
      %v1814 = vpack.c.bf16 %v1813, %v1813
      %vm1815 = vcmask 273408
      %1816 = vst.msk [vmem:[#allocation4] sm:$0xf] %vm1815, %v1814
      %v1817 = vld [vmem:[#allocation3] sm:$0xff]
      %v1818 = vpack.c.bf16 %v1817, %v1817
      %v1820 = vrot.slane %v1818, 4
      %1821 = vrot.lane.b32.xlu0 %v1820, 60
      %v1822 = vpop.permute.xlu0 %1821
      %vm1824 = vcmask 277508
      %1825 = vst.msk [vmem:[#allocation4] sm:$0xf0] %vm1824, %v1822
      %v1826 = vld [vmem:[#allocation3 + $0x8] sm:$0xff]
      %v1827 = vpack.c.bf16 %v1826, %v1826
      %1829 = vrot.lane.b32.xlu0 %v1827, 120
      %v1830 = vpop.permute.xlu0 %1829
      %1832 = vst.msk [vmem:[#allocation4 + $0x8] sm:$0xf] %vm1815, %v1830
      %v1833 = vld [vmem:[#allocation3 + $0x8] sm:$0xff]
      %v1834 = vpack.c.bf16 %v1833, %v1833
      %v1836 = vrot.slane %v1834, 4
      %1837 = vrot.lane.b32.xlu0 %v1836, 52
      %v1838 = vpop.permute.xlu0 %1837
      %1840 = vst.msk [vmem:[#allocation4 + $0x8] sm:$0xf0] %vm1824, %v1838
      %v1841 = vld [vmem:[#allocation3 + $0x10] sm:$0xff]
      %v1842 = vpack.c.bf16 %v1841, %v1841
      %1844 = vrot.lane.b32.xlu0 %v1842, 112
      %v1845 = vpop.permute.xlu0 %1844
      %1847 = vst.msk [vmem:[#allocation4 + $0x10] sm:$0xf] %vm1815, %v1845
      %v1848 = vld [vmem:[#allocation3 + $0x10] sm:$0xff]
      %v1849 = vpack.c.bf16 %v1848, %v1848
      %v1851 = vrot.slane %v1849, 4
      %1852 = vrot.lane.b32.xlu0 %v1851, 44
      %v1853 = vpop.permute.xlu0 %1852
      %1855 = vst.msk [vmem:[#allocation4 + $0x10] sm:$0xf0] %vm1824, %v1853
      %v1856 = vld [vmem:[#allocation3 + $0x18] sm:$0xff]
      %v1857 = vpack.c.bf16 %v1856, %v1856
      %1859 = vrot.lane.b32.xlu0 %v1857, 104
      %v1860 = vpop.permute.xlu0 %1859
      %1862 = vst.msk [vmem:[#allocation4 + $0x18] sm:$0xf] %vm1815, %v1860
      %v1863 = vld [vmem:[#allocation3 + $0x18] sm:$0xff]
      %v1864 = vpack.c.bf16 %v1863, %v1863
      %v1866 = vrot.slane %v1864, 4
      %1867 = vrot.lane.b32.xlu0 %v1866, 36
      %v1868 = vpop.permute.xlu0 %1867
      %1870 = vst.msk [vmem:[#allocation4 + $0x18] sm:$0xf0] %vm1824, %v1868
      %v1871 = vld [vmem:[#allocation3 + $0x20] sm:$0xff]
      %v1872 = vpack.c.bf16 %v1871, %v1871
      %1874 = vrot.lane.b32.xlu0 %v1872, 96
      %v1875 = vpop.permute.xlu0 %1874
      %1877 = vst.msk [vmem:[#allocation4 + $0x20] sm:$0xf] %vm1815, %v1875
      %v1878 = vld [vmem:[#allocation3 + $0x20] sm:$0xff]
      %v1879 = vld [vmem:[#allocation3 + $0x28] sm:$0xff]
      %v1880 = vpack.c.bf16 %v1878, %v1878
      %v1881 = vpack.c.bf16 %v1879, %v1879
      %v1884 = vrot.slane %v1880, 4
      %v1885 = vrot.slane %v1881, 4
      %1886 = vrot.lane.b32.xlu0 %v1884, 28
      %v1887 = vpop.permute.xlu0 %1886
      %1888 = vrot.lane.b32.xlu0 %v1885, 28
      %v1889 = vpop.permute.xlu0 %1888
      %vm1890 = vcmask 228352
      %v1891 = vsel %vm1890, %v1887, %v1889
      %1893 = vst.msk [vmem:[#allocation4 + $0x20] sm:$0xf0] %vm1824, %v1891
      %v1894 = vld [vmem:[#allocation3 + $0x28] sm:$0xff]
      %v1895 = vpack.c.bf16 %v1894, %v1894
      %1897 = vrot.lane.b32.xlu0 %v1895, 88
      %v1898 = vpop.permute.xlu0 %1897
      %1900 = vst.msk [vmem:[#allocation4 + $0x28] sm:$0xf] %vm1815, %v1898
      %v1901 = vld [vmem:[#allocation3 + $0x28] sm:$0xff]
      %v1902 = vld [vmem:[#allocation3 + $0x30] sm:$0xff]
      %v1903 = vpack.c.bf16 %v1901, %v1901
      %v1904 = vpack.c.bf16 %v1902, %v1902
      %v1907 = vrot.slane %v1903, 4
      %v1908 = vrot.slane %v1904, 4
      %1909 = vrot.lane.b32.xlu0 %v1907, 20
      %v1910 = vpop.permute.xlu0 %1909
      %1911 = vrot.lane.b32.xlu0 %v1908, 20
      %v1912 = vpop.permute.xlu0 %1911
      %vm1913 = vcmask 162816
      %v1914 = vsel %vm1913, %v1910, %v1912
      %1916 = vst.msk [vmem:[#allocation4 + $0x28] sm:$0xf0] %vm1824, %v1914
      %v1917 = vld [vmem:[#allocation3 + $0x30] sm:$0xff]
      %v1918 = vpack.c.bf16 %v1917, %v1917
      %1920 = vrot.lane.b32.xlu0 %v1918, 80
      %v1921 = vpop.permute.xlu0 %1920
      %1923 = vst.msk [vmem:[#allocation4 + $0x30] sm:$0xf] %vm1815, %v1921
      %v1924 = vld [vmem:[#allocation3 + $0x30] sm:$0xff]
      %v1925 = vld [vmem:[#allocation3 + $0x38] sm:$0xff]
      %v1926 = vpack.c.bf16 %v1924, %v1924
      %v1927 = vpack.c.bf16 %v1925, %v1925
      %v1930 = vrot.slane %v1926, 4
      %v1931 = vrot.slane %v1927, 4
      %1932 = vrot.lane.b32.xlu0 %v1930, 12
      %v1933 = vpop.permute.xlu0 %1932
      %1934 = vrot.lane.b32.xlu0 %v1931, 12
      %v1935 = vpop.permute.xlu0 %1934
      %vm1936 = vcmask 97280
      %v1937 = vsel %vm1936, %v1933, %v1935
      %1939 = vst.msk [vmem:[#allocation4 + $0x30] sm:$0xf0] %vm1824, %v1937
      %v1940 = vld [vmem:[#allocation3 + $0x38] sm:$0xff]
      %v1941 = vpack.c.bf16 %v1940, %v1940
      %1943 = vrot.lane.b32.xlu0 %v1941, 72
      %v1944 = vpop.permute.xlu0 %1943
      %1946 = vst.msk [vmem:[#allocation4 + $0x38] sm:$0xf] %vm1815, %v1944
      %v1947 = vld [vmem:[#allocation3 + $0x38] sm:$0xff]
      %v1948 = vld [vmem:[#allocation3 + $0x40] sm:$0xff]
      %v1949 = vpack.c.bf16 %v1947, %v1947
      %v1950 = vpack.c.bf16 %v1948, %v1948
      %v1953 = vrot.slane %v1949, 4
      %v1954 = vrot.slane %v1950, 4
      %1955 = vrot.lane.b32.xlu0 %v1953, 4
      %v1956 = vpop.permute.xlu0 %1955
      %1957 = vrot.lane.b32.xlu0 %v1954, 4
      %v1958 = vpop.permute.xlu0 %1957
      %vm1959 = vcmask 31744
      %v1960 = vsel %vm1959, %v1956, %v1958
      %1962 = vst.msk [vmem:[#allocation4 + $0x38] sm:$0xf0] %vm1824, %v1960
      %v1963 = vld [vmem:[#allocation4] sm:$0xff]
      %v1964 = vld [vmem:[#allocation4 + $0x8] sm:$0xff]
      %v1965 = vld [vmem:[#allocation4 + $0x10] sm:$0xff]
      %v1966 = vld [vmem:[#allocation4 + $0x18] sm:$0xff]
      %v1967 = vld [vmem:[#allocation4 + $0x20] sm:$0xff]
      %v1968 = vld [vmem:[#allocation4 + $0x28] sm:$0xff]
      %v1969 = vld [vmem:[#allocation4 + $0x30] sm:$0xff]
      %v1970 = vld [vmem:[#allocation4 + $0x38] sm:$0xff]
      %v1971 = vld [vmem:[%s3] sm:$0xf]
      %v1972 = vld [vmem:[%s3 + $0x4] sm:$0xf]
      %v1973 = vld [vmem:[%s3 + $0x8] sm:$0xf]
      %v1974 = vld [vmem:[%s3 + $0xc] sm:$0xf]
      %v1975 = vld [vmem:[%s3 + $0x10] sm:$0x1]
      %v1981 = vunpack.c.l.b16 %v1971
      %v1982 = vunpack.c.l.b16 %v1972
      %v1983 = vunpack.c.l.b16 %v1973
      %v1984 = vunpack.c.l.b16 %v1974
      %v1985 = vunpack.c.l.b16 %v1975
      %v1986 = vpack.c.b16 %v1982, %v1981
      %v1987 = vpack.c.b16 %v1984, %v1983
      %v1988 = vpack.c.b16 %v1985, %v1985
      %vm1991 = vcmask 277504
      %v1993 = vsel %vm1991, %v1963, 0
      %v1996 = vsel %vm1991, %v1964, 0
      %v1999 = vsel %vm1991, %v1965, 0
      %v2002 = vsel %vm1991, %v1966, 0
      %v2005 = vsel %vm1991, %v1967, 0
      %v2008 = vsel %vm1991, %v1968, 0
      %v2011 = vsel %vm1991, %v1969, 0
      %v2014 = vsel %vm1991, %v1970, 0
      %vm2016 = vcmask 1040384
      %v2018 = vsel %vm2016, %v1988, 0
      %2020 = vmatprep.subr.bf16.mxu0 0
      %2021 = vmatpush1.bf16.msra.mxu0 %v1986
      %2022 = vmatprep.subr.bf16.mxu0 0
      %2023 = vmatpush1.bf16.msra.mxu0 %v1987
      %2024 = vmatprep.subr.bf16.mxu0 0
      %2025 = vmatpush1.bf16.msra.mxu0 %v2018
      %2026 = vmatprep.subr.bf16.mxu0 0
      %2027 = vmatpush1.bf16.msra.mxu0 0
      %2028 = vmatprep.subr.bf16.mxu0 0
      %2029 = vmatpush1.bf16.msra.mxu0 0
      %2030 = vmatprep.subr.bf16.mxu0 0
      %2031 = vmatpush1.bf16.msra.mxu0 0
      %2032 = vmatprep.subr.bf16.mxu0 0
      %2033 = vmatpush1.bf16.msra.mxu0 0
      %2034 = vmatprep.subr.bf16.mxu0 0
      %2035 = vmatpush1.bf16.msra.mxu0 0
      %2036 = vmatprep.subr.bf16.mxu0 0
      %2037 = vmatpush1.bf16.msra.mxu0 0
      %2038 = vmatprep.subr.bf16.mxu0 0
      %2039 = vmatpush1.bf16.msra.mxu0 0
      %2040 = vmatprep.subr.bf16.mxu0 0
      %2041 = vmatpush1.bf16.msra.mxu0 0
      %2042 = vmatprep.subr.bf16.mxu0 0
      %2043 = vmatpush1.bf16.msra.mxu0 0
      %2044 = vmatprep.subr.bf16.mxu0 0
      %2045 = vmatpush1.bf16.msra.mxu0 0
      %2046 = vmatprep.subr.bf16.mxu0 0
      %2047 = vmatpush1.bf16.msra.mxu0 0
      %2048 = vmatprep.subr.bf16.mxu0 0
      %2049 = vmatpush1.bf16.msra.mxu0 0
      %2050 = vmatprep.subr.bf16.mxu0 0
      %2051 = vmatpush1.bf16.msra.mxu0 0
      %2052 = vmatprep.mubr.bf16.mxu0 0
      %2053 = vmatmul.mubr.bf16.gmra.mrb[0].mxu0 %v1993
      %v2054 = vpop.f32.mrb[0].mxu0
      %v2055 = vadd.f32 0.0, %v2054
      %v2056 = vpop.f32.mrb[0].mxu0
      %v2057 = vpop.f32.mrb[0].mxu0
      %v2058 = vadd.f32 0.0, %v2057
      %v2059 = vpop.f32.mrb[0].mxu0
      %2060 = vmatprep.mubr.bf16.mxu0 0
      %2061 = vmatmul.mubr.bf16.gmra.mrb[0].mxu0 %v1996
      %v2062 = vpop.f32.mrb[0].mxu0
      %v2063 = vadd.f32 0.0, %v2062
      %v2064 = vpop.f32.mrb[0].mxu0
      %v2065 = vpop.f32.mrb[0].mxu0
      %v2066 = vadd.f32 0.0, %v2065
      %v2067 = vpop.f32.mrb[0].mxu0
      %2068 = vmatprep.mubr.bf16.mxu0 0
      %2069 = vmatmul.mubr.bf16.gmra.mrb[0].mxu0 %v1999
      %v2070 = vpop.f32.mrb[0].mxu0
      %v2071 = vadd.f32 0.0, %v2070
      %v2072 = vpop.f32.mrb[0].mxu0
      %v2073 = vpop.f32.mrb[0].mxu0
      %v2074 = vadd.f32 0.0, %v2073
      %v2075 = vpop.f32.mrb[0].mxu0
      %2076 = vmatprep.mubr.bf16.mxu0 0
      %2077 = vmatmul.mubr.bf16.gmra.mrb[0].mxu0 %v2002
      %v2078 = vpop.f32.mrb[0].mxu0
      %v2079 = vadd.f32 0.0, %v2078
      %v2080 = vpop.f32.mrb[0].mxu0
      %v2081 = vpop.f32.mrb[0].mxu0
      %v2082 = vadd.f32 0.0, %v2081
      %v2083 = vpop.f32.mrb[0].mxu0
      %2084 = vmatprep.mubr.bf16.mxu0 0
      %2085 = vmatmul.mubr.bf16.gmra.mrb[0].mxu0 %v2005
      %v2086 = vpop.f32.mrb[0].mxu0
      %v2087 = vadd.f32 0.0, %v2086
      %v2088 = vpop.f32.mrb[0].mxu0
      %v2089 = vpop.f32.mrb[0].mxu0
      %v2090 = vadd.f32 0.0, %v2089
      %v2091 = vpop.f32.mrb[0].mxu0
      %2092 = vmatprep.mubr.bf16.mxu0 0
      %2093 = vmatmul.mubr.bf16.gmra.mrb[0].mxu0 %v2008
      %v2094 = vpop.f32.mrb[0].mxu0
      %v2095 = vadd.f32 0.0, %v2094
      %v2096 = vpop.f32.mrb[0].mxu0
      %v2097 = vpop.f32.mrb[0].mxu0
      %v2098 = vadd.f32 0.0, %v2097
      %v2099 = vpop.f32.mrb[0].mxu0
      %2100 = vmatprep.mubr.bf16.mxu0 0
      %2101 = vmatmul.mubr.bf16.gmra.mrb[0].mxu0 %v2011
      %v2102 = vpop.f32.mrb[0].mxu0
      %v2103 = vadd.f32 0.0, %v2102
      %v2104 = vpop.f32.mrb[0].mxu0
      %v2105 = vpop.f32.mrb[0].mxu0
      %v2106 = vadd.f32 0.0, %v2105
      %v2107 = vpop.f32.mrb[0].mxu0
      %2108 = vmatprep.mubr.bf16.mxu0 0
      %2109 = vmatmul.mubr.bf16.gmra.mrb[0].mxu0 %v2014
      %v2110 = vpop.f32.mrb[0].mxu0
      %v2111 = vadd.f32 0.0, %v2110
      %v2112 = vpop.f32.mrb[0].mxu0
      %v2113 = vpop.f32.mrb[0].mxu0
      %v2114 = vadd.f32 0.0, %v2113
      %v2115 = vpop.f32.mrb[0].mxu0
      %2116 = vdwg.mxu0
      %v2117 = vpack.c.bf16 %v2058, %v2055
      %v2118 = vpack.c.bf16 %v2066, %v2063
      %v2119 = vpack.c.bf16 %v2074, %v2071
      %v2120 = vpack.c.bf16 %v2082, %v2079
      %v2121 = vpack.c.bf16 %v2090, %v2087
      %v2122 = vpack.c.bf16 %v2098, %v2095
      %v2123 = vpack.c.bf16 %v2106, %v2103
      %v2124 = vpack.c.bf16 %v2114, %v2111
      %2125 = vst [vmem:[#allocation5] sm:$0xff] 0
      %vm2126 = vcmask 617472
      %2127 = vst.msk [vmem:[#allocation5 + $0x8] sm:$0xf] %vm2126, 0
      %v2129 = vunpack.c.l.b16 %v2117
      %v2130 = vpack.c.b16 %v2129, %v2129
      %2131 = vrot.lane.b32.xlu0 %v2130, 19
      %v2132 = vpop.permute.xlu0 %2131
      %vm2134 = vcmask 281752
      %2135 = vst.msk [vmem:[#allocation5] sm:$0xf] %vm2134, %v2132
      %v2136 = vunpack.c.h.b16 %v2117
      %v2137 = vpack.c.b16 %v2136, %v2136
      %2138 = vrot.lane.b32.xlu0 %v2137, 37
      %v2139 = vpop.permute.xlu0 %2138
      %vm2141 = vcmask 429352
      %2142 = vst.msk [vmem:[#allocation5] sm:$0xf] %vm2141, %v2139
      %v2144 = vunpack.c.l.b16 %v2118
      %v2145 = vpack.c.b16 %v2144, %v2144
      %2146 = vrot.lane.b32.xlu0 %v2145, 55
      %v2147 = vpop.permute.xlu0 %2146
      %vm2149 = vcmask 576952
      %2150 = vst.msk [vmem:[#allocation5] sm:$0xf] %vm2149, %v2147
      %v2151 = vunpack.c.h.b16 %v2118
      %v2152 = vpack.c.b16 %v2151, %v2151
      %2153 = vrot.lane.b32.xlu0 %v2152, 73
      %v2154 = vpop.permute.xlu0 %2153
      %vm2156 = vcmask 724552
      %2157 = vst.msk [vmem:[#allocation5] sm:$0xf] %vm2156, %v2154
      %v2159 = vunpack.c.l.b16 %v2119
      %v2160 = vpack.c.b16 %v2159, %v2159
      %2161 = vrot.lane.b32.xlu0 %v2160, 91
      %v2162 = vpop.permute.xlu0 %2161
      %vm2164 = vcmask 872152
      %2165 = vst.msk [vmem:[#allocation5] sm:$0xf] %vm2164, %v2162
      %v2166 = vunpack.c.h.b16 %v2119
      %v2167 = vpack.c.b16 %v2166, %v2166
      %2168 = vrot.lane.b32.xlu0 %v2167, 109
      %v2169 = vpop.permute.xlu0 %2168
      %vm2171 = vcmask 1019752
      %2172 = vst.msk [vmem:[#allocation5] sm:$0xf] %vm2171, %v2169
      %v2174 = vunpack.c.l.b16 %v2120
      %v2175 = vpack.c.b16 %v2174, %v2174
      %2176 = vrot.lane.b32.xlu0 %v2175, 127
      %v2177 = vpop.permute.xlu0 %2176
      %v2178 = vrot.slane %v2177, 4
      %v2179 = vsel %vm423, %v2178, %v2177
      %vm2181 = vcmask 1044472
      %vm2182 = vcmask 121860
      %vm2183 = vmor %vm2182, %vm2181
      %2184 = vst.msk [vmem:[#allocation5] sm:$0xff] %vm2183, %v2179
      %v2185 = vunpack.c.h.b16 %v2120
      %v2186 = vpack.c.b16 %v2185, %v2185
      %2187 = vrot.lane.b32.xlu0 %v2186, 17
      %v2188 = vpop.permute.xlu0 %2187
      %vm2190 = vcmask 265352
      %2191 = vst.msk [vmem:[#allocation5 + $0x4] sm:$0xf] %vm2190, %v2188
      %v2193 = vunpack.c.l.b16 %v2121
      %v2194 = vpack.c.b16 %v2193, %v2193
      %2195 = vrot.lane.b32.xlu0 %v2194, 35
      %v2196 = vpop.permute.xlu0 %2195
      %vm2198 = vcmask 412952
      %2199 = vst.msk [vmem:[#allocation5 + $0x4] sm:$0xf] %vm2198, %v2196
      %v2200 = vunpack.c.h.b16 %v2121
      %v2201 = vpack.c.b16 %v2200, %v2200
      %2202 = vrot.lane.b32.xlu0 %v2201, 53
      %v2203 = vpop.permute.xlu0 %2202
      %vm2205 = vcmask 560552
      %2206 = vst.msk [vmem:[#allocation5 + $0x4] sm:$0xf] %vm2205, %v2203
      %v2208 = vunpack.c.l.b16 %v2122
      %v2209 = vpack.c.b16 %v2208, %v2208
      %2210 = vrot.lane.b32.xlu0 %v2209, 71
      %v2211 = vpop.permute.xlu0 %2210
      %vm2213 = vcmask 708152
      %2214 = vst.msk [vmem:[#allocation5 + $0x4] sm:$0xf] %vm2213, %v2211
      %v2215 = vunpack.c.h.b16 %v2122
      %v2216 = vpack.c.b16 %v2215, %v2215
      %2217 = vrot.lane.b32.xlu0 %v2216, 89
      %v2218 = vpop.permute.xlu0 %2217
      %vm2220 = vcmask 855752
      %2221 = vst.msk [vmem:[#allocation5 + $0x4] sm:$0xf] %vm2220, %v2218
      %v2223 = vunpack.c.l.b16 %v2123
      %v2224 = vpack.c.b16 %v2223, %v2223
      %2225 = vrot.lane.b32.xlu0 %v2224, 107
      %v2226 = vpop.permute.xlu0 %2225
      %vm2228 = vcmask 1003352
      %2229 = vst.msk [vmem:[#allocation5 + $0x4] sm:$0xf] %vm2228, %v2226
      %v2230 = vunpack.c.h.b16 %v2123
      %v2231 = vpack.c.b16 %v2230, %v2230
      %2232 = vrot.lane.b32.xlu0 %v2231, 125
      %v2233 = vpop.permute.xlu0 %2232
      %v2234 = vrot.slane %v2233, 4
      %v2235 = vsel %vm570, %v2234, %v2233
      %vm2237 = vcmask 1044456
      %vm2238 = vcmask 105476
      %vm2239 = vmor %vm2238, %vm2237
      %2240 = vst.msk [vmem:[#allocation5 + $0x4] sm:$0xff] %vm2239, %v2235
      %v2242 = vunpack.c.l.b16 %v2124
      %v2243 = vpack.c.b16 %v2242, %v2242
      %2244 = vrot.lane.b32.xlu0 %v2243, 15
      %v2245 = vpop.permute.xlu0 %2244
      %vm2247 = vcmask 248952
      %2248 = vst.msk [vmem:[#allocation5 + $0x8] sm:$0xf] %vm2247, %v2245
      %v2249 = vunpack.c.h.b16 %v2124
      %v2250 = vpack.c.b16 %v2249, %v2249
      %2251 = vrot.lane.b32.xlu0 %v2250, 33
      %v2252 = vpop.permute.xlu0 %2251
      %vm2254 = vcmask 396552
      %2255 = vst.msk [vmem:[#allocation5 + $0x8] sm:$0xf] %vm2254, %v2252
      %v2256 = vld [vmem:[#allocation5] sm:$0xff]
      %v2257 = vld [vmem:[#allocation5 + $0x8] sm:$0xf]
      %v2260 = vunpack.c.l.b16 %v2256
      %v2261 = vunpack.c.h.b16 %v2256
      %v2262 = vunpack.c.l.b16 %v2257
      %v2263 = vpack.c.b16 %v2260, %v2260
      %v2264 = vpack.c.b16 %v2261, %v2261
      %v2265 = vpack.c.b16 %v2262, %v2262
      %2269 = vst [vmem:[#allocation6] sm:$0xf] %v2263
      %2270 = vst [vmem:[#allocation6 + $0x8] sm:$0xf] %v2264
      %vm2271 = vcmask 109568
      %2272 = vst.msk [vmem:[#allocation6 + $0x10] sm:$0xf] %vm2271, %v2265
      %v2273 = vld [vmem:[#allocation5] sm:$0xff]
      %v2274 = vld [vmem:[#allocation5 + $0x8] sm:$0xf]
      %v2277 = vunpack.c.l.b16 %v2273
      %v2278 = vunpack.c.h.b16 %v2273
      %v2279 = vunpack.c.l.b16 %v2274
      %v2280 = vpack.c.b16 %v2277, %v2277
      %v2281 = vpack.c.b16 %v2278, %v2278
      %v2282 = vpack.c.b16 %v2279, %v2279
      %2283 = vrot.lane.b32.xlu0 %v2280, 127
      %v2284 = vpop.permute.xlu0 %2283
      %2285 = vrot.lane.b32.xlu0 %v2281, 127
      %v2286 = vpop.permute.xlu0 %2285
      %2287 = vrot.lane.b32.xlu0 %v2282, 127
      %v2288 = vpop.permute.xlu0 %2287
      %v2289 = vsel %vm423, %v2284, %v2286
      %v2290 = vsel %vm423, %v2286, %v2288
      %2294 = vst [vmem:[#allocation6] sm:$0xf0] %v2289
      %2295 = vst [vmem:[#allocation6 + $0x8] sm:$0xf0] %v2290
      %vm2296 = vcmask 113668
      %2297 = vst.msk [vmem:[#allocation6 + $0x10] sm:$0xf0] %vm2296, %v2288
      %v2298 = vld [vmem:[#allocation5] sm:$0xff]
      %v2299 = vld [vmem:[#allocation5 + $0x8] sm:$0xf]
      %v2302 = vunpack.c.l.b16 %v2298
      %v2303 = vunpack.c.h.b16 %v2298
      %v2304 = vunpack.c.l.b16 %v2299
      %v2305 = vpack.c.b16 %v2302, %v2302
      %v2306 = vpack.c.b16 %v2303, %v2303
      %v2307 = vpack.c.b16 %v2304, %v2304
      %2308 = vrot.lane.b32.xlu0 %v2305, 126
      %v2309 = vpop.permute.xlu0 %2308
      %2310 = vrot.lane.b32.xlu0 %v2306, 126
      %v2311 = vpop.permute.xlu0 %2310
      %2312 = vrot.lane.b32.xlu0 %v2307, 126
      %v2313 = vpop.permute.xlu0 %2312
      %v2314 = vsel %vm497, %v2309, %v2311
      %v2315 = vsel %vm497, %v2311, %v2313
      %2319 = vst [vmem:[#allocation6 + $0x18] sm:$0xf] %v2314
      %2320 = vst [vmem:[#allocation6 + $0x20] sm:$0xf] %v2315
      %2321 = vst.msk [vmem:[#allocation6 + $0x28] sm:$0xf] %vm2271, %v2313
      %v2322 = vld [vmem:[#allocation5] sm:$0xff]
      %v2323 = vld [vmem:[#allocation5 + $0x8] sm:$0xf]
      %v2326 = vunpack.c.l.b16 %v2322
      %v2327 = vunpack.c.h.b16 %v2322
      %v2328 = vunpack.c.l.b16 %v2323
      %v2329 = vpack.c.b16 %v2326, %v2326
      %v2330 = vpack.c.b16 %v2327, %v2327
      %v2331 = vpack.c.b16 %v2328, %v2328
      %2332 = vrot.lane.b32.xlu0 %v2329, 125
      %v2333 = vpop.permute.xlu0 %2332
      %2334 = vrot.lane.b32.xlu0 %v2330, 125
      %v2335 = vpop.permute.xlu0 %2334
      %2336 = vrot.lane.b32.xlu0 %v2331, 125
      %v2337 = vpop.permute.xlu0 %2336
      %v2338 = vsel %vm570, %v2333, %v2335
      %v2339 = vsel %vm570, %v2335, %v2337
      %2343 = vst [vmem:[#allocation6 + $0x18] sm:$0xf0] %v2338
      %2344 = vst [vmem:[#allocation6 + $0x20] sm:$0xf0] %v2339
      %2345 = vst.msk [vmem:[#allocation6 + $0x28] sm:$0xf0] %vm2296, %v2337
      %v2346 = vld [vmem:[#allocation5] sm:$0xff]
      %v2347 = vld [vmem:[#allocation5 + $0x8] sm:$0xf]
      %v2350 = vunpack.c.l.b16 %v2346
      %v2351 = vunpack.c.h.b16 %v2346
      %v2352 = vunpack.c.l.b16 %v2347
      %v2353 = vpack.c.b16 %v2350, %v2350
      %v2354 = vpack.c.b16 %v2351, %v2351
      %v2355 = vpack.c.b16 %v2352, %v2352
      %2356 = vrot.lane.b32.xlu0 %v2353, 110
      %v2357 = vpop.permute.xlu0 %2356
      %2358 = vrot.lane.b32.xlu0 %v2354, 110
      %v2359 = vpop.permute.xlu0 %2358
      %2360 = vrot.lane.b32.xlu0 %v2355, 110
      %v2361 = vpop.permute.xlu0 %2360
      %vm2362 = vcmask 900096
      %v2363 = vsel %vm2362, %v2357, %v2359
      %v2364 = vsel %vm2362, %v2359, %v2361
      %2368 = vst [vmem:[#allocation6 + $0x30] sm:$0xf] %v2363
      %2369 = vst [vmem:[#allocation6 + $0x38] sm:$0xf] %v2364
      %2370 = vst.msk [vmem:[#allocation6 + $0x40] sm:$0xf] %vm2271, %v2361
      %v2371 = vld [vmem:[#allocation5] sm:$0xff]
      %v2372 = vld [vmem:[#allocation5 + $0x8] sm:$0xf]
      %v2375 = vunpack.c.l.b16 %v2371
      %v2376 = vunpack.c.h.b16 %v2371
      %v2377 = vunpack.c.l.b16 %v2372
      %v2378 = vpack.c.b16 %v2375, %v2375
      %v2379 = vpack.c.b16 %v2376, %v2376
      %v2380 = vpack.c.b16 %v2377, %v2377
      %2381 = vrot.lane.b32.xlu0 %v2378, 109
      %v2382 = vpop.permute.xlu0 %2381
      %2383 = vrot.lane.b32.xlu0 %v2379, 109
      %v2384 = vpop.permute.xlu0 %2383
      %2385 = vrot.lane.b32.xlu0 %v2380, 109
      %v2386 = vpop.permute.xlu0 %2385
      %vm2387 = vcmask 891904
      %v2388 = vsel %vm2387, %v2382, %v2384
      %v2389 = vsel %vm2387, %v2384, %v2386
      %2393 = vst [vmem:[#allocation6 + $0x30] sm:$0xf0] %v2388
      %2394 = vst [vmem:[#allocation6 + $0x38] sm:$0xf0] %v2389
      %2395 = vst.msk [vmem:[#allocation6 + $0x40] sm:$0xf0] %vm2296, %v2386
      %v2396 = vld [vmem:[#allocation5] sm:$0xff]
      %v2397 = vld [vmem:[#allocation5 + $0x8] sm:$0xf]
      %v2400 = vunpack.c.l.b16 %v2396
      %v2401 = vunpack.c.h.b16 %v2396
      %v2402 = vunpack.c.l.b16 %v2397
      %v2403 = vpack.c.b16 %v2400, %v2400
      %v2404 = vpack.c.b16 %v2401, %v2401
      %v2405 = vpack.c.b16 %v2402, %v2402
      %2406 = vrot.lane.b32.xlu0 %v2403, 108
      %v2407 = vpop.permute.xlu0 %2406
      %2408 = vrot.lane.b32.xlu0 %v2404, 108
      %v2409 = vpop.permute.xlu0 %2408
      %2410 = vrot.lane.b32.xlu0 %v2405, 108
      %v2411 = vpop.permute.xlu0 %2410
      %vm2412 = vcmask 883712
      %v2413 = vsel %vm2412, %v2407, %v2409
      %v2414 = vsel %vm2412, %v2409, %v2411
      %2418 = vst [vmem:[#allocation6 + $0x48] sm:$0xf] %v2413
      %2419 = vst [vmem:[#allocation6 + $0x50] sm:$0xf] %v2414
      %2420 = vst.msk [vmem:[#allocation6 + $0x58] sm:$0xf] %vm2271, %v2411
      %v2421 = vld [vmem:[#allocation5] sm:$0xff]
      %v2422 = vld [vmem:[#allocation5 + $0x8] sm:$0xf]
      %v2425 = vunpack.c.l.b16 %v2421
      %v2426 = vunpack.c.h.b16 %v2421
      %v2427 = vunpack.c.l.b16 %v2422
      %v2428 = vpack.c.b16 %v2425, %v2425
      %v2429 = vpack.c.b16 %v2426, %v2426
      %v2430 = vpack.c.b16 %v2427, %v2427
      %2431 = vrot.lane.b32.xlu0 %v2428, 107
      %v2432 = vpop.permute.xlu0 %2431
      %2433 = vrot.lane.b32.xlu0 %v2429, 107
      %v2434 = vpop.permute.xlu0 %2433
      %2435 = vrot.lane.b32.xlu0 %v2430, 107
      %v2436 = vpop.permute.xlu0 %2435
      %vm2437 = vcmask 875520
      %v2438 = vsel %vm2437, %v2432, %v2434
      %v2439 = vsel %vm2437, %v2434, %v2436
      %2443 = vst [vmem:[#allocation6 + $0x48] sm:$0xf0] %v2438
      %2444 = vst [vmem:[#allocation6 + $0x50] sm:$0xf0] %v2439
      %2445 = vst.msk [vmem:[#allocation6 + $0x58] sm:$0xf0] %vm2296, %v2436
      %v2446 = vld [vmem:[#allocation5] sm:$0xff]
      %v2447 = vld [vmem:[#allocation5 + $0x8] sm:$0xf]
      %v2450 = vunpack.c.l.b16 %v2446
      %v2451 = vunpack.c.h.b16 %v2446
      %v2452 = vunpack.c.l.b16 %v2447
      %v2453 = vpack.c.b16 %v2450, %v2450
      %v2454 = vpack.c.b16 %v2451, %v2451
      %v2455 = vpack.c.b16 %v2452, %v2452
      %2456 = vrot.lane.b32.xlu0 %v2453, 92
      %v2457 = vpop.permute.xlu0 %2456
      %2458 = vrot.lane.b32.xlu0 %v2454, 92
      %v2459 = vpop.permute.xlu0 %2458
      %2460 = vrot.lane.b32.xlu0 %v2455, 92
      %v2461 = vpop.permute.xlu0 %2460
      %v2462 = vsel %vm789, %v2457, %v2459
      %v2463 = vsel %vm789, %v2459, %v2461
      %2467 = vst [vmem:[#allocation6 + $0x60] sm:$0xf] %v2462
      %2468 = vst [vmem:[#allocation6 + $0x68] sm:$0xf] %v2463
      %2469 = vst.msk [vmem:[#allocation6 + $0x70] sm:$0xf] %vm2271, %v2461
      %v2470 = vld [vmem:[#allocation5] sm:$0xff]
      %v2471 = vld [vmem:[#allocation5 + $0x8] sm:$0xf]
      %v2474 = vunpack.c.l.b16 %v2470
      %v2475 = vunpack.c.h.b16 %v2470
      %v2476 = vunpack.c.l.b16 %v2471
      %v2477 = vpack.c.b16 %v2474, %v2474
      %v2478 = vpack.c.b16 %v2475, %v2475
      %v2479 = vpack.c.b16 %v2476, %v2476
      %2480 = vrot.lane.b32.xlu0 %v2477, 91
      %v2481 = vpop.permute.xlu0 %2480
      %2482 = vrot.lane.b32.xlu0 %v2478, 91
      %v2483 = vpop.permute.xlu0 %2482
      %2484 = vrot.lane.b32.xlu0 %v2479, 91
      %v2485 = vpop.permute.xlu0 %2484
      %v2486 = vsel %vm862, %v2481, %v2483
      %v2487 = vsel %vm862, %v2483, %v2485
      %2491 = vst [vmem:[#allocation6 + $0x60] sm:$0xf0] %v2486
      %2492 = vst [vmem:[#allocation6 + $0x68] sm:$0xf0] %v2487
      %2493 = vst.msk [vmem:[#allocation6 + $0x70] sm:$0xf0] %vm2296, %v2485
      %v2494 = vld [vmem:[#allocation5] sm:$0xff]
      %v2495 = vld [vmem:[#allocation5 + $0x8] sm:$0xf]
      %v2498 = vunpack.c.l.b16 %v2494
      %v2499 = vunpack.c.h.b16 %v2494
      %v2500 = vunpack.c.l.b16 %v2495
      %v2501 = vpack.c.b16 %v2498, %v2498
      %v2502 = vpack.c.b16 %v2499, %v2499
      %v2503 = vpack.c.b16 %v2500, %v2500
      %2504 = vrot.lane.b32.xlu0 %v2501, 90
      %v2505 = vpop.permute.xlu0 %2504
      %2506 = vrot.lane.b32.xlu0 %v2502, 90
      %v2507 = vpop.permute.xlu0 %2506
      %2508 = vrot.lane.b32.xlu0 %v2503, 90
      %v2509 = vpop.permute.xlu0 %2508
      %vm2510 = vcmask 736256
      %v2511 = vsel %vm2510, %v2505, %v2507
      %v2512 = vsel %vm2510, %v2507, %v2509
      %2516 = vst [vmem:[#allocation6 + $0x78] sm:$0xf] %v2511
      %2517 = vst [vmem:[#allocation6 + $0x80] sm:$0xf] %v2512
      %2518 = vst.msk [vmem:[#allocation6 + $0x88] sm:$0xf] %vm2271, %v2509
      %v2519 = vld [vmem:[#allocation5] sm:$0xff]
      %v2520 = vld [vmem:[#allocation5 + $0x8] sm:$0xf]
      %v2523 = vunpack.c.l.b16 %v2519
      %v2524 = vunpack.c.h.b16 %v2519
      %v2525 = vunpack.c.l.b16 %v2520
      %v2526 = vpack.c.b16 %v2523, %v2523
      %v2527 = vpack.c.b16 %v2524, %v2524
      %v2528 = vpack.c.b16 %v2525, %v2525
      %2529 = vrot.lane.b32.xlu0 %v2526, 89
      %v2530 = vpop.permute.xlu0 %2529
      %2531 = vrot.lane.b32.xlu0 %v2527, 89
      %v2532 = vpop.permute.xlu0 %2531
      %2533 = vrot.lane.b32.xlu0 %v2528, 89
      %v2534 = vpop.permute.xlu0 %2533
      %vm2535 = vcmask 728064
      %v2536 = vsel %vm2535, %v2530, %v2532
      %v2537 = vsel %vm2535, %v2532, %v2534
      %2541 = vst [vmem:[#allocation6 + $0x78] sm:$0xf0] %v2536
      %2542 = vst [vmem:[#allocation6 + $0x80] sm:$0xf0] %v2537
      %2543 = vst.msk [vmem:[#allocation6 + $0x88] sm:$0xf0] %vm2296, %v2534
      %v2544 = vld [vmem:[#allocation5] sm:$0xff]
      %v2545 = vld [vmem:[#allocation5 + $0x8] sm:$0xf]
      %v2548 = vunpack.c.l.b16 %v2544
      %v2549 = vunpack.c.h.b16 %v2544
      %v2550 = vunpack.c.l.b16 %v2545
      %v2551 = vpack.c.b16 %v2548, %v2548
      %v2552 = vpack.c.b16 %v2549, %v2549
      %v2553 = vpack.c.b16 %v2550, %v2550
      %2554 = vrot.lane.b32.xlu0 %v2551, 74
      %v2555 = vpop.permute.xlu0 %2554
      %2556 = vrot.lane.b32.xlu0 %v2552, 74
      %v2557 = vpop.permute.xlu0 %2556
      %2558 = vrot.lane.b32.xlu0 %v2553, 74
      %v2559 = vpop.permute.xlu0 %2558
      %vm2560 = vcmask 605184
      %v2561 = vsel %vm2560, %v2555, %v2557
      %v2562 = vsel %vm2560, %v2557, %v2559
      %2566 = vst [vmem:[#allocation6 + $0x90] sm:$0xf] %v2561
      %2567 = vst [vmem:[#allocation6 + $0x98] sm:$0xf] %v2562
      %2568 = vst.msk [vmem:[#allocation6 + $0xa0] sm:$0xf] %vm2271, %v2559
      %v2569 = vld [vmem:[#allocation5] sm:$0xff]
      %v2570 = vld [vmem:[#allocation5 + $0x8] sm:$0xf]
      %v2573 = vunpack.c.l.b16 %v2569
      %v2574 = vunpack.c.h.b16 %v2569
      %v2575 = vunpack.c.l.b16 %v2570
      %v2576 = vpack.c.b16 %v2573, %v2573
      %v2577 = vpack.c.b16 %v2574, %v2574
      %v2578 = vpack.c.b16 %v2575, %v2575
      %2579 = vrot.lane.b32.xlu0 %v2576, 73
      %v2580 = vpop.permute.xlu0 %2579
      %2581 = vrot.lane.b32.xlu0 %v2577, 73
      %v2582 = vpop.permute.xlu0 %2581
      %2583 = vrot.lane.b32.xlu0 %v2578, 73
      %v2584 = vpop.permute.xlu0 %2583
      %vm2585 = vcmask 596992
      %v2586 = vsel %vm2585, %v2580, %v2582
      %v2587 = vsel %vm2585, %v2582, %v2584
      %2591 = vst [vmem:[#allocation6 + $0x90] sm:$0xf0] %v2586
      %2592 = vst [vmem:[#allocation6 + $0x98] sm:$0xf0] %v2587
      %2593 = vst.msk [vmem:[#allocation6 + $0xa0] sm:$0xf0] %vm2296, %v2584
      %v2594 = vld [vmem:[#allocation5] sm:$0xff]
      %v2595 = vld [vmem:[#allocation5 + $0x8] sm:$0xf]
      %v2598 = vunpack.c.l.b16 %v2594
      %v2599 = vunpack.c.h.b16 %v2594
      %v2600 = vunpack.c.l.b16 %v2595
      %v2601 = vpack.c.b16 %v2598, %v2598
      %v2602 = vpack.c.b16 %v2599, %v2599
      %v2603 = vpack.c.b16 %v2600, %v2600
      %2604 = vrot.lane.b32.xlu0 %v2601, 72
      %v2605 = vpop.permute.xlu0 %2604
      %2606 = vrot.lane.b32.xlu0 %v2602, 72
      %v2607 = vpop.permute.xlu0 %2606
      %2608 = vrot.lane.b32.xlu0 %v2603, 72
      %v2609 = vpop.permute.xlu0 %2608
      %vm2610 = vcmask 588800
      %v2611 = vsel %vm2610, %v2605, %v2607
      %v2612 = vsel %vm2610, %v2607, %v2609
      %2616 = vst [vmem:[#allocation6 + $0xa8] sm:$0xf] %v2611
      %2617 = vst [vmem:[#allocation6 + $0xb0] sm:$0xf] %v2612
      %2618 = vst.msk [vmem:[#allocation6 + $0xb8] sm:$0xf] %vm2271, %v2609
      %v2619 = vld [vmem:[#allocation5] sm:$0xff]
      %v2620 = vld [vmem:[#allocation5 + $0x8] sm:$0xf]
      %v2623 = vunpack.c.l.b16 %v2619
      %v2624 = vunpack.c.h.b16 %v2619
      %v2625 = vunpack.c.l.b16 %v2620
      %v2626 = vpack.c.b16 %v2623, %v2623
      %v2627 = vpack.c.b16 %v2624, %v2624
      %v2628 = vpack.c.b16 %v2625, %v2625
      %2629 = vrot.lane.b32.xlu0 %v2626, 71
      %v2630 = vpop.permute.xlu0 %2629
      %2631 = vrot.lane.b32.xlu0 %v2627, 71
      %v2632 = vpop.permute.xlu0 %2631
      %2633 = vrot.lane.b32.xlu0 %v2628, 71
      %v2634 = vpop.permute.xlu0 %2633
      %vm2635 = vcmask 580608
      %v2636 = vsel %vm2635, %v2630, %v2632
      %v2637 = vsel %vm2635, %v2632, %v2634
      %2641 = vst [vmem:[#allocation6 + $0xa8] sm:$0xf0] %v2636
      %2642 = vst [vmem:[#allocation6 + $0xb0] sm:$0xf0] %v2637
      %2643 = vst.msk [vmem:[#allocation6 + $0xb8] sm:$0xf0] %vm2296, %v2634
      %v2644 = vld [vmem:[%s4] sm:$0xf]
      %v2645 = vld [vmem:[%s4 + $0x4] sm:$0xf]
      %v2646 = vld [vmem:[#allocation6] sm:$0xff]
      %v2647 = vld [vmem:[#allocation6 + $0x8] sm:$0xff]
      %v2648 = vld [vmem:[#allocation6 + $0x10] sm:$0xff]
      %v2649 = vld [vmem:[#allocation6 + $0x18] sm:$0xff]
      %v2650 = vld [vmem:[#allocation6 + $0x20] sm:$0xff]
      %v2651 = vld [vmem:[#allocation6 + $0x28] sm:$0xff]
      %v2652 = vld [vmem:[#allocation6 + $0x30] sm:$0xff]
      %v2653 = vld [vmem:[#allocation6 + $0x38] sm:$0xff]
      %v2654 = vld [vmem:[#allocation6 + $0x40] sm:$0xff]
      %v2655 = vld [vmem:[#allocation6 + $0x48] sm:$0xff]
      %v2656 = vld [vmem:[#allocation6 + $0x50] sm:$0xff]
      %v2657 = vld [vmem:[#allocation6 + $0x58] sm:$0xff]
      %v2658 = vld [vmem:[#allocation6 + $0x60] sm:$0xff]
      %v2659 = vld [vmem:[#allocation6 + $0x68] sm:$0xff]
      %v2660 = vld [vmem:[#allocation6 + $0x70] sm:$0xff]
      %v2661 = vld [vmem:[#allocation6 + $0x78] sm:$0xff]
      %v2662 = vld [vmem:[#allocation6 + $0x80] sm:$0xff]
      %v2663 = vld [vmem:[#allocation6 + $0x88] sm:$0xff]
      %v2664 = vld [vmem:[#allocation6 + $0x90] sm:$0xff]
      %v2665 = vld [vmem:[#allocation6 + $0x98] sm:$0xff]
      %v2666 = vld [vmem:[#allocation6 + $0xa0] sm:$0xff]
      %v2667 = vld [vmem:[#allocation6 + $0xa8] sm:$0xff]
      %v2668 = vld [vmem:[#allocation6 + $0xb0] sm:$0xff]
      %v2669 = vld [vmem:[#allocation6 + $0xb8] sm:$0xff]
      %v2672 = vunpack.c.l.b16 %v2644
      %v2673 = vunpack.c.l.b16 %v2645
      %v2674 = vpack.c.b16 %v2673, %v2672
      %2676 = vmatprep.subr.bf16.mxu0 %v2647
      %2677 = vmatpush1.bf16.msra.mxu0 %v2646
      %2678 = vmatprep.subr.bf16.mxu0 %v2650
      %2679 = vmatpush1.bf16.msra.mxu0 %v2649
      %2680 = vmatprep.subr.bf16.mxu0 %v2653
      %2681 = vmatpush1.bf16.msra.mxu0 %v2652
      %2682 = vmatprep.subr.bf16.mxu0 %v2656
      %2683 = vmatpush1.bf16.msra.mxu0 %v2655
      %2684 = vmatprep.subr.bf16.mxu0 %v2659
      %2685 = vmatpush1.bf16.msra.mxu0 %v2658
      %2686 = vmatprep.subr.bf16.mxu0 %v2662
      %2687 = vmatpush1.bf16.msra.mxu0 %v2661
      %2688 = vmatprep.subr.bf16.mxu0 %v2665
      %2689 = vmatpush1.bf16.msra.mxu0 %v2664
      %2690 = vmatprep.subr.bf16.mxu0 %v2668
      %2691 = vmatpush1.bf16.msra.mxu0 %v2667
      %2692 = vmatprep.subr.bf16.mxu0 0
      %2693 = vmatpush1.bf16.msra.mxu0 0
      %2694 = vmatprep.subr.bf16.mxu0 0
      %2695 = vmatpush1.bf16.msra.mxu0 0
      %2696 = vmatprep.subr.bf16.mxu0 0
      %2697 = vmatpush1.bf16.msra.mxu0 0
      %2698 = vmatprep.subr.bf16.mxu0 0
      %2699 = vmatpush1.bf16.msra.mxu0 0
      %2700 = vmatprep.subr.bf16.mxu0 0
      %2701 = vmatpush1.bf16.msra.mxu0 0
      %2702 = vmatprep.subr.bf16.mxu0 0
      %2703 = vmatpush1.bf16.msra.mxu0 0
      %2704 = vmatprep.subr.bf16.mxu0 0
      %2705 = vmatpush1.bf16.msra.mxu0 0
      %2706 = vmatprep.subr.bf16.mxu0 0
      %2707 = vmatpush1.bf16.msra.mxu0 0
      %2708 = vmatprep.mubr.bf16.mxu0 0
      %2709 = vmatmul.mubr.bf16.gmra.mrb[0].mxu0 %v2674
      %v2710 = vpop.f32.mrb[0].mxu0
      %v2711 = vadd.f32 0.0, %v2710
      %v2712 = vpop.f32.mrb[0].mxu0
      %v2713 = vadd.f32 0.0, %v2712
      %v2714 = vpop.f32.mrb[0].mxu0
      %v2715 = vadd.f32 0.0, %v2714
      %v2716 = vpop.f32.mrb[0].mxu0
      %v2717 = vadd.f32 0.0, %v2716
      %2718 = vdwg.mxu0
      %2719 = vmatprep.subr.bf16.mxu0 0
      %2720 = vmatpush1.bf16.msra.mxu0 %v2648
      %2721 = vmatprep.subr.bf16.mxu0 0
      %2722 = vmatpush1.bf16.msra.mxu0 %v2651
      %2723 = vmatprep.subr.bf16.mxu0 0
      %2724 = vmatpush1.bf16.msra.mxu0 %v2654
      %2725 = vmatprep.subr.bf16.mxu0 0
      %2726 = vmatpush1.bf16.msra.mxu0 %v2657
      %2727 = vmatprep.subr.bf16.mxu0 0
      %2728 = vmatpush1.bf16.msra.mxu0 %v2660
      %2729 = vmatprep.subr.bf16.mxu0 0
      %2730 = vmatpush1.bf16.msra.mxu0 %v2663
      %2731 = vmatprep.subr.bf16.mxu0 0
      %2732 = vmatpush1.bf16.msra.mxu0 %v2666
      %2733 = vmatprep.subr.bf16.mxu0 0
      %2734 = vmatpush1.bf16.msra.mxu0 %v2669
      %2735 = vmatprep.subr.bf16.mxu0 0
      %2736 = vmatpush1.bf16.msra.mxu0 0
      %2737 = vmatprep.subr.bf16.mxu0 0
      %2738 = vmatpush1.bf16.msra.mxu0 0
      %2739 = vmatprep.subr.bf16.mxu0 0
      %2740 = vmatpush1.bf16.msra.mxu0 0
      %2741 = vmatprep.subr.bf16.mxu0 0
      %2742 = vmatpush1.bf16.msra.mxu0 0
      %2743 = vmatprep.subr.bf16.mxu0 0
      %2744 = vmatpush1.bf16.msra.mxu0 0
      %2745 = vmatprep.subr.bf16.mxu0 0
      %2746 = vmatpush1.bf16.msra.mxu0 0
      %2747 = vmatprep.subr.bf16.mxu0 0
      %2748 = vmatpush1.bf16.msra.mxu0 0
      %2749 = vmatprep.subr.bf16.mxu0 0
      %2750 = vmatpush1.bf16.msra.mxu0 0
      %2751 = vmatprep.mubr.bf16.mxu0 0
      %2752 = vmatmul.mubr.bf16.gmra.mrb[0].mxu0 %v2674
      %v2753 = vpop.f32.mrb[0].mxu0
      %v2754 = vadd.f32 0.0, %v2753
      %v2755 = vpop.f32.mrb[0].mxu0
      %v2756 = vpop.f32.mrb[0].mxu0
      %v2757 = vadd.f32 0.0, %v2756
      %v2758 = vpop.f32.mrb[0].mxu0
      %2759 = vdwg.mxu0
      %vm2760 = vcmp.ge.f32.partialorder %v2711, 0.0
      %vm2761 = vcmp.ge.f32.partialorder %v2713, 0.0
      %vm2762 = vcmp.ge.f32.partialorder %v2754, 0.0
      %vm2763 = vcmp.ge.f32.partialorder %v2715, 0.0
      %vm2764 = vcmp.ge.f32.partialorder %v2717, 0.0
      %vm2765 = vcmp.ge.f32.partialorder %v2757, 0.0
      %v2766 = vmul.f32 %v2711, 0.01
      %v2767 = vmul.f32 %v2713, 0.01
      %v2768 = vmul.f32 %v2754, 0.01
      %v2769 = vmul.f32 %v2715, 0.01
      %v2770 = vmul.f32 %v2717, 0.01
      %v2771 = vmul.f32 %v2757, 0.01
      %v2772 = vsel %vm2760, %v2711, %v2766
      %v2773 = vsel %vm2761, %v2713, %v2767
      %v2774 = vsel %vm2762, %v2754, %v2768
      %v2775 = vsel %vm2763, %v2715, %v2769
      %v2776 = vsel %vm2764, %v2717, %v2770
      %v2777 = vsel %vm2765, %v2757, %v2771
      %2778 = vst [vmem:[#allocation7] sm:$0xff] %v2772
      %2779 = vst [vmem:[#allocation7 + $0x8] sm:$0xff] %v2773
      %vm2780 = vcmask 113664
      %2781 = vst.msk [vmem:[#allocation7 + $0x10] sm:$0xff] %vm2780, %v2774
      %2782 = vst [vmem:[#allocation7 + $0x18] sm:$0xff] %v2775
      %2783 = vst [vmem:[#allocation7 + $0x20] sm:$0xff] %v2776
      %2784 = vst.msk [vmem:[#allocation7 + $0x28] sm:$0xff] %vm2780, %v2777
      %v2785 = vld [vmem:[#allocation7] sm:$0xff]
      %v2786 = vld [vmem:[#allocation7 + $0x18] sm:$0xff]
      %v2787 = vpack.c.bf16 %v2786, %v2785
      %vm2788 = vcmask 146432
      %2789 = vst.msk [vmem:[#allocation8] sm:$0xff] %vm2788, %v2787
      %v2790 = vld [vmem:[#allocation7] sm:$0xff]
      %v2791 = vld [vmem:[#allocation7 + $0x18] sm:$0xff]
      %v2792 = vpack.c.bf16 %v2791, %v2790
      %2794 = vrot.lane.b32.xlu0 %v2792, 92
      %v2795 = vpop.permute.xlu0 %2794
      %2797 = vst.msk [vmem:[#allocation8 + $0x8] sm:$0xff] %vm2788, %v2795
      %v2798 = vld [vmem:[#allocation7] sm:$0xff]
      %v2799 = vld [vmem:[#allocation7 + $0x18] sm:$0xff]
      %v2800 = vpack.c.bf16 %v2799, %v2798
      %2802 = vrot.lane.b32.xlu0 %v2800, 56
      %v2803 = vpop.permute.xlu0 %2802
      %2805 = vst.msk [vmem:[#allocation8 + $0x10] sm:$0xff] %vm2788, %v2803
      %v2806 = vld [vmem:[#allocation7] sm:$0xff]
      %v2807 = vld [vmem:[#allocation7 + $0x18] sm:$0xff]
      %v2808 = vpack.c.bf16 %v2807, %v2806
      %2810 = vrot.lane.b32.xlu0 %v2808, 20
      %v2811 = vpop.permute.xlu0 %2810
      %2813 = vst.msk [vmem:[#allocation8 + $0x18] sm:$0xff] %vm2788, %v2811
      %v2814 = vld [vmem:[#allocation7 + $0x8] sm:$0xff]
      %v2815 = vld [vmem:[#allocation7 + $0x20] sm:$0xff]
      %v2816 = vpack.c.bf16 %v2815, %v2814
      %2818 = vrot.lane.b32.xlu0 %v2816, 112
      %v2819 = vpop.permute.xlu0 %2818
      %2821 = vst.msk [vmem:[#allocation8 + $0x20] sm:$0xff] %vm2788, %v2819
      %v2822 = vld [vmem:[#allocation7 + $0x8] sm:$0xff]
      %v2823 = vld [vmem:[#allocation7 + $0x20] sm:$0xff]
      %v2824 = vpack.c.bf16 %v2823, %v2822
      %2826 = vrot.lane.b32.xlu0 %v2824, 76
      %v2827 = vpop.permute.xlu0 %2826
      %2829 = vst.msk [vmem:[#allocation8 + $0x28] sm:$0xff] %vm2788, %v2827
      %v2830 = vld [vmem:[#allocation7 + $0x8] sm:$0xff]
      %v2831 = vld [vmem:[#allocation7 + $0x20] sm:$0xff]
      %v2832 = vpack.c.bf16 %v2831, %v2830
      %2834 = vrot.lane.b32.xlu0 %v2832, 40
      %v2835 = vpop.permute.xlu0 %2834
      %2837 = vst.msk [vmem:[#allocation8 + $0x30] sm:$0xff] %vm2788, %v2835
      %v2838 = vld [vmem:[#allocation7 + $0x8] sm:$0xff]
      %v2839 = vld [vmem:[#allocation7 + $0x10] sm:$0xff]
      %v2840 = vld [vmem:[#allocation7 + $0x20] sm:$0xff]
      %v2841 = vld [vmem:[#allocation7 + $0x28] sm:$0xff]
      %v2842 = vpack.c.bf16 %v2840, %v2838
      %v2843 = vpack.c.bf16 %v2841, %v2839
      %2846 = vrot.lane.b32.xlu0 %v2842, 4
      %v2847 = vpop.permute.xlu0 %2846
      %2848 = vrot.lane.b32.xlu0 %v2843, 4
      %v2849 = vpop.permute.xlu0 %2848
      %v2850 = vsel %vm1959, %v2847, %v2849
      %2852 = vst.msk [vmem:[#allocation8 + $0x38] sm:$0xff] %vm2788, %v2850
      %v2853 = vld [vmem:[#allocation8] sm:$0xff]
      %v2854 = vld [vmem:[#allocation8 + $0x8] sm:$0xff]
      %v2855 = vld [vmem:[#allocation8 + $0x10] sm:$0xff]
      %v2856 = vld [vmem:[#allocation8 + $0x18] sm:$0xff]
      %v2857 = vld [vmem:[#allocation8 + $0x20] sm:$0xff]
      %v2858 = vld [vmem:[#allocation8 + $0x28] sm:$0xff]
      %v2859 = vld [vmem:[#allocation8 + $0x30] sm:$0xff]
      %v2860 = vld [vmem:[#allocation8 + $0x38] sm:$0xff]
      %v2861 = vld [vmem:[%s5] sm:$0xf]
      %v2862 = vld [vmem:[%s5 + $0x4] sm:$0xf]
      %v2863 = vld [vmem:[%s5 + $0x8] sm:$0x1]
      %v2867 = vunpack.c.l.b16 %v2861
      %v2868 = vunpack.c.l.b16 %v2862
      %v2869 = vunpack.c.l.b16 %v2863
      %v2870 = vpack.c.b16 %v2868, %v2867
      %v2871 = vpack.c.b16 %v2869, %v2869
      %v2874 = vsel %vm2788, %v2853, 0
      %v2877 = vsel %vm2788, %v2854, 0
      %v2880 = vsel %vm2788, %v2855, 0
      %v2883 = vsel %vm2788, %v2856, 0
      %v2886 = vsel %vm2788, %v2857, 0
      %v2889 = vsel %vm2788, %v2858, 0
      %v2892 = vsel %vm2788, %v2859, 0
      %v2895 = vsel %vm2788, %v2860, 0
      %v2898 = vsel %vm2016, %v2871, 0
      %2900 = vmatprep.subr.bf16.mxu0 0
      %2901 = vmatpush1.bf16.msra.mxu0 %v2870
      %2902 = vmatprep.subr.bf16.mxu0 0
      %2903 = vmatpush1.bf16.msra.mxu0 %v2898
      %2904 = vmatprep.subr.bf16.mxu0 0
      %2905 = vmatpush1.bf16.msra.mxu0 0
      %2906 = vmatprep.subr.bf16.mxu0 0
      %2907 = vmatpush1.bf16.msra.mxu0 0
      %2908 = vmatprep.subr.bf16.mxu0 0
      %2909 = vmatpush1.bf16.msra.mxu0 0
      %2910 = vmatprep.subr.bf16.mxu0 0
      %2911 = vmatpush1.bf16.msra.mxu0 0
      %2912 = vmatprep.subr.bf16.mxu0 0
      %2913 = vmatpush1.bf16.msra.mxu0 0
      %2914 = vmatprep.subr.bf16.mxu0 0
      %2915 = vmatpush1.bf16.msra.mxu0 0
      %2916 = vmatprep.subr.bf16.mxu0 0
      %2917 = vmatpush1.bf16.msra.mxu0 0
      %2918 = vmatprep.subr.bf16.mxu0 0
      %2919 = vmatpush1.bf16.msra.mxu0 0
      %2920 = vmatprep.subr.bf16.mxu0 0
      %2921 = vmatpush1.bf16.msra.mxu0 0
      %2922 = vmatprep.subr.bf16.mxu0 0
      %2923 = vmatpush1.bf16.msra.mxu0 0
      %2924 = vmatprep.subr.bf16.mxu0 0
      %2925 = vmatpush1.bf16.msra.mxu0 0
      %2926 = vmatprep.subr.bf16.mxu0 0
      %2927 = vmatpush1.bf16.msra.mxu0 0
      %2928 = vmatprep.subr.bf16.mxu0 0
      %2929 = vmatpush1.bf16.msra.mxu0 0
      %2930 = vmatprep.subr.bf16.mxu0 0
      %2931 = vmatpush1.bf16.msra.mxu0 0
      %2932 = vmatprep.mubr.bf16.mxu0 0
      %2933 = vmatmul.mubr.bf16.gmra.mrb[0].mxu0 %v2874
      %v2934 = vpop.f32.mrb[0].mxu0
      %v2935 = vadd.f32 0.0, %v2934
      %v2936 = vpop.f32.mrb[0].mxu0
      %v2937 = vpop.f32.mrb[0].mxu0
      %v2938 = vadd.f32 0.0, %v2937
      %v2939 = vpop.f32.mrb[0].mxu0
      %2940 = vmatprep.mubr.bf16.mxu0 0
      %2941 = vmatmul.mubr.bf16.gmra.mrb[0].mxu0 %v2877
      %v2942 = vpop.f32.mrb[0].mxu0
      %v2943 = vadd.f32 0.0, %v2942
      %v2944 = vpop.f32.mrb[0].mxu0
      %v2945 = vpop.f32.mrb[0].mxu0
      %v2946 = vadd.f32 0.0, %v2945
      %v2947 = vpop.f32.mrb[0].mxu0
      %2948 = vmatprep.mubr.bf16.mxu0 0
      %2949 = vmatmul.mubr.bf16.gmra.mrb[0].mxu0 %v2880
      %v2950 = vpop.f32.mrb[0].mxu0
      %v2951 = vadd.f32 0.0, %v2950
      %v2952 = vpop.f32.mrb[0].mxu0
      %v2953 = vpop.f32.mrb[0].mxu0
      %v2954 = vadd.f32 0.0, %v2953
      %v2955 = vpop.f32.mrb[0].mxu0
      %2956 = vmatprep.mubr.bf16.mxu0 0
      %2957 = vmatmul.mubr.bf16.gmra.mrb[0].mxu0 %v2883
      %v2958 = vpop.f32.mrb[0].mxu0
      %v2959 = vadd.f32 0.0, %v2958
      %v2960 = vpop.f32.mrb[0].mxu0
      %v2961 = vpop.f32.mrb[0].mxu0
      %v2962 = vadd.f32 0.0, %v2961
      %v2963 = vpop.f32.mrb[0].mxu0
      %2964 = vmatprep.mubr.bf16.mxu0 0
      %2965 = vmatmul.mubr.bf16.gmra.mrb[0].mxu0 %v2886
      %v2966 = vpop.f32.mrb[0].mxu0
      %v2967 = vadd.f32 0.0, %v2966
      %v2968 = vpop.f32.mrb[0].mxu0
      %v2969 = vpop.f32.mrb[0].mxu0
      %v2970 = vadd.f32 0.0, %v2969
      %v2971 = vpop.f32.mrb[0].mxu0
      %2972 = vmatprep.mubr.bf16.mxu0 0
      %2973 = vmatmul.mubr.bf16.gmra.mrb[0].mxu0 %v2889
      %v2974 = vpop.f32.mrb[0].mxu0
      %v2975 = vadd.f32 0.0, %v2974
      %v2976 = vpop.f32.mrb[0].mxu0
      %v2977 = vpop.f32.mrb[0].mxu0
      %v2978 = vadd.f32 0.0, %v2977
      %v2979 = vpop.f32.mrb[0].mxu0
      %2980 = vmatprep.mubr.bf16.mxu0 0
      %2981 = vmatmul.mubr.bf16.gmra.mrb[0].mxu0 %v2892
      %v2982 = vpop.f32.mrb[0].mxu0
      %v2983 = vadd.f32 0.0, %v2982
      %v2984 = vpop.f32.mrb[0].mxu0
      %v2985 = vpop.f32.mrb[0].mxu0
      %v2986 = vadd.f32 0.0, %v2985
      %v2987 = vpop.f32.mrb[0].mxu0
      %2988 = vmatprep.mubr.bf16.mxu0 0
      %2989 = vmatmul.mubr.bf16.gmra.mrb[0].mxu0 %v2895
      %v2990 = vpop.f32.mrb[0].mxu0
      %v2991 = vadd.f32 0.0, %v2990
      %v2992 = vpop.f32.mrb[0].mxu0
      %v2993 = vpop.f32.mrb[0].mxu0
      %v2994 = vadd.f32 0.0, %v2993
      %v2995 = vpop.f32.mrb[0].mxu0
      %2996 = vdwg.mxu0
      %v2997 = vpack.c.bf16 %v2938, %v2935
      %v2998 = vpack.c.bf16 %v2946, %v2943
      %v2999 = vpack.c.bf16 %v2954, %v2951
      %v3000 = vpack.c.bf16 %v2962, %v2959
      %v3001 = vpack.c.bf16 %v2970, %v2967
      %v3002 = vpack.c.bf16 %v2978, %v2975
      %v3003 = vpack.c.bf16 %v2986, %v2983
      %v3004 = vpack.c.bf16 %v2994, %v2991
      %vm3005 = vcmask 883712
      %3006 = vst.msk [vmem:[#allocation9] sm:$0xff] %vm3005, 0
      %3008 = vrot.lane.b32.xlu0 %v2997, 11
      %v3009 = vpop.permute.xlu0 %3008
      %vm3011 = vcmask 154712
      %3012 = vst.msk [vmem:[#allocation9] sm:$0xff] %vm3011, %v3009
      %3014 = vrot.lane.b32.xlu0 %v2998, 21
      %v3015 = vpop.permute.xlu0 %3014
      %vm3017 = vcmask 236712
      %3018 = vst.msk [vmem:[#allocation9] sm:$0xff] %vm3017, %v3015
      %3020 = vrot.lane.b32.xlu0 %v2999, 31
      %v3021 = vpop.permute.xlu0 %3020
      %vm3023 = vcmask 318712
      %3024 = vst.msk [vmem:[#allocation9] sm:$0xff] %vm3023, %v3021
      %3026 = vrot.lane.b32.xlu0 %v3000, 41
      %v3027 = vpop.permute.xlu0 %3026
      %vm3029 = vcmask 400712
      %3030 = vst.msk [vmem:[#allocation9] sm:$0xff] %vm3029, %v3027
      %3032 = vrot.lane.b32.xlu0 %v3001, 51
      %v3033 = vpop.permute.xlu0 %3032
      %vm3035 = vcmask 482712
      %3036 = vst.msk [vmem:[#allocation9] sm:$0xff] %vm3035, %v3033
      %3038 = vrot.lane.b32.xlu0 %v3002, 61
      %v3039 = vpop.permute.xlu0 %3038
      %vm3041 = vcmask 564712
      %3042 = vst.msk [vmem:[#allocation9] sm:$0xff] %vm3041, %v3039
      %3044 = vrot.lane.b32.xlu0 %v3003, 71
      %v3045 = vpop.permute.xlu0 %3044
      %vm3047 = vcmask 646712
      %3048 = vst.msk [vmem:[#allocation9] sm:$0xff] %vm3047, %v3045
      %3050 = vrot.lane.b32.xlu0 %v3004, 81
      %v3051 = vpop.permute.xlu0 %3050
      %vm3053 = vcmask 728712
      %3054 = vst.msk [vmem:[#allocation9] sm:$0xff] %vm3053, %v3051
      %v3055 = vld [vmem:[#allocation9] sm:$0xff]
      %vm3056 = vcmask 572416
      %3057 = vst.msk [vmem:[#allocation10] sm:$0xff] %vm3056, %v3055
      %v3058 = vld [vmem:[#allocation9] sm:$0xff]
      %3060 = vrot.lane.b32.xlu0 %v3058, 127
      %v3061 = vpop.permute.xlu0 %3060
      %3063 = vst.msk [vmem:[#allocation10 + $0x8] sm:$0xff] %vm3056, %v3061
      %v3064 = vld [vmem:[#allocation9] sm:$0xff]
      %3066 = vrot.lane.b32.xlu0 %v3064, 126
      %v3067 = vpop.permute.xlu0 %3066
      %3069 = vst.msk [vmem:[#allocation10 + $0x10] sm:$0xff] %vm3056, %v3067
      %v3070 = vld [vmem:[#allocation9] sm:$0xff]
      %3072 = vrot.lane.b32.xlu0 %v3070, 125
      %v3073 = vpop.permute.xlu0 %3072
      %3075 = vst.msk [vmem:[#allocation10 + $0x18] sm:$0xff] %vm3056, %v3073
      %v3076 = vld [vmem:[#allocation9] sm:$0xff]
      %3078 = vrot.lane.b32.xlu0 %v3076, 118
      %v3079 = vpop.permute.xlu0 %3078
      %3081 = vst.msk [vmem:[#allocation10 + $0x20] sm:$0xff] %vm3056, %v3079
      %v3082 = vld [vmem:[#allocation9] sm:$0xff]
      %3084 = vrot.lane.b32.xlu0 %v3082, 117
      %v3085 = vpop.permute.xlu0 %3084
      %3087 = vst.msk [vmem:[#allocation10 + $0x28] sm:$0xff] %vm3056, %v3085
      %v3088 = vld [vmem:[#allocation9] sm:$0xff]
      %3090 = vrot.lane.b32.xlu0 %v3088, 116
      %v3091 = vpop.permute.xlu0 %3090
      %3093 = vst.msk [vmem:[#allocation10 + $0x30] sm:$0xff] %vm3056, %v3091
      %v3094 = vld [vmem:[#allocation9] sm:$0xff]
      %3096 = vrot.lane.b32.xlu0 %v3094, 115
      %v3097 = vpop.permute.xlu0 %3096
      %3099 = vst.msk [vmem:[#allocation10 + $0x38] sm:$0xff] %vm3056, %v3097
      %v3100 = vld [vmem:[#allocation9] sm:$0xff]
      %3102 = vrot.lane.b32.xlu0 %v3100, 108
      %v3103 = vpop.permute.xlu0 %3102
      %3105 = vst.msk [vmem:[#allocation10 + $0x40] sm:$0xff] %vm3056, %v3103
      %v3106 = vld [vmem:[#allocation9] sm:$0xff]
      %3108 = vrot.lane.b32.xlu0 %v3106, 107
      %v3109 = vpop.permute.xlu0 %3108
      %3111 = vst.msk [vmem:[#allocation10 + $0x48] sm:$0xff] %vm3056, %v3109
      %v3112 = vld [vmem:[#allocation9] sm:$0xff]
      %3114 = vrot.lane.b32.xlu0 %v3112, 106
      %v3115 = vpop.permute.xlu0 %3114
      %3117 = vst.msk [vmem:[#allocation10 + $0x50] sm:$0xff] %vm3056, %v3115
      %v3118 = vld [vmem:[#allocation9] sm:$0xff]
      %3120 = vrot.lane.b32.xlu0 %v3118, 105
      %v3121 = vpop.permute.xlu0 %3120
      %3123 = vst.msk [vmem:[#allocation10 + $0x58] sm:$0xff] %vm3056, %v3121
      %v3124 = vld [vmem:[#allocation9] sm:$0xff]
      %3126 = vrot.lane.b32.xlu0 %v3124, 98
      %v3127 = vpop.permute.xlu0 %3126
      %3129 = vst.msk [vmem:[#allocation10 + $0x60] sm:$0xff] %vm3056, %v3127
      %v3130 = vld [vmem:[#allocation9] sm:$0xff]
      %3132 = vrot.lane.b32.xlu0 %v3130, 97
      %v3133 = vpop.permute.xlu0 %3132
      %3135 = vst.msk [vmem:[#allocation10 + $0x68] sm:$0xff] %vm3056, %v3133
      %v3136 = vld [vmem:[#allocation9] sm:$0xff]
      %3138 = vrot.lane.b32.xlu0 %v3136, 96
      %v3139 = vpop.permute.xlu0 %3138
      %3141 = vst.msk [vmem:[#allocation10 + $0x70] sm:$0xff] %vm3056, %v3139
      %v3142 = vld [vmem:[#allocation9] sm:$0xff]
      %3144 = vrot.lane.b32.xlu0 %v3142, 95
      %v3145 = vpop.permute.xlu0 %3144
      %3147 = vst.msk [vmem:[#allocation10 + $0x78] sm:$0xff] %vm3056, %v3145
      %v3148 = vld [vmem:[%s6] sm:$0xff]
      %v3149 = vld [vmem:[%s6 + $0x8] sm:$0xff]
      %v3150 = vld [vmem:[%s6 + $0x10] sm:$0xff]
      %v3151 = vld [vmem:[%s6 + $0x18] sm:$0xff]
      %v3152 = vld [vmem:[#allocation10] sm:$0xff]
      %v3153 = vld [vmem:[#allocation10 + $0x8] sm:$0xff]
      %v3154 = vld [vmem:[#allocation10 + $0x10] sm:$0xff]
      %v3155 = vld [vmem:[#allocation10 + $0x18] sm:$0xff]
      %v3156 = vld [vmem:[#allocation10 + $0x20] sm:$0xff]
      %v3157 = vld [vmem:[#allocation10 + $0x28] sm:$0xff]
      %v3158 = vld [vmem:[#allocation10 + $0x30] sm:$0xff]
      %v3159 = vld [vmem:[#allocation10 + $0x38] sm:$0xff]
      %v3160 = vld [vmem:[#allocation10 + $0x40] sm:$0xff]
      %v3161 = vld [vmem:[#allocation10 + $0x48] sm:$0xff]
      %v3162 = vld [vmem:[#allocation10 + $0x50] sm:$0xff]
      %v3163 = vld [vmem:[#allocation10 + $0x58] sm:$0xff]
      %v3164 = vld [vmem:[#allocation10 + $0x60] sm:$0xff]
      %v3165 = vld [vmem:[#allocation10 + $0x68] sm:$0xff]
      %v3166 = vld [vmem:[#allocation10 + $0x70] sm:$0xff]
      %v3167 = vld [vmem:[#allocation10 + $0x78] sm:$0xff]
      %v3172 = vunpack.c.l.b16 %v3148
      %v3173 = vunpack.c.h.b16 %v3148
      %v3174 = vunpack.c.l.b16 %v3149
      %v3175 = vunpack.c.h.b16 %v3149
      %v3176 = vunpack.c.l.b16 %v3150
      %v3177 = vunpack.c.h.b16 %v3150
      %v3178 = vunpack.c.l.b16 %v3151
      %v3179 = vunpack.c.h.b16 %v3151
      %v3180 = vpack.c.b16 %v3174, %v3172
      %v3181 = vpack.c.b16 %v3175, %v3173
      %v3182 = vpack.c.b16 %v3178, %v3176
      %v3183 = vpack.c.b16 %v3179, %v3177
      %3188 = vmatprep.subr.bf16.mxu0 0
      %3189 = vmatpush1.bf16.msra.mxu0 %v3152
      %3190 = vmatprep.subr.bf16.mxu0 0
      %3191 = vmatpush1.bf16.msra.mxu0 %v3153
      %3192 = vmatprep.subr.bf16.mxu0 0
      %3193 = vmatpush1.bf16.msra.mxu0 %v3154
      %3194 = vmatprep.subr.bf16.mxu0 0
      %3195 = vmatpush1.bf16.msra.mxu0 %v3155
      %3196 = vmatprep.subr.bf16.mxu0 0
      %3197 = vmatpush1.bf16.msra.mxu0 %v3156
      %3198 = vmatprep.subr.bf16.mxu0 0
      %3199 = vmatpush1.bf16.msra.mxu0 %v3157
      %3200 = vmatprep.subr.bf16.mxu0 0
      %3201 = vmatpush1.bf16.msra.mxu0 %v3158
      %3202 = vmatprep.subr.bf16.mxu0 0
      %3203 = vmatpush1.bf16.msra.mxu0 %v3159
      %3204 = vmatprep.subr.bf16.mxu0 0
      %3205 = vmatpush1.bf16.msra.mxu0 %v3160
      %3206 = vmatprep.subr.bf16.mxu0 0
      %3207 = vmatpush1.bf16.msra.mxu0 %v3161
      %3208 = vmatprep.subr.bf16.mxu0 0
      %3209 = vmatpush1.bf16.msra.mxu0 %v3162
      %3210 = vmatprep.subr.bf16.mxu0 0
      %3211 = vmatpush1.bf16.msra.mxu0 %v3163
      %3212 = vmatprep.subr.bf16.mxu0 0
      %3213 = vmatpush1.bf16.msra.mxu0 %v3164
      %3214 = vmatprep.subr.bf16.mxu0 0
      %3215 = vmatpush1.bf16.msra.mxu0 %v3165
      %3216 = vmatprep.subr.bf16.mxu0 0
      %3217 = vmatpush1.bf16.msra.mxu0 %v3166
      %3218 = vmatprep.subr.bf16.mxu0 0
      %3219 = vmatpush1.bf16.msra.mxu0 %v3167
      %3220 = vmatprep.mubr.bf16.mxu0 %v3181
      %3221 = vmatmul.mubr.bf16.gmra.mrb[0].mxu0 %v3180
      %v3222 = vpop.f32.mrb[0].mxu0
      %v3223 = vadd.f32 0.0, %v3222
      %v3224 = vpop.f32.mrb[0].mxu0
      %v3225 = vpop.f32.mrb[0].mxu0
      %v3226 = vadd.f32 0.0, %v3225
      %v3227 = vpop.f32.mrb[0].mxu0
      %3228 = vmatprep.mubr.bf16.mxu0 %v3183
      %3229 = vmatmul.mubr.bf16.gmra.mrb[0].mxu0 %v3182
      %v3230 = vpop.f32.mrb[0].mxu0
      %v3231 = vadd.f32 0.0, %v3230
      %v3232 = vpop.f32.mrb[0].mxu0
      %v3233 = vpop.f32.mrb[0].mxu0
      %v3234 = vadd.f32 0.0, %v3233
      %v3235 = vpop.f32.mrb[0].mxu0
      %3236 = vdwg.mxu0
      %vm3237 = vcmp.ge.f32.partialorder %v3223, 0.0
      %vm3238 = vcmp.ge.f32.partialorder %v3226, 0.0
      %vm3239 = vcmp.ge.f32.partialorder %v3231, 0.0
      %vm3240 = vcmp.ge.f32.partialorder %v3234, 0.0
      %v3241 = vmul.f32 %v3223, 0.01
      %v3242 = vmul.f32 %v3226, 0.01
      %v3243 = vmul.f32 %v3231, 0.01
      %v3244 = vmul.f32 %v3234, 0.01
      %v3245 = vsel %vm3237, %v3223, %v3241
      %v3246 = vsel %vm3238, %v3226, %v3242
      %v3247 = vsel %vm3239, %v3231, %v3243
      %v3248 = vsel %vm3240, %v3234, %v3244
      %3249 = vst.msk [vmem:[#allocation11] sm:$0xff] %vm3056, %v3245
      %3250 = vst.msk [vmem:[#allocation11 + $0x8] sm:$0xff] %vm3056, %v3246
      %3251 = vst.msk [vmem:[#allocation11 + $0x10] sm:$0xff] %vm3056, %v3247
      %3252 = vst.msk [vmem:[#allocation11 + $0x18] sm:$0xff] %vm3056, %v3248
      %v3253 = vld [vmem:[#allocation11] sm:$0xff]
      %v3254 = vld [vmem:[#allocation11 + $0x8] sm:$0xff]
      %v3255 = vld [vmem:[#allocation11 + $0x10] sm:$0xff]
      %v3256 = vld [vmem:[#allocation11 + $0x18] sm:$0xff]
      %v3257 = vpack.c.bf16 %v3254, %v3253
      %v3258 = vpack.c.bf16 %v3256, %v3255
      %vm3259 = vcmask 80896
      %3260 = vst.msk [vmem:[#allocation12] sm:$0xff] %vm3259, %v3257
      %3261 = vst.msk [vmem:[#allocation12 + $0x8] sm:$0xff] %vm3259, %v3258
      %v3262 = vld [vmem:[#allocation11] sm:$0xff]
      %v3263 = vld [vmem:[#allocation11 + $0x8] sm:$0xff]
      %v3264 = vld [vmem:[#allocation11 + $0x10] sm:$0xff]
      %v3265 = vld [vmem:[#allocation11 + $0x18] sm:$0xff]
      %v3266 = vpack.c.bf16 %v3263, %v3262
      %v3267 = vpack.c.bf16 %v3265, %v3264
      %3270 = vrot.lane.b32.xlu0 %v3266, 108
      %v3271 = vpop.permute.xlu0 %3270
      %3272 = vrot.lane.b32.xlu0 %v3267, 108
      %v3273 = vpop.permute.xlu0 %3272
      %3276 = vst.msk [vmem:[#allocation12 + $0x10] sm:$0xff] %vm3259, %v3271
      %3277 = vst.msk [vmem:[#allocation12 + $0x18] sm:$0xff] %vm3259, %v3273
      %v3278 = vld [vmem:[#allocation11] sm:$0xff]
      %v3279 = vld [vmem:[#allocation11 + $0x8] sm:$0xff]
      %v3280 = vld [vmem:[#allocation11 + $0x10] sm:$0xff]
      %v3281 = vld [vmem:[#allocation11 + $0x18] sm:$0xff]
      %v3282 = vpack.c.bf16 %v3279, %v3278
      %v3283 = vpack.c.bf16 %v3281, %v3280
      %3286 = vrot.lane.b32.xlu0 %v3282, 88
      %v3287 = vpop.permute.xlu0 %3286
      %3288 = vrot.lane.b32.xlu0 %v3283, 88
      %v3289 = vpop.permute.xlu0 %3288
      %3292 = vst.msk [vmem:[#allocation12 + $0x20] sm:$0xff] %vm3259, %v3287
      %3293 = vst.msk [vmem:[#allocation12 + $0x28] sm:$0xff] %vm3259, %v3289
      %v3294 = vld [vmem:[#allocation11] sm:$0xff]
      %v3295 = vld [vmem:[#allocation11 + $0x8] sm:$0xff]
      %v3296 = vld [vmem:[#allocation11 + $0x10] sm:$0xff]
      %v3297 = vld [vmem:[#allocation11 + $0x18] sm:$0xff]
      %v3298 = vpack.c.bf16 %v3295, %v3294
      %v3299 = vpack.c.bf16 %v3297, %v3296
      %3302 = vrot.lane.b32.xlu0 %v3298, 68
      %v3303 = vpop.permute.xlu0 %3302
      %3304 = vrot.lane.b32.xlu0 %v3299, 68
      %v3305 = vpop.permute.xlu0 %3304
      %3308 = vst.msk [vmem:[#allocation12 + $0x30] sm:$0xff] %vm3259, %v3303
      %3309 = vst.msk [vmem:[#allocation12 + $0x38] sm:$0xff] %vm3259, %v3305
      %v3310 = vld [vmem:[#allocation12] sm:$0xff]
      %v3311 = vld [vmem:[#allocation12 + $0x8] sm:$0xff]
      %v3312 = vld [vmem:[#allocation12 + $0x10] sm:$0xff]
      %v3313 = vld [vmem:[#allocation12 + $0x18] sm:$0xff]
      %v3314 = vld [vmem:[#allocation12 + $0x20] sm:$0xff]
      %v3315 = vld [vmem:[#allocation12 + $0x28] sm:$0xff]
      %v3316 = vld [vmem:[#allocation12 + $0x30] sm:$0xff]
      %v3317 = vld [vmem:[#allocation12 + $0x38] sm:$0xff]
      %v3318 = vld [vmem:[%s7] sm:$0xf]
      %v3319 = vld [vmem:[%s7 + $0x4] sm:$0x1]
      %v3322 = vunpack.c.l.b16 %v3318
      %v3323 = vunpack.c.l.b16 %v3319
      %v3324 = vpack.c.b16 %v3323, %v3322
      %v3326 = vsel %vm3259, %v3310, 0
      %v3329 = vsel %vm3259, %v3311, 0
      %v3332 = vsel %vm3259, %v3312, 0
      %v3335 = vsel %vm3259, %v3313, 0
      %v3338 = vsel %vm3259, %v3314, 0
      %v3341 = vsel %vm3259, %v3315, 0
      %v3344 = vsel %vm3259, %v3316, 0
      %v3347 = vsel %vm3259, %v3317, 0
      %vm3349 = vcmask 1044480
      %v3351 = vsel %vm3349, %v3324, 0
      %3353 = vmatprep.subr.bf16.mxu0 0
      %3354 = vmatpush1.bf16.msra.mxu0 %v3351
      %3355 = vmatprep.subr.bf16.mxu0 0
      %3356 = vmatpush1.bf16.msra.mxu0 0
      %3357 = vmatprep.subr.bf16.mxu0 0
      %3358 = vmatpush1.bf16.msra.mxu0 0
      %3359 = vmatprep.subr.bf16.mxu0 0
      %3360 = vmatpush1.bf16.msra.mxu0 0
      %3361 = vmatprep.subr.bf16.mxu0 0
      %3362 = vmatpush1.bf16.msra.mxu0 0
      %3363 = vmatprep.subr.bf16.mxu0 0
      %3364 = vmatpush1.bf16.msra.mxu0 0
      %3365 = vmatprep.subr.bf16.mxu0 0
      %3366 = vmatpush1.bf16.msra.mxu0 0
      %3367 = vmatprep.subr.bf16.mxu0 0
      %3368 = vmatpush1.bf16.msra.mxu0 0
      %3369 = vmatprep.subr.bf16.mxu0 0
      %3370 = vmatpush1.bf16.msra.mxu0 0
      %3371 = vmatprep.subr.bf16.mxu0 0
      %3372 = vmatpush1.bf16.msra.mxu0 0
      %3373 = vmatprep.subr.bf16.mxu0 0
      %3374 = vmatpush1.bf16.msra.mxu0 0
      %3375 = vmatprep.subr.bf16.mxu0 0
      %3376 = vmatpush1.bf16.msra.mxu0 0
      %3377 = vmatprep.subr.bf16.mxu0 0
      %3378 = vmatpush1.bf16.msra.mxu0 0
      %3379 = vmatprep.subr.bf16.mxu0 0
      %3380 = vmatpush1.bf16.msra.mxu0 0
      %3381 = vmatprep.subr.bf16.mxu0 0
      %3382 = vmatpush1.bf16.msra.mxu0 0
      %3383 = vmatprep.subr.bf16.mxu0 0
      %3384 = vmatpush1.bf16.msra.mxu0 0
      %3385 = vmatprep.mubr.bf16.mxu0 0
      %3386 = vmatmul.mubr.bf16.gmra.mrb[0].mxu0 %v3326
      %v3387 = vpop.f32.mrb[0].mxu0
      %v3388 = vadd.f32 0.0, %v3387
      %v3389 = vpop.f32.mrb[0].mxu0
      %v3390 = vpop.f32.mrb[0].mxu0
      %v3391 = vadd.f32 0.0, %v3390
      %v3392 = vpop.f32.mrb[0].mxu0
      %3393 = vmatprep.mubr.bf16.mxu0 0
      %3394 = vmatmul.mubr.bf16.gmra.mrb[0].mxu0 %v3329
      %v3395 = vpop.f32.mrb[0].mxu0
      %v3396 = vadd.f32 0.0, %v3395
      %v3397 = vpop.f32.mrb[0].mxu0
      %v3398 = vpop.f32.mrb[0].mxu0
      %v3399 = vadd.f32 0.0, %v3398
      %v3400 = vpop.f32.mrb[0].mxu0
      %3401 = vmatprep.mubr.bf16.mxu0 0
      %3402 = vmatmul.mubr.bf16.gmra.mrb[0].mxu0 %v3332
      %v3403 = vpop.f32.mrb[0].mxu0
      %v3404 = vadd.f32 0.0, %v3403
      %v3405 = vpop.f32.mrb[0].mxu0
      %v3406 = vpop.f32.mrb[0].mxu0
      %v3407 = vadd.f32 0.0, %v3406
      %v3408 = vpop.f32.mrb[0].mxu0
      %3409 = vmatprep.mubr.bf16.mxu0 0
      %3410 = vmatmul.mubr.bf16.gmra.mrb[0].mxu0 %v3335
      %v3411 = vpop.f32.mrb[0].mxu0
      %v3412 = vadd.f32 0.0, %v3411
      %v3413 = vpop.f32.mrb[0].mxu0
      %v3414 = vpop.f32.mrb[0].mxu0
      %v3415 = vadd.f32 0.0, %v3414
      %v3416 = vpop.f32.mrb[0].mxu0
      %3417 = vmatprep.mubr.bf16.mxu0 0
      %3418 = vmatmul.mubr.bf16.gmra.mrb[0].mxu0 %v3338
      %v3419 = vpop.f32.mrb[0].mxu0
      %v3420 = vadd.f32 0.0, %v3419
      %v3421 = vpop.f32.mrb[0].mxu0
      %v3422 = vpop.f32.mrb[0].mxu0
      %v3423 = vadd.f32 0.0, %v3422
      %v3424 = vpop.f32.mrb[0].mxu0
      %3425 = vmatprep.mubr.bf16.mxu0 0
      %3426 = vmatmul.mubr.bf16.gmra.mrb[0].mxu0 %v3341
      %v3427 = vpop.f32.mrb[0].mxu0
      %v3428 = vadd.f32 0.0, %v3427
      %v3429 = vpop.f32.mrb[0].mxu0
      %v3430 = vpop.f32.mrb[0].mxu0
      %v3431 = vadd.f32 0.0, %v3430
      %v3432 = vpop.f32.mrb[0].mxu0
      %3433 = vmatprep.mubr.bf16.mxu0 0
      %3434 = vmatmul.mubr.bf16.gmra.mrb[0].mxu0 %v3344
      %v3435 = vpop.f32.mrb[0].mxu0
      %v3436 = vadd.f32 0.0, %v3435
      %v3437 = vpop.f32.mrb[0].mxu0
      %v3438 = vpop.f32.mrb[0].mxu0
      %v3439 = vadd.f32 0.0, %v3438
      %v3440 = vpop.f32.mrb[0].mxu0
      %3441 = vmatprep.mubr.bf16.mxu0 0
      %3442 = vmatmul.mubr.bf16.gmra.mrb[0].mxu0 %v3347
      %v3443 = vpop.f32.mrb[0].mxu0
      %v3444 = vadd.f32 0.0, %v3443
      %v3445 = vpop.f32.mrb[0].mxu0
      %v3446 = vpop.f32.mrb[0].mxu0
      %v3447 = vadd.f32 0.0, %v3446
      %v3448 = vpop.f32.mrb[0].mxu0
      %3449 = vdwg.mxu0
      %v3450 = vpack.c.bf16 %v3391, %v3388
      %v3451 = vpack.c.bf16 %v3399, %v3396
      %v3452 = vpack.c.bf16 %v3407, %v3404
      %v3453 = vpack.c.bf16 %v3415, %v3412
      %v3454 = vpack.c.bf16 %v3423, %v3420
      %v3455 = vpack.c.bf16 %v3431, %v3428
      %v3456 = vpack.c.bf16 %v3439, %v3436
      %v3457 = vpack.c.bf16 %v3447, %v3444
      %vm3458 = vcmask 359424
      %3459 = vst.msk [vmem:[#allocation13] sm:$0xff] %vm3458, 0
      %3460 = vst.msk [vmem:[#allocation13 + $0x8] sm:$0xff] %vm3458, 0
      %3463 = vrot.lane.b32.xlu0 %v3450, 7
      %v3464 = vpop.permute.xlu0 %3463
      %3465 = vrot.lane.b32.xlu0 %v3451, 7
      %v3466 = vpop.permute.xlu0 %3465
      %vm3469 = vcmask 89144
      %3470 = vst.msk [vmem:[#allocation13] sm:$0xff] %vm3469, %v3464
      %3471 = vst.msk [vmem:[#allocation13 + $0x8] sm:$0xff] %vm3469, %v3466
      %3474 = vrot.lane.b32.xlu0 %v3452, 13
      %v3475 = vpop.permute.xlu0 %3474
      %3476 = vrot.lane.b32.xlu0 %v3453, 13
      %v3477 = vpop.permute.xlu0 %3476
      %vm3480 = vcmask 138344
      %3481 = vst.msk [vmem:[#allocation13] sm:$0xff] %vm3480, %v3475
      %3482 = vst.msk [vmem:[#allocation13 + $0x8] sm:$0xff] %vm3480, %v3477
      %3485 = vrot.lane.b32.xlu0 %v3454, 19
      %v3486 = vpop.permute.xlu0 %3485
      %3487 = vrot.lane.b32.xlu0 %v3455, 19
      %v3488 = vpop.permute.xlu0 %3487
      %vm3491 = vcmask 187544
      %3492 = vst.msk [vmem:[#allocation13] sm:$0xff] %vm3491, %v3486
      %3493 = vst.msk [vmem:[#allocation13 + $0x8] sm:$0xff] %vm3491, %v3488
      %3496 = vrot.lane.b32.xlu0 %v3456, 25
      %v3497 = vpop.permute.xlu0 %3496
      %3498 = vrot.lane.b32.xlu0 %v3457, 25
      %v3499 = vpop.permute.xlu0 %3498
      %vm3502 = vcmask 236744
      %3503 = vst.msk [vmem:[#allocation13] sm:$0xff] %vm3502, %v3497
      %3504 = vst.msk [vmem:[#allocation13 + $0x8] sm:$0xff] %vm3502, %v3499
      %v3505 = vld [vmem:[#allocation13] sm:$0xff]
      %v3506 = vld [vmem:[#allocation13 + $0x8] sm:$0xff]
      %vm3507 = vcmask 195584
      %3508 = vst.msk [vmem:[#allocation14] sm:$0xff] %vm3507, %v3505
      %3509 = vst.msk [vmem:[#allocation14 + $0x8] sm:$0xff] %vm3507, %v3506
      %v3510 = vld [vmem:[#allocation13] sm:$0xff]
      %v3511 = vld [vmem:[#allocation13 + $0x8] sm:$0xff]
      %3514 = vrot.lane.b32.xlu0 %v3510, 127
      %v3515 = vpop.permute.xlu0 %3514
      %3516 = vrot.lane.b32.xlu0 %v3511, 127
      %v3517 = vpop.permute.xlu0 %3516
      %3520 = vst.msk [vmem:[#allocation14 + $0x10] sm:$0xff] %vm3507, %v3515
      %3521 = vst.msk [vmem:[#allocation14 + $0x18] sm:$0xff] %vm3507, %v3517
      %v3522 = vld [vmem:[#allocation13] sm:$0xff]
      %v3523 = vld [vmem:[#allocation13 + $0x8] sm:$0xff]
      %3526 = vrot.lane.b32.xlu0 %v3522, 126
      %v3527 = vpop.permute.xlu0 %3526
      %3528 = vrot.lane.b32.xlu0 %v3523, 126
      %v3529 = vpop.permute.xlu0 %3528
      %3532 = vst.msk [vmem:[#allocation14 + $0x20] sm:$0xff] %vm3507, %v3527
      %3533 = vst.msk [vmem:[#allocation14 + $0x28] sm:$0xff] %vm3507, %v3529
      %v3534 = vld [vmem:[#allocation13] sm:$0xff]
      %v3535 = vld [vmem:[#allocation13 + $0x8] sm:$0xff]
      %3538 = vrot.lane.b32.xlu0 %v3534, 122
      %v3539 = vpop.permute.xlu0 %3538
      %3540 = vrot.lane.b32.xlu0 %v3535, 122
      %v3541 = vpop.permute.xlu0 %3540
      %3544 = vst.msk [vmem:[#allocation14 + $0x30] sm:$0xff] %vm3507, %v3539
      %3545 = vst.msk [vmem:[#allocation14 + $0x38] sm:$0xff] %vm3507, %v3541
      %v3546 = vld [vmem:[#allocation13] sm:$0xff]
      %v3547 = vld [vmem:[#allocation13 + $0x8] sm:$0xff]
      %3550 = vrot.lane.b32.xlu0 %v3546, 121
      %v3551 = vpop.permute.xlu0 %3550
      %3552 = vrot.lane.b32.xlu0 %v3547, 121
      %v3553 = vpop.permute.xlu0 %3552
      %3556 = vst.msk [vmem:[#allocation14 + $0x40] sm:$0xff] %vm3507, %v3551
      %3557 = vst.msk [vmem:[#allocation14 + $0x48] sm:$0xff] %vm3507, %v3553
      %v3558 = vld [vmem:[#allocation13] sm:$0xff]
      %v3559 = vld [vmem:[#allocation13 + $0x8] sm:$0xff]
      %3562 = vrot.lane.b32.xlu0 %v3558, 120
      %v3563 = vpop.permute.xlu0 %3562
      %3564 = vrot.lane.b32.xlu0 %v3559, 120
      %v3565 = vpop.permute.xlu0 %3564
      %3568 = vst.msk [vmem:[#allocation14 + $0x50] sm:$0xff] %vm3507, %v3563
      %3569 = vst.msk [vmem:[#allocation14 + $0x58] sm:$0xff] %vm3507, %v3565
      %v3570 = vld [vmem:[#allocation13] sm:$0xff]
      %v3571 = vld [vmem:[#allocation13 + $0x8] sm:$0xff]
      %3574 = vrot.lane.b32.xlu0 %v3570, 116
      %v3575 = vpop.permute.xlu0 %3574
      %3576 = vrot.lane.b32.xlu0 %v3571, 116
      %v3577 = vpop.permute.xlu0 %3576
      %3580 = vst.msk [vmem:[#allocation14 + $0x60] sm:$0xff] %vm3507, %v3575
      %3581 = vst.msk [vmem:[#allocation14 + $0x68] sm:$0xff] %vm3507, %v3577
      %v3582 = vld [vmem:[#allocation13] sm:$0xff]
      %v3583 = vld [vmem:[#allocation13 + $0x8] sm:$0xff]
      %3586 = vrot.lane.b32.xlu0 %v3582, 115
      %v3587 = vpop.permute.xlu0 %3586
      %3588 = vrot.lane.b32.xlu0 %v3583, 115
      %v3589 = vpop.permute.xlu0 %3588
      %3592 = vst.msk [vmem:[#allocation14 + $0x70] sm:$0xff] %vm3507, %v3587
      %3593 = vst.msk [vmem:[#allocation14 + $0x78] sm:$0xff] %vm3507, %v3589
      %v3594 = vld [vmem:[#allocation13] sm:$0xff]
      %v3595 = vld [vmem:[#allocation13 + $0x8] sm:$0xff]
      %3598 = vrot.lane.b32.xlu0 %v3594, 114
      %v3599 = vpop.permute.xlu0 %3598
      %3600 = vrot.lane.b32.xlu0 %v3595, 114
      %v3601 = vpop.permute.xlu0 %3600
      %3604 = vst.msk [vmem:[#allocation14 + $0x80] sm:$0xff] %vm3507, %v3599
      %3605 = vst.msk [vmem:[#allocation14 + $0x88] sm:$0xff] %vm3507, %v3601
      %v3606 = vld [vmem:[%s8] sm:$0x7]
      %v3607 = vld [vmem:[#allocation14] sm:$0xff]
      %v3608 = vld [vmem:[#allocation14 + $0x8] sm:$0xff]
      %v3609 = vld [vmem:[#allocation14 + $0x10] sm:$0xff]
      %v3610 = vld [vmem:[#allocation14 + $0x18] sm:$0xff]
      %v3611 = vld [vmem:[#allocation14 + $0x20] sm:$0xff]
      %v3612 = vld [vmem:[#allocation14 + $0x28] sm:$0xff]
      %v3613 = vld [vmem:[#allocation14 + $0x30] sm:$0xff]
      %v3614 = vld [vmem:[#allocation14 + $0x38] sm:$0xff]
      %v3615 = vld [vmem:[#allocation14 + $0x40] sm:$0xff]
      %v3616 = vld [vmem:[#allocation14 + $0x48] sm:$0xff]
      %v3617 = vld [vmem:[#allocation14 + $0x50] sm:$0xff]
      %v3618 = vld [vmem:[#allocation14 + $0x58] sm:$0xff]
      %v3619 = vld [vmem:[#allocation14 + $0x60] sm:$0xff]
      %v3620 = vld [vmem:[#allocation14 + $0x68] sm:$0xff]
      %v3621 = vld [vmem:[#allocation14 + $0x70] sm:$0xff]
      %v3622 = vld [vmem:[#allocation14 + $0x78] sm:$0xff]
      %v3623 = vld [vmem:[#allocation14 + $0x80] sm:$0xff]
      %v3624 = vld [vmem:[#allocation14 + $0x88] sm:$0xff]
      %v3627 = vunpack.c.l.s4 1966171168
      %v3628 = vunpack.c.0.s8 %v3627
      %v3629 = vlaneseq
      %v3630 = vshrl.u32 %v3629, 7
      %v3631 = vsub.s32 %v3628, %v3630
      %v3632 = vrot.slane %v3606, %v3631
      %v3633 = vcombine.high %v3632, %v3632
      %v3635 = vunpack.c.l.s4 1966171168
      %v3636 = vunpack.c.0.s8 %v3635
      %v3637 = vlaneseq
      %v3638 = vshrl.u32 %v3637, 7
      %v3639 = vsub.s32 %v3636, %v3638
      %v3640 = vrot.slane %v3632, %v3639
      %v3642 = vunpack.c.l.s4 1966171168
      %v3643 = vunpack.c.0.s8 %v3642
      %v3644 = vlaneseq
      %v3645 = vshrl.u32 %v3644, 7
      %v3646 = vsub.s32 %v3643, %v3645
      %v3647 = vrot.slane %v3633, %v3646
      %v3648 = vcombine.high %v3640, %v3640
      %vm3651 = vcmask 261120
      %v3653 = vsel %vm3651, %v3648, 0
      %3655 = vmatprep.subr.bf16.mxu0 0
      %3656 = vmatpush1.bf16.msra.mxu0 %v3607
      %3657 = vmatprep.subr.bf16.mxu0 0
      %3658 = vmatpush1.bf16.msra.mxu0 %v3608
      %3659 = vmatprep.subr.bf16.mxu0 0
      %3660 = vmatpush1.bf16.msra.mxu0 %v3609
      %3661 = vmatprep.subr.bf16.mxu0 0
      %3662 = vmatpush1.bf16.msra.mxu0 %v3610
      %3663 = vmatprep.subr.bf16.mxu0 0
      %3664 = vmatpush1.bf16.msra.mxu0 %v3611
      %3665 = vmatprep.subr.bf16.mxu0 0
      %3666 = vmatpush1.bf16.msra.mxu0 %v3612
      %3667 = vmatprep.subr.bf16.mxu0 0
      %3668 = vmatpush1.bf16.msra.mxu0 %v3613
      %3669 = vmatprep.subr.bf16.mxu0 0
      %3670 = vmatpush1.bf16.msra.mxu0 %v3614
      %3671 = vmatprep.subr.bf16.mxu0 0
      %3672 = vmatpush1.bf16.msra.mxu0 %v3615
      %3673 = vmatprep.subr.bf16.mxu0 0
      %3674 = vmatpush1.bf16.msra.mxu0 %v3616
      %3675 = vmatprep.subr.bf16.mxu0 0
      %3676 = vmatpush1.bf16.msra.mxu0 %v3617
      %3677 = vmatprep.subr.bf16.mxu0 0
      %3678 = vmatpush1.bf16.msra.mxu0 %v3618
      %3679 = vmatprep.subr.bf16.mxu0 0
      %3680 = vmatpush1.bf16.msra.mxu0 %v3619
      %3681 = vmatprep.subr.bf16.mxu0 0
      %3682 = vmatpush1.bf16.msra.mxu0 %v3620
      %3683 = vmatprep.subr.bf16.mxu0 0
      %3684 = vmatpush1.bf16.msra.mxu0 %v3621
      %3685 = vmatprep.subr.bf16.mxu0 0
      %3686 = vmatpush1.bf16.msra.mxu0 %v3622
      %3687 = vmatprep.mubr.bf16.mxu0 %v3647
      %3688 = vmatmul.mubr.bf16.gmra.mrb[0].mxu0 %v3640
      %v3689 = vpop.f32.mrb[0].mxu0
      %v3690 = vadd.f32 0.0, %v3689
      %v3691 = vpop.f32.mrb[0].mxu0
      %v3692 = vpop.f32.mrb[0].mxu0
      %v3693 = vpop.f32.mrb[0].mxu0
      %3694 = vdwg.mxu0
      %3695 = vmatprep.subr.bf16.mxu0 0
      %3696 = vmatpush1.bf16.msra.mxu0 %v3623
      %3697 = vmatprep.subr.bf16.mxu0 0
      %3698 = vmatpush1.bf16.msra.mxu0 %v3624
      %3699 = vmatprep.subr.bf16.mxu0 0
      %3700 = vmatpush1.bf16.msra.mxu0 0
      %3701 = vmatprep.subr.bf16.mxu0 0
      %3702 = vmatpush1.bf16.msra.mxu0 0
      %3703 = vmatprep.subr.bf16.mxu0 0
      %3704 = vmatpush1.bf16.msra.mxu0 0
      %3705 = vmatprep.subr.bf16.mxu0 0
      %3706 = vmatpush1.bf16.msra.mxu0 0
      %3707 = vmatprep.subr.bf16.mxu0 0
      %3708 = vmatpush1.bf16.msra.mxu0 0
      %3709 = vmatprep.subr.bf16.mxu0 0
      %3710 = vmatpush1.bf16.msra.mxu0 0
      %3711 = vmatprep.subr.bf16.mxu0 0
      %3712 = vmatpush1.bf16.msra.mxu0 0
      %3713 = vmatprep.subr.bf16.mxu0 0
      %3714 = vmatpush1.bf16.msra.mxu0 0
      %3715 = vmatprep.subr.bf16.mxu0 0
      %3716 = vmatpush1.bf16.msra.mxu0 0
      %3717 = vmatprep.subr.bf16.mxu0 0
      %3718 = vmatpush1.bf16.msra.mxu0 0
      %3719 = vmatprep.subr.bf16.mxu0 0
      %3720 = vmatpush1.bf16.msra.mxu0 0
      %3721 = vmatprep.subr.bf16.mxu0 0
      %3722 = vmatpush1.bf16.msra.mxu0 0
      %3723 = vmatprep.subr.bf16.mxu0 0
      %3724 = vmatpush1.bf16.msra.mxu0 0
      %3725 = vmatprep.subr.bf16.mxu0 0
      %3726 = vmatpush1.bf16.msra.mxu0 0
      %3727 = vmatprep.mubr.bf16.mxu0 0
      %3728 = vmatmul.mubr.bf16.gmra.mrb[0].mxu0 %v3653
      %v3729 = vpop.f32.mrb[0].mxu0
      %v3730 = vadd.f32 %v3690, %v3729
      %v3731 = vpop.f32.mrb[0].mxu0
      %v3732 = vpop.f32.mrb[0].mxu0
      %v3733 = vpop.f32.mrb[0].mxu0
      %3734 = vdwg.mxu0
      %vm3735 = vcmask 188416
      %3736 = vst.msk [vmem:[#allocation15] sm:$0x1] %vm3735, %v3730
      %v3737 = vld [vmem:[#allocation15] sm:$0x1]
      %vm3738 = vcmask 24576
      %3739 = vst.msk [vmem:[%s328] sm:$0x1] %vm3738, %v3737
      %v3740 = vld [vmem:[#allocation15] sm:$0x1]
      %v3742 = vlaneseq
      %v3743 = vshrl.u32 %v3742, 7
      %v3744 = vsub.s32 0, %v3743
      %v3745 = vrot.slane %v3740, %v3744
      %3746 = vrot.lane.b32.xlu0 %v3745, 126
      %v3747 = vpop.permute.xlu0 %3746
      %vm3749 = vcmask 57376
      %3750 = vst.msk [vmem:[%s328] sm:$0x1] %vm3749, %v3747
      %v3751 = vld [vmem:[#allocation15] sm:$0x1]
      %v3753 = vlaneseq
      %v3754 = vshrl.u32 %v3753, 7
      %v3755 = vsub.s32 0, %v3754
      %v3756 = vrot.slane %v3751, %v3755
      %3757 = vrot.lane.b32.xlu0 %v3756, 124
      %v3758 = vpop.permute.xlu0 %3757
      %vm3760 = vcmask 90176
      %3761 = vst.msk [vmem:[%s328] sm:$0x1] %vm3760, %v3758
      %v3762 = vld [vmem:[#allocation15] sm:$0x1]
      %v3764 = vlaneseq
      %v3765 = vshrl.u32 %v3764, 7
      %v3766 = vsub.s32 0, %v3765
      %v3767 = vrot.slane %v3762, %v3766
      %3768 = vrot.lane.b32.xlu0 %v3767, 122
      %v3769 = vpop.permute.xlu0 %3768
      %vm3771 = vcmask 122976
      %3772 = vst.msk [vmem:[%s328] sm:$0x1] %vm3771, %v3769
      %p3773 = scmp.lt.s32.totalorder %s20, 1
      %s3774 = scalar_select %p3773, %s20, 1
      %s3775 = scalar_lea.vmem %s9, %s3774
      // Predicated region
      $region57: #{feature_discriminator_forward.1} parent=55 // pred_check
        %p3776 = pneg %p232
      $region58: #{feature_discriminator_forward.1} parent=55 // pred_check_branch
        %3778 = sbr.rel (%p3776) target = $region60
      $region59: #{feature_discriminator_forward.1} parent=55 // pred_region
        _
      $region60: #{feature_discriminator_forward.1} parent=55 // pred_fallthru
        _
    $region56: #{feature_discriminator_forward.1} parent=5 // pred_fallthru
      _
    %p3779 = scmp.le.s32.totalorder 2, %s15
    // Predicated region
    $region61: #{feature_discriminator_forward.1} parent=5 // pred_check
      %p3780 = pneg %p3779
    $region62: #{feature_discriminator_forward.1} parent=5 // pred_check_branch
      %3782 = sbr.rel (%p3780) target = $region64
    $region63: #{feature_discriminator_forward.1} parent=5 // pred_region
      %s3783 = ssub.s32 %s15, 2
      // Predicated region
      $region65: #{feature_discriminator_forward.1} parent=63 // pred_check
        %p3784 = pneg %p238
      $region66: #{feature_discriminator_forward.1} parent=63 // pred_check_branch
        %3786 = sbr.rel (%p3784) target = $region68
      $region67: #{feature_discriminator_forward.1} parent=63 // pred_region
        %p3787 = scmp.lt.s32.totalorder %s21, 1
        %s3788 = scalar_select %p3787, %s21, 1
        %s3789 = scalar_lea.vmem %s9, %s3788
      $region68: #{feature_discriminator_forward.1} parent=63 // pred_fallthru
        _
    $region64: #{feature_discriminator_forward.1} parent=5 // pred_fallthru
      _
  $region6: #{feature_discriminator_forward.1} parent=0 // loop_footer
    %s19 = sadd.s32 1, %s15
  $region7: #{feature_discriminator_forward.1} parent=0 // loop_footer_branch
    %14 = sbr.rel target = $region3
  $region8: #{feature_discriminator_forward.1} parent=0 // loop_exit
    _

</llo_original>
